<compile_context>
chip_gen: v7x
topology: tpu7x:2x2x1
jax: 0.10.0
libtpu: 0.0.40
codegen_flags: <defaults>
</compile_context>

<pallas_src>
import jax
import jax.numpy as jnp
from jax.experimental import pallas as pl
from jax.experimental.pallas import tpu as pltpu

KH = KW = 3
PAD = 1


def dwconv3x3_kernel(x_ref, w_ref, o_ref):
    """Depthwise 3x3 conv on one (batch, channel-chunk) block.

    x_ref: (1, H, W, Cc)   unpadded input block (VMEM), channels-last
    w_ref: (KH*KW, Cc)     per-channel 3x3 filters, taps flattened row-major
    o_ref: (1, H, W, Cc)   output block (VMEM)
    """
    _, H, W, Cc = o_ref.shape
    f32 = jnp.float32

    # Weights: one lane-dense (9, Cc) tile, read once; pre-broadcast each tap
    # row to (W, Cc) once (hoisted — reused by every input row below).
    w_all = w_ref[...].astype(f32)                                   # (9, Cc)
    wt = [jnp.broadcast_to(w_all[t][None, :], (W, Cc)) for t in range(KH * KW)]

    zrow = jnp.zeros((1, Cc), f32)

    # Input-stationary sweep: each input row is loaded and column-shifted once,
    # then scattered into the (<=3) output-row accumulators that use it.
    acc = [None] * H
    for r in range(H):
        row = x_ref[0, r].astype(f32)                                # (W, Cc)
        # Column-shifted views (kw = -1 / +1); borders are zero (= padding).
        left = jnp.concatenate([zrow, row[: W - 1]], axis=0)         # x[r, w-1]
        right = jnp.concatenate([row[1:], zrow], axis=0)             # x[r, w+1]

        for kh in range(KH):
            h = r - (kh - 1)           # output row fed by input row r via tap kh
            if h < 0 or h >= H:
                continue               # padded (zero) row -> contributes nothing
            contrib = (left * wt[kh * KW + 0]
                       + row * wt[kh * KW + 1]
                       + right * wt[kh * KW + 2])
            acc[h] = contrib if acc[h] is None else acc[h] + contrib

        # Output row r-1 has now received all of its input rows -> store once.
        if r >= 1:
            o_ref[0, r - 1] = acc[r - 1].astype(o_ref.dtype)
            acc[r - 1] = None          # retire: at most 3 accumulators live

    o_ref[0, H - 1] = acc[H - 1].astype(o_ref.dtype)


def depthwise_conv3x3_nhwc(x_nhwc, w_hwc):
    """Depthwise 3x3, stride 1, pad 1, no bias.  x: (N,H,W,C), w: (KH,KW,C)."""
    N, H, W, C = x_nhwc.shape
    assert w_hwc.shape == (KH, KW, C)

    # Flatten taps: (KH, KW, C) -> (9, C).  One clean lane-dense tile in VMEM,
    # one sublane row per tap (no 2-level sublane extracts in the kernel).
    w_flat = w_hwc.reshape(KH * KW, C)

    # Channel-chunk size (lane dim must stay a multiple of 128).  384 gives
    # 2 steps for C=768: one block per v7x TensorCore (balanced megacore
    # split) and only 2 low-overhead steps on single-TC v6e/v5e while still
    # overlapping prefetch/writeback.
    if C % 384 == 0:
        cc = 384
    elif C % 256 == 0:
        cc = 256
    elif C % 128 == 0:
        cc = 128
    else:
        cc = C
    # Channel chunks lead the grid so the parallel axis has >1 step at N=1.
    grid = (C // cc, N)

    flops = 2 * N * H * W * C * KH * KW
    bytes_accessed = (2 * N * H * W * C + KH * KW * C) * x_nhwc.dtype.itemsize

    return pl.pallas_call(
        dwconv3x3_kernel,
        out_shape=jax.ShapeDtypeStruct((N, H, W, C), x_nhwc.dtype),
        grid=grid,
        in_specs=[
            pl.BlockSpec((1, H, W, cc), lambda c, n: (n, 0, 0, c)),
            pl.BlockSpec((KH * KW, cc), lambda c, n: (0, c)),
        ],
        out_specs=pl.BlockSpec((1, H, W, cc), lambda c, n: (n, 0, 0, c)),
        compiler_params=pltpu.CompilerParams(
            dimension_semantics=("parallel", "parallel")),
        cost_estimate=pl.CostEstimate(
            flops=flops, transcendentals=0, bytes_accessed=bytes_accessed),
    )(x_nhwc, w_flat)


def depthwise_conv3x3_nchw(x_nchw, w_oihw):
    """PyTorch-interface adapter (NCHW in/out, (C,1,3,3) weights).

    Interface-compat / testing only — NOT for the hot path: each transpose of
    the activation is a separate HBM pass costing more bytes than the conv
    itself.  Keep the surrounding graph channels-last and call
    depthwise_conv3x3_nhwc directly.
    """
    N, C, H, W = x_nchw.shape
    assert w_oihw.shape == (C, 1, KH, KW)
    x_nhwc = jnp.transpose(x_nchw, (0, 2, 3, 1))
    w_hwc = jnp.transpose(w_oihw[:, 0], (1, 2, 0))
    out = depthwise_conv3x3_nhwc(x_nhwc, w_hwc)
    return jnp.transpose(out, (0, 3, 1, 2))


if __name__ == "__main__":
    key = jax.random.PRNGKey(0)
    kx, kw_key = jax.random.split(key)

    # Shapes implied by the module's forward: x229 = [1, 768, 14, 14] (NCHW),
    # kept channels-last here so the kernel path has no transposes / padding.
    N, H, W, C = 1, 14, 14, 768
    x = jax.random.normal(kx, (N, H, W, C), dtype=jnp.float32)
    w = 0.1 * jax.random.normal(kw_key, (KH, KW, C), dtype=jnp.float32)

    out = depthwise_conv3x3_nhwc(x, w)
    out = jax.block_until_ready(out)
    assert out.shape == (N, H, W, C) and out.dtype == x.dtype

    # Reference: XLA grouped conv with identical semantics to the PyTorch
    # module Conv2d(768, 768, 3, stride=1, padding=1, groups=768, bias=False).
    ref = jax.lax.conv_general_dilated(
        x, w[:, :, None, :], window_strides=(1, 1),
        padding=((PAD, PAD), (PAD, PAD)),
        dimension_numbers=("NHWC", "HWIO", "NHWC"), feature_group_count=C)
    assert jnp.allclose(out, ref, atol=1e-4, rtol=1e-4), "mismatch vs reference conv"

    # Also verify the PyTorch NCHW interface adapter once (off the hot path).
    x_nchw = jnp.transpose(x, (0, 3, 1, 2))
    w_oihw = jnp.transpose(w, (2, 0, 1))[:, None]
    out_nchw = jax.block_until_ready(depthwise_conv3x3_nchw(x_nchw, w_oihw))
    assert jnp.allclose(out_nchw, jnp.transpose(ref, (0, 3, 1, 2)),
                        atol=1e-4, rtol=1e-4), "NCHW adapter mismatch"

    print("KERNEL_OK")
</pallas_src>

<mosaic_0001>
module attributes {stable_mosaic.version = 11 : i64} {
  func.func @dwconv3x3_kernel(%arg0: i32, %arg1: i32, %arg2: memref<1x14x14x384xf32, #tpu.memory_space<vmem>>, %arg3: memref<9x384xf32, #tpu.memory_space<vmem>>, %arg4: memref<1x14x14x384xf32, #tpu.memory_space<vmem>>) attributes {dimension_semantics = [#tpu.dimension_semantics<parallel>, #tpu.dimension_semantics<parallel>], iteration_bounds = array<i64: 2, 1>, scalar_prefetch = 0 : i64, scratch_operands = 0 : i64, tpu.core_type = #tpu.core_type<tc>, window_params = [{transform_indices = @transform_0, window_bounds = array<i64: 1, 14, 14, 384>}, {transform_indices = @transform_1, window_bounds = array<i64: 9, 384>}, {transform_indices = @transform_2, window_bounds = array<i64: 1, 14, 14, 384>}]} {
    %c0 = arith.constant 0 : index
    %c0_0 = arith.constant 0 : index
    %0 = vector.load %arg3[%c0, %c0_0] : memref<9x384xf32, #tpu.memory_space<vmem>>, vector<9x384xf32>
    %1 = vector.extract_strided_slice %0 {offsets = [0, 0], sizes = [1, 384], strides = [1, 1]} : vector<9x384xf32> to vector<1x384xf32>
    %2 = vector.shape_cast %1 : vector<1x384xf32> to vector<384xf32>
    %3 = vector.shape_cast %2 : vector<384xf32> to vector<1x384xf32>
    %4 = vector.shape_cast %3 : vector<1x384xf32> to vector<1x384xf32>
    %5 = vector.broadcast %4 : vector<1x384xf32> to vector<14x384xf32>
    %6 = vector.extract_strided_slice %0 {offsets = [1, 0], sizes = [1, 384], strides = [1, 1]} : vector<9x384xf32> to vector<1x384xf32>
    %7 = vector.shape_cast %6 : vector<1x384xf32> to vector<384xf32>
    %8 = vector.shape_cast %7 : vector<384xf32> to vector<1x384xf32>
    %9 = vector.shape_cast %8 : vector<1x384xf32> to vector<1x384xf32>
    %10 = vector.broadcast %9 : vector<1x384xf32> to vector<14x384xf32>
    %11 = vector.extract_strided_slice %0 {offsets = [2, 0], sizes = [1, 384], strides = [1, 1]} : vector<9x384xf32> to vector<1x384xf32>
    %12 = vector.shape_cast %11 : vector<1x384xf32> to vector<384xf32>
    %13 = vector.shape_cast %12 : vector<384xf32> to vector<1x384xf32>
    %14 = vector.shape_cast %13 : vector<1x384xf32> to vector<1x384xf32>
    %15 = vector.broadcast %14 : vector<1x384xf32> to vector<14x384xf32>
    %16 = vector.extract_strided_slice %0 {offsets = [3, 0], sizes = [1, 384], strides = [1, 1]} : vector<9x384xf32> to vector<1x384xf32>
    %17 = vector.shape_cast %16 : vector<1x384xf32> to vector<384xf32>
    %18 = vector.shape_cast %17 : vector<384xf32> to vector<1x384xf32>
    %19 = vector.shape_cast %18 : vector<1x384xf32> to vector<1x384xf32>
    %20 = vector.broadcast %19 : vector<1x384xf32> to vector<14x384xf32>
    %21 = vector.extract_strided_slice %0 {offsets = [4, 0], sizes = [1, 384], strides = [1, 1]} : vector<9x384xf32> to vector<1x384xf32>
    %22 = vector.shape_cast %21 : vector<1x384xf32> to vector<384xf32>
    %23 = vector.shape_cast %22 : vector<384xf32> to vector<1x384xf32>
    %24 = vector.shape_cast %23 : vector<1x384xf32> to vector<1x384xf32>
    %25 = vector.broadcast %24 : vector<1x384xf32> to vector<14x384xf32>
    %26 = vector.extract_strided_slice %0 {offsets = [5, 0], sizes = [1, 384], strides = [1, 1]} : vector<9x384xf32> to vector<1x384xf32>
    %27 = vector.shape_cast %26 : vector<1x384xf32> to vector<384xf32>
    %28 = vector.shape_cast %27 : vector<384xf32> to vector<1x384xf32>
    %29 = vector.shape_cast %28 : vector<1x384xf32> to vector<1x384xf32>
    %30 = vector.broadcast %29 : vector<1x384xf32> to vector<14x384xf32>
    %31 = vector.extract_strided_slice %0 {offsets = [6, 0], sizes = [1, 384], strides = [1, 1]} : vector<9x384xf32> to vector<1x384xf32>
    %32 = vector.shape_cast %31 : vector<1x384xf32> to vector<384xf32>
    %33 = vector.shape_cast %32 : vector<384xf32> to vector<1x384xf32>
    %34 = vector.shape_cast %33 : vector<1x384xf32> to vector<1x384xf32>
    %35 = vector.broadcast %34 : vector<1x384xf32> to vector<14x384xf32>
    %36 = vector.extract_strided_slice %0 {offsets = [7, 0], sizes = [1, 384], strides = [1, 1]} : vector<9x384xf32> to vector<1x384xf32>
    %37 = vector.shape_cast %36 : vector<1x384xf32> to vector<384xf32>
    %38 = vector.shape_cast %37 : vector<384xf32> to vector<1x384xf32>
    %39 = vector.shape_cast %38 : vector<1x384xf32> to vector<1x384xf32>
    %40 = vector.broadcast %39 : vector<1x384xf32> to vector<14x384xf32>
    %41 = vector.extract_strided_slice %0 {offsets = [8, 0], sizes = [1, 384], strides = [1, 1]} : vector<9x384xf32> to vector<1x384xf32>
    %42 = vector.shape_cast %41 : vector<1x384xf32> to vector<384xf32>
    %43 = vector.shape_cast %42 : vector<384xf32> to vector<1x384xf32>
    %44 = vector.shape_cast %43 : vector<1x384xf32> to vector<1x384xf32>
    %45 = vector.broadcast %44 : vector<1x384xf32> to vector<14x384xf32>
    %cst = arith.constant 0.000000e+00 : f32
    %46 = vector.broadcast %cst : f32 to vector<1x384xf32>
    %c0_1 = arith.constant 0 : index
    %c0_2 = arith.constant 0 : index
    %c0_3 = arith.constant 0 : index
    %c0_4 = arith.constant 0 : index
    %47 = vector.load %arg2[%c0_1, %c0_2, %c0_3, %c0_4] : memref<1x14x14x384xf32, #tpu.memory_space<vmem>>, vector<1x1x14x384xf32>
    %48 = vector.shape_cast %47 : vector<1x1x14x384xf32> to vector<14x384xf32>
    %49 = vector.extract_strided_slice %48 {offsets = [0, 0], sizes = [13, 384], strides = [1, 1]} : vector<14x384xf32> to vector<13x384xf32>
    %50 = tpu.concatenate %46, %49 in 0 : vector<1x384xf32>, vector<13x384xf32> -> vector<14x384xf32>
    %51 = vector.extract_strided_slice %48 {offsets = [1, 0], sizes = [13, 384], strides = [1, 1]} : vector<14x384xf32> to vector<13x384xf32>
    %52 = tpu.concatenate %51, %46 in 0 : vector<13x384xf32>, vector<1x384xf32> -> vector<14x384xf32>
    %53 = arith.mulf %50, %5 : vector<14x384xf32>
    %54 = arith.mulf %48, %10 : vector<14x384xf32>
    %55 = arith.addf %53, %54 : vector<14x384xf32>
    %56 = arith.mulf %52, %15 : vector<14x384xf32>
    %57 = arith.addf %55, %56 : vector<14x384xf32>
    %58 = arith.mulf %50, %20 : vector<14x384xf32>
    %59 = arith.mulf %48, %25 : vector<14x384xf32>
    %60 = arith.addf %58, %59 : vector<14x384xf32>
    %61 = arith.mulf %52, %30 : vector<14x384xf32>
    %62 = arith.addf %60, %61 : vector<14x384xf32>
    %c0_5 = arith.constant 0 : index
    %c1 = arith.constant 1 : index
    %c0_6 = arith.constant 0 : index
    %c0_7 = arith.constant 0 : index
    %63 = vector.load %arg2[%c0_5, %c1, %c0_6, %c0_7] : memref<1x14x14x384xf32, #tpu.memory_space<vmem>>, vector<1x1x14x384xf32>
    %64 = vector.shape_cast %63 : vector<1x1x14x384xf32> to vector<14x384xf32>
    %65 = vector.extract_strided_slice %64 {offsets = [0, 0], sizes = [13, 384], strides = [1, 1]} : vector<14x384xf32> to vector<13x384xf32>
    %66 = tpu.concatenate %46, %65 in 0 : vector<1x384xf32>, vector<13x384xf32> -> vector<14x384xf32>
    %67 = vector.extract_strided_slice %64 {offsets = [1, 0], sizes = [13, 384], strides = [1, 1]} : vector<14x384xf32> to vector<13x384xf32>
    %68 = tpu.concatenate %67, %46 in 0 : vector<13x384xf32>, vector<1x384xf32> -> vector<14x384xf32>
    %69 = arith.mulf %66, %5 : vector<14x384xf32>
    %70 = arith.mulf %64, %10 : vector<14x384xf32>
    %71 = arith.addf %69, %70 : vector<14x384xf32>
    %72 = arith.mulf %68, %15 : vector<14x384xf32>
    %73 = arith.addf %71, %72 : vector<14x384xf32>
    %74 = arith.mulf %66, %20 : vector<14x384xf32>
    %75 = arith.mulf %64, %25 : vector<14x384xf32>
    %76 = arith.addf %74, %75 : vector<14x384xf32>
    %77 = arith.mulf %68, %30 : vector<14x384xf32>
    %78 = arith.addf %76, %77 : vector<14x384xf32>
    %79 = arith.addf %57, %78 : vector<14x384xf32>
    %80 = arith.mulf %66, %35 : vector<14x384xf32>
    %81 = arith.mulf %64, %40 : vector<14x384xf32>
    %82 = arith.addf %80, %81 : vector<14x384xf32>
    %83 = arith.mulf %68, %45 : vector<14x384xf32>
    %84 = arith.addf %82, %83 : vector<14x384xf32>
    %85 = arith.addf %62, %84 : vector<14x384xf32>
    %c0_8 = arith.constant 0 : index
    %c0_9 = arith.constant 0 : index
    %c0_10 = arith.constant 0 : index
    %c0_11 = arith.constant 0 : index
    %86 = vector.load %arg4[%c0_8, %c0_9, %c0_10, %c0_11] : memref<1x14x14x384xf32, #tpu.memory_space<vmem>>, vector<1x1x14x384xf32>
    %87 = vector.shape_cast %86 : vector<1x1x14x384xf32> to vector<14x384xf32>
    %88 = vector.shape_cast %85 : vector<14x384xf32> to vector<1x1x14x384xf32>
    tpu.vector_store %arg4[%c0_8, %c0_9, %c0_10, %c0_11], %88 {strides = array<i32>} : memref<1x14x14x384xf32, #tpu.memory_space<vmem>>, vector<1x1x14x384xf32>,
    %c0_12 = arith.constant 0 : index
    %c2 = arith.constant 2 : index
    %c0_13 = arith.constant 0 : index
    %c0_14 = arith.constant 0 : index
    %89 = vector.load %arg2[%c0_12, %c2, %c0_13, %c0_14] : memref<1x14x14x384xf32, #tpu.memory_space<vmem>>, vector<1x1x14x384xf32>
    %90 = vector.shape_cast %89 : vector<1x1x14x384xf32> to vector<14x384xf32>
    %91 = vector.extract_strided_slice %90 {offsets = [0, 0], sizes = [13, 384], strides = [1, 1]} : vector<14x384xf32> to vector<13x384xf32>
    %92 = tpu.concatenate %46, %91 in 0 : vector<1x384xf32>, vector<13x384xf32> -> vector<14x384xf32>
    %93 = vector.extract_strided_slice %90 {offsets = [1, 0], sizes = [13, 384], strides = [1, 1]} : vector<14x384xf32> to vector<13x384xf32>
    %94 = tpu.concatenate %93, %46 in 0 : vector<13x384xf32>, vector<1x384xf32> -> vector<14x384xf32>
    %95 = arith.mulf %92, %5 : vector<14x384xf32>
    %96 = arith.mulf %90, %10 : vector<14x384xf32>
    %97 = arith.addf %95, %96 : vector<14x384xf32>
    %98 = arith.mulf %94, %15 : vector<14x384xf32>
    %99 = arith.addf %97, %98 : vector<14x384xf32>
    %100 = arith.mulf %92, %20 : vector<14x384xf32>
    %101 = arith.mulf %90, %25 : vector<14x384xf32>
    %102 = arith.addf %100, %101 : vector<14x384xf32>
    %103 = arith.mulf %94, %30 : vector<14x384xf32>
    %104 = arith.addf %102, %103 : vector<14x384xf32>
    %105 = arith.addf %73, %104 : vector<14x384xf32>
    %106 = arith.mulf %92, %35 : vector<14x384xf32>
    %107 = arith.mulf %90, %40 : vector<14x384xf32>
    %108 = arith.addf %106, %107 : vector<14x384xf32>
    %109 = arith.mulf %94, %45 : vector<14x384xf32>
    %110 = arith.addf %108, %109 : vector<14x384xf32>
    %111 = arith.addf %79, %110 : vector<14x384xf32>
    %c0_15 = arith.constant 0 : index
    %c1_16 = arith.constant 1 : index
    %c0_17 = arith.constant 0 : index
    %c0_18 = arith.constant 0 : index
    %112 = vector.load %arg4[%c0_15, %c1_16, %c0_17, %c0_18] : memref<1x14x14x384xf32, #tpu.memory_space<vmem>>, vector<1x1x14x384xf32>
    %113 = vector.shape_cast %112 : vector<1x1x14x384xf32> to vector<14x384xf32>
    %114 = vector.shape_cast %111 : vector<14x384xf32> to vector<1x1x14x384xf32>
    tpu.vector_store %arg4[%c0_15, %c1_16, %c0_17, %c0_18], %114 {strides = array<i32>} : memref<1x14x14x384xf32, #tpu.memory_space<vmem>>, vector<1x1x14x384xf32>,
    %c0_19 = arith.constant 0 : index
    %c3 = arith.constant 3 : index
    %c0_20 = arith.constant 0 : index
    %c0_21 = arith.constant 0 : index
    %115 = vector.load %arg2[%c0_19, %c3, %c0_20, %c0_21] : memref<1x14x14x384xf32, #tpu.memory_space<vmem>>, vector<1x1x14x384xf32>
    %116 = vector.shape_cast %115 : vector<1x1x14x384xf32> to vector<14x384xf32>
    %117 = vector.extract_strided_slice %116 {offsets = [0, 0], sizes = [13, 384], strides = [1, 1]} : vector<14x384xf32> to vector<13x384xf32>
    %118 = tpu.concatenate %46, %117 in 0 : vector<1x384xf32>, vector<13x384xf32> -> vector<14x384xf32>
    %119 = vector.extract_strided_slice %116 {offsets = [1, 0], sizes = [13, 384], strides = [1, 1]} : vector<14x384xf32> to vector<13x384xf32>
    %120 = tpu.concatenate %119, %46 in 0 : vector<13x384xf32>, vector<1x384xf32> -> vector<14x384xf32>
    %121 = arith.mulf %118, %5 : vector<14x384xf32>
    %122 = arith.mulf %116, %10 : vector<14x384xf32>
    %123 = arith.addf %121, %122 : vector<14x384xf32>
    %124 = arith.mulf %120, %15 : vector<14x384xf32>
    %125 = arith.addf %123, %124 : vector<14x384xf32>
    %126 = arith.mulf %118, %20 : vector<14x384xf32>
    %127 = arith.mulf %116, %25 : vector<14x384xf32>
    %128 = arith.addf %126, %127 : vector<14x384xf32>
    %129 = arith.mulf %120, %30 : vector<14x384xf32>
    %130 = arith.addf %128, %129 : vector<14x384xf32>
    %131 = arith.addf %99, %130 : vector<14x384xf32>
    %132 = arith.mulf %118, %35 : vector<14x384xf32>
    %133 = arith.mulf %116, %40 : vector<14x384xf32>
    %134 = arith.addf %132, %133 : vector<14x384xf32>
    %135 = arith.mulf %120, %45 : vector<14x384xf32>
    %136 = arith.addf %134, %135 : vector<14x384xf32>
    %137 = arith.addf %105, %136 : vector<14x384xf32>
    %c0_22 = arith.constant 0 : index
    %c2_23 = arith.constant 2 : index
    %c0_24 = arith.constant 0 : index
    %c0_25 = arith.constant 0 : index
    %138 = vector.load %arg4[%c0_22, %c2_23, %c0_24, %c0_25] : memref<1x14x14x384xf32, #tpu.memory_space<vmem>>, vector<1x1x14x384xf32>
    %139 = vector.shape_cast %138 : vector<1x1x14x384xf32> to vector<14x384xf32>
    %140 = vector.shape_cast %137 : vector<14x384xf32> to vector<1x1x14x384xf32>
    tpu.vector_store %arg4[%c0_22, %c2_23, %c0_24, %c0_25], %140 {strides = array<i32>} : memref<1x14x14x384xf32, #tpu.memory_space<vmem>>, vector<1x1x14x384xf32>,
    %c0_26 = arith.constant 0 : index
    %c4 = arith.constant 4 : index
    %c0_27 = arith.constant 0 : index
    %c0_28 = arith.constant 0 : index
    %141 = vector.load %arg2[%c0_26, %c4, %c0_27, %c0_28] : memref<1x14x14x384xf32, #tpu.memory_space<vmem>>, vector<1x1x14x384xf32>
    %142 = vector.shape_cast %141 : vector<1x1x14x384xf32> to vector<14x384xf32>
    %143 = vector.extract_strided_slice %142 {offsets = [0, 0], sizes = [13, 384], strides = [1, 1]} : vector<14x384xf32> to vector<13x384xf32>
    %144 = tpu.concatenate %46, %143 in 0 : vector<1x384xf32>, vector<13x384xf32> -> vector<14x384xf32>
    %145 = vector.extract_strided_slice %142 {offsets = [1, 0], sizes = [13, 384], strides = [1, 1]} : vector<14x384xf32> to vector<13x384xf32>
    %146 = tpu.concatenate %145, %46 in 0 : vector<13x384xf32>, vector<1x384xf32> -> vector<14x384xf32>
    %147 = arith.mulf %144, %5 : vector<14x384xf32>
    %148 = arith.mulf %142, %10 : vector<14x384xf32>
    %149 = arith.addf %147, %148 : vector<14x384xf32>
    %150 = arith.mulf %146, %15 : vector<14x384xf32>
    %151 = arith.addf %149, %150 : vector<14x384xf32>
    %152 = arith.mulf %144, %20 : vector<14x384xf32>
    %153 = arith.mulf %142, %25 : vector<14x384xf32>
    %154 = arith.addf %152, %153 : vector<14x384xf32>
    %155 = arith.mulf %146, %30 : vector<14x384xf32>
    %156 = arith.addf %154, %155 : vector<14x384xf32>
    %157 = arith.addf %125, %156 : vector<14x384xf32>
    %158 = arith.mulf %144, %35 : vector<14x384xf32>
    %159 = arith.mulf %142, %40 : vector<14x384xf32>
    %160 = arith.addf %158, %159 : vector<14x384xf32>
    %161 = arith.mulf %146, %45 : vector<14x384xf32>
    %162 = arith.addf %160, %161 : vector<14x384xf32>
    %163 = arith.addf %131, %162 : vector<14x384xf32>
    %c0_29 = arith.constant 0 : index
    %c3_30 = arith.constant 3 : index
    %c0_31 = arith.constant 0 : index
    %c0_32 = arith.constant 0 : index
    %164 = vector.load %arg4[%c0_29, %c3_30, %c0_31, %c0_32] : memref<1x14x14x384xf32, #tpu.memory_space<vmem>>, vector<1x1x14x384xf32>
    %165 = vector.shape_cast %164 : vector<1x1x14x384xf32> to vector<14x384xf32>
    %166 = vector.shape_cast %163 : vector<14x384xf32> to vector<1x1x14x384xf32>
    tpu.vector_store %arg4[%c0_29, %c3_30, %c0_31, %c0_32], %166 {strides = array<i32>} : memref<1x14x14x384xf32, #tpu.memory_space<vmem>>, vector<1x1x14x384xf32>,
    %c0_33 = arith.constant 0 : index
    %c5 = arith.constant 5 : index
    %c0_34 = arith.constant 0 : index
    %c0_35 = arith.constant 0 : index
    %167 = vector.load %arg2[%c0_33, %c5, %c0_34, %c0_35] : memref<1x14x14x384xf32, #tpu.memory_space<vmem>>, vector<1x1x14x384xf32>
    %168 = vector.shape_cast %167 : vector<1x1x14x384xf32> to vector<14x384xf32>
    %169 = vector.extract_strided_slice %168 {offsets = [0, 0], sizes = [13, 384], strides = [1, 1]} : vector<14x384xf32> to vector<13x384xf32>
    %170 = tpu.concatenate %46, %169 in 0 : vector<1x384xf32>, vector<13x384xf32> -> vector<14x384xf32>
    %171 = vector.extract_strided_slice %168 {offsets = [1, 0], sizes = [13, 384], strides = [1, 1]} : vector<14x384xf32> to vector<13x384xf32>
    %172 = tpu.concatenate %171, %46 in 0 : vector<13x384xf32>, vector<1x384xf32> -> vector<14x384xf32>
    %173 = arith.mulf %170, %5 : vector<14x384xf32>
    %174 = arith.mulf %168, %10 : vector<14x384xf32>
    %175 = arith.addf %173, %174 : vector<14x384xf32>
    %176 = arith.mulf %172, %15 : vector<14x384xf32>
    %177 = arith.addf %175, %176 : vector<14x384xf32>
    %178 = arith.mulf %170, %20 : vector<14x384xf32>
    %179 = arith.mulf %168, %25 : vector<14x384xf32>
    %180 = arith.addf %178, %179 : vector<14x384xf32>
    %181 = arith.mulf %172, %30 : vector<14x384xf32>
    %182 = arith.addf %180, %181 : vector<14x384xf32>
    %183 = arith.addf %151, %182 : vector<14x384xf32>
    %184 = arith.mulf %170, %35 : vector<14x384xf32>
    %185 = arith.mulf %168, %40 : vector<14x384xf32>
    %186 = arith.addf %184, %185 : vector<14x384xf32>
    %187 = arith.mulf %172, %45 : vector<14x384xf32>
    %188 = arith.addf %186, %187 : vector<14x384xf32>
    %189 = arith.addf %157, %188 : vector<14x384xf32>
    %c0_36 = arith.constant 0 : index
    %c4_37 = arith.constant 4 : index
    %c0_38 = arith.constant 0 : index
    %c0_39 = arith.constant 0 : index
    %190 = vector.load %arg4[%c0_36, %c4_37, %c0_38, %c0_39] : memref<1x14x14x384xf32, #tpu.memory_space<vmem>>, vector<1x1x14x384xf32>
    %191 = vector.shape_cast %190 : vector<1x1x14x384xf32> to vector<14x384xf32>
    %192 = vector.shape_cast %189 : vector<14x384xf32> to vector<1x1x14x384xf32>
    tpu.vector_store %arg4[%c0_36, %c4_37, %c0_38, %c0_39], %192 {strides = array<i32>} : memref<1x14x14x384xf32, #tpu.memory_space<vmem>>, vector<1x1x14x384xf32>,
    %c0_40 = arith.constant 0 : index
    %c6 = arith.constant 6 : index
    %c0_41 = arith.constant 0 : index
    %c0_42 = arith.constant 0 : index
    %193 = vector.load %arg2[%c0_40, %c6, %c0_41, %c0_42] : memref<1x14x14x384xf32, #tpu.memory_space<vmem>>, vector<1x1x14x384xf32>
    %194 = vector.shape_cast %193 : vector<1x1x14x384xf32> to vector<14x384xf32>
    %195 = vector.extract_strided_slice %194 {offsets = [0, 0], sizes = [13, 384], strides = [1, 1]} : vector<14x384xf32> to vector<13x384xf32>
    %196 = tpu.concatenate %46, %195 in 0 : vector<1x384xf32>, vector<13x384xf32> -> vector<14x384xf32>
    %197 = vector.extract_strided_slice %194 {offsets = [1, 0], sizes = [13, 384], strides = [1, 1]} : vector<14x384xf32> to vector<13x384xf32>
    %198 = tpu.concatenate %197, %46 in 0 : vector<13x384xf32>, vector<1x384xf32> -> vector<14x384xf32>
    %199 = arith.mulf %196, %5 : vector<14x384xf32>
    %200 = arith.mulf %194, %10 : vector<14x384xf32>
    %201 = arith.addf %199, %200 : vector<14x384xf32>
    %202 = arith.mulf %198, %15 : vector<14x384xf32>
    %203 = arith.addf %201, %202 : vector<14x384xf32>
    %204 = arith.mulf %196, %20 : vector<14x384xf32>
    %205 = arith.mulf %194, %25 : vector<14x384xf32>
    %206 = arith.addf %204, %205 : vector<14x384xf32>
    %207 = arith.mulf %198, %30 : vector<14x384xf32>
    %208 = arith.addf %206, %207 : vector<14x384xf32>
    %209 = arith.addf %177, %208 : vector<14x384xf32>
    %210 = arith.mulf %196, %35 : vector<14x384xf32>
    %211 = arith.mulf %194, %40 : vector<14x384xf32>
    %212 = arith.addf %210, %211 : vector<14x384xf32>
    %213 = arith.mulf %198, %45 : vector<14x384xf32>
    %214 = arith.addf %212, %213 : vector<14x384xf32>
    %215 = arith.addf %183, %214 : vector<14x384xf32>
    %c0_43 = arith.constant 0 : index
    %c5_44 = arith.constant 5 : index
    %c0_45 = arith.constant 0 : index
    %c0_46 = arith.constant 0 : index
    %216 = vector.load %arg4[%c0_43, %c5_44, %c0_45, %c0_46] : memref<1x14x14x384xf32, #tpu.memory_space<vmem>>, vector<1x1x14x384xf32>
    %217 = vector.shape_cast %216 : vector<1x1x14x384xf32> to vector<14x384xf32>
    %218 = vector.shape_cast %215 : vector<14x384xf32> to vector<1x1x14x384xf32>
    tpu.vector_store %arg4[%c0_43, %c5_44, %c0_45, %c0_46], %218 {strides = array<i32>} : memref<1x14x14x384xf32, #tpu.memory_space<vmem>>, vector<1x1x14x384xf32>,
    %c0_47 = arith.constant 0 : index
    %c7 = arith.constant 7 : index
    %c0_48 = arith.constant 0 : index
    %c0_49 = arith.constant 0 : index
    %219 = vector.load %arg2[%c0_47, %c7, %c0_48, %c0_49] : memref<1x14x14x384xf32, #tpu.memory_space<vmem>>, vector<1x1x14x384xf32>
    %220 = vector.shape_cast %219 : vector<1x1x14x384xf32> to vector<14x384xf32>
    %221 = vector.extract_strided_slice %220 {offsets = [0, 0], sizes = [13, 384], strides = [1, 1]} : vector<14x384xf32> to vector<13x384xf32>
    %222 = tpu.concatenate %46, %221 in 0 : vector<1x384xf32>, vector<13x384xf32> -> vector<14x384xf32>
    %223 = vector.extract_strided_slice %220 {offsets = [1, 0], sizes = [13, 384], strides = [1, 1]} : vector<14x384xf32> to vector<13x384xf32>
    %224 = tpu.concatenate %223, %46 in 0 : vector<13x384xf32>, vector<1x384xf32> -> vector<14x384xf32>
    %225 = arith.mulf %222, %5 : vector<14x384xf32>
    %226 = arith.mulf %220, %10 : vector<14x384xf32>
    %227 = arith.addf %225, %226 : vector<14x384xf32>
    %228 = arith.mulf %224, %15 : vector<14x384xf32>
    %229 = arith.addf %227, %228 : vector<14x384xf32>
    %230 = arith.mulf %222, %20 : vector<14x384xf32>
    %231 = arith.mulf %220, %25 : vector<14x384xf32>
    %232 = arith.addf %230, %231 : vector<14x384xf32>
    %233 = arith.mulf %224, %30 : vector<14x384xf32>
    %234 = arith.addf %232, %233 : vector<14x384xf32>
    %235 = arith.addf %203, %234 : vector<14x384xf32>
    %236 = arith.mulf %222, %35 : vector<14x384xf32>
    %237 = arith.mulf %220, %40 : vector<14x384xf32>
    %238 = arith.addf %236, %237 : vector<14x384xf32>
    %239 = arith.mulf %224, %45 : vector<14x384xf32>
    %240 = arith.addf %238, %239 : vector<14x384xf32>
    %241 = arith.addf %209, %240 : vector<14x384xf32>
    %c0_50 = arith.constant 0 : index
    %c6_51 = arith.constant 6 : index
    %c0_52 = arith.constant 0 : index
    %c0_53 = arith.constant 0 : index
    %242 = vector.load %arg4[%c0_50, %c6_51, %c0_52, %c0_53] : memref<1x14x14x384xf32, #tpu.memory_space<vmem>>, vector<1x1x14x384xf32>
    %243 = vector.shape_cast %242 : vector<1x1x14x384xf32> to vector<14x384xf32>
    %244 = vector.shape_cast %241 : vector<14x384xf32> to vector<1x1x14x384xf32>
    tpu.vector_store %arg4[%c0_50, %c6_51, %c0_52, %c0_53], %244 {strides = array<i32>} : memref<1x14x14x384xf32, #tpu.memory_space<vmem>>, vector<1x1x14x384xf32>,
    %c0_54 = arith.constant 0 : index
    %c8 = arith.constant 8 : index
    %c0_55 = arith.constant 0 : index
    %c0_56 = arith.constant 0 : index
    %245 = vector.load %arg2[%c0_54, %c8, %c0_55, %c0_56] : memref<1x14x14x384xf32, #tpu.memory_space<vmem>>, vector<1x1x14x384xf32>
    %246 = vector.shape_cast %245 : vector<1x1x14x384xf32> to vector<14x384xf32>
    %247 = vector.extract_strided_slice %246 {offsets = [0, 0], sizes = [13, 384], strides = [1, 1]} : vector<14x384xf32> to vector<13x384xf32>
    %248 = tpu.concatenate %46, %247 in 0 : vector<1x384xf32>, vector<13x384xf32> -> vector<14x384xf32>
    %249 = vector.extract_strided_slice %246 {offsets = [1, 0], sizes = [13, 384], strides = [1, 1]} : vector<14x384xf32> to vector<13x384xf32>
    %250 = tpu.concatenate %249, %46 in 0 : vector<13x384xf32>, vector<1x384xf32> -> vector<14x384xf32>
    %251 = arith.mulf %248, %5 : vector<14x384xf32>
    %252 = arith.mulf %246, %10 : vector<14x384xf32>
    %253 = arith.addf %251, %252 : vector<14x384xf32>
    %254 = arith.mulf %250, %15 : vector<14x384xf32>
    %255 = arith.addf %253, %254 : vector<14x384xf32>
    %256 = arith.mulf %248, %20 : vector<14x384xf32>
    %257 = arith.mulf %246, %25 : vector<14x384xf32>
    %258 = arith.addf %256, %257 : vector<14x384xf32>
    %259 = arith.mulf %250, %30 : vector<14x384xf32>
    %260 = arith.addf %258, %259 : vector<14x384xf32>
    %261 = arith.addf %229, %260 : vector<14x384xf32>
    %262 = arith.mulf %248, %35 : vector<14x384xf32>
    %263 = arith.mulf %246, %40 : vector<14x384xf32>
    %264 = arith.addf %262, %263 : vector<14x384xf32>
    %265 = arith.mulf %250, %45 : vector<14x384xf32>
    %266 = arith.addf %264, %265 : vector<14x384xf32>
    %267 = arith.addf %235, %266 : vector<14x384xf32>
    %c0_57 = arith.constant 0 : index
    %c7_58 = arith.constant 7 : index
    %c0_59 = arith.constant 0 : index
    %c0_60 = arith.constant 0 : index
    %268 = vector.load %arg4[%c0_57, %c7_58, %c0_59, %c0_60] : memref<1x14x14x384xf32, #tpu.memory_space<vmem>>, vector<1x1x14x384xf32>
    %269 = vector.shape_cast %268 : vector<1x1x14x384xf32> to vector<14x384xf32>
    %270 = vector.shape_cast %267 : vector<14x384xf32> to vector<1x1x14x384xf32>
    tpu.vector_store %arg4[%c0_57, %c7_58, %c0_59, %c0_60], %270 {strides = array<i32>} : memref<1x14x14x384xf32, #tpu.memory_space<vmem>>, vector<1x1x14x384xf32>,
    %c0_61 = arith.constant 0 : index
    %c9 = arith.constant 9 : index
    %c0_62 = arith.constant 0 : index
    %c0_63 = arith.constant 0 : index
    %271 = vector.load %arg2[%c0_61, %c9, %c0_62, %c0_63] : memref<1x14x14x384xf32, #tpu.memory_space<vmem>>, vector<1x1x14x384xf32>
    %272 = vector.shape_cast %271 : vector<1x1x14x384xf32> to vector<14x384xf32>
    %273 = vector.extract_strided_slice %272 {offsets = [0, 0], sizes = [13, 384], strides = [1, 1]} : vector<14x384xf32> to vector<13x384xf32>
    %274 = tpu.concatenate %46, %273 in 0 : vector<1x384xf32>, vector<13x384xf32> -> vector<14x384xf32>
    %275 = vector.extract_strided_slice %272 {offsets = [1, 0], sizes = [13, 384], strides = [1, 1]} : vector<14x384xf32> to vector<13x384xf32>
    %276 = tpu.concatenate %275, %46 in 0 : vector<13x384xf32>, vector<1x384xf32> -> vector<14x384xf32>
    %277 = arith.mulf %274, %5 : vector<14x384xf32>
    %278 = arith.mulf %272, %10 : vector<14x384xf32>
    %279 = arith.addf %277, %278 : vector<14x384xf32>
    %280 = arith.mulf %276, %15 : vector<14x384xf32>
    %281 = arith.addf %279, %280 : vector<14x384xf32>
    %282 = arith.mulf %274, %20 : vector<14x384xf32>
    %283 = arith.mulf %272, %25 : vector<14x384xf32>
    %284 = arith.addf %282, %283 : vector<14x384xf32>
    %285 = arith.mulf %276, %30 : vector<14x384xf32>
    %286 = arith.addf %284, %285 : vector<14x384xf32>
    %287 = arith.addf %255, %286 : vector<14x384xf32>
    %288 = arith.mulf %274, %35 : vector<14x384xf32>
    %289 = arith.mulf %272, %40 : vector<14x384xf32>
    %290 = arith.addf %288, %289 : vector<14x384xf32>
    %291 = arith.mulf %276, %45 : vector<14x384xf32>
    %292 = arith.addf %290, %291 : vector<14x384xf32>
    %293 = arith.addf %261, %292 : vector<14x384xf32>
    %c0_64 = arith.constant 0 : index
    %c8_65 = arith.constant 8 : index
    %c0_66 = arith.constant 0 : index
    %c0_67 = arith.constant 0 : index
    %294 = vector.load %arg4[%c0_64, %c8_65, %c0_66, %c0_67] : memref<1x14x14x384xf32, #tpu.memory_space<vmem>>, vector<1x1x14x384xf32>
    %295 = vector.shape_cast %294 : vector<1x1x14x384xf32> to vector<14x384xf32>
    %296 = vector.shape_cast %293 : vector<14x384xf32> to vector<1x1x14x384xf32>
    tpu.vector_store %arg4[%c0_64, %c8_65, %c0_66, %c0_67], %296 {strides = array<i32>} : memref<1x14x14x384xf32, #tpu.memory_space<vmem>>, vector<1x1x14x384xf32>,
    %c0_68 = arith.constant 0 : index
    %c10 = arith.constant 10 : index
    %c0_69 = arith.constant 0 : index
    %c0_70 = arith.constant 0 : index
    %297 = vector.load %arg2[%c0_68, %c10, %c0_69, %c0_70] : memref<1x14x14x384xf32, #tpu.memory_space<vmem>>, vector<1x1x14x384xf32>
    %298 = vector.shape_cast %297 : vector<1x1x14x384xf32> to vector<14x384xf32>
    %299 = vector.extract_strided_slice %298 {offsets = [0, 0], sizes = [13, 384], strides = [1, 1]} : vector<14x384xf32> to vector<13x384xf32>
    %300 = tpu.concatenate %46, %299 in 0 : vector<1x384xf32>, vector<13x384xf32> -> vector<14x384xf32>
    %301 = vector.extract_strided_slice %298 {offsets = [1, 0], sizes = [13, 384], strides = [1, 1]} : vector<14x384xf32> to vector<13x384xf32>
    %302 = tpu.concatenate %301, %46 in 0 : vector<13x384xf32>, vector<1x384xf32> -> vector<14x384xf32>
    %303 = arith.mulf %300, %5 : vector<14x384xf32>
    %304 = arith.mulf %298, %10 : vector<14x384xf32>
    %305 = arith.addf %303, %304 : vector<14x384xf32>
    %306 = arith.mulf %302, %15 : vector<14x384xf32>
    %307 = arith.addf %305, %306 : vector<14x384xf32>
    %308 = arith.mulf %300, %20 : vector<14x384xf32>
    %309 = arith.mulf %298, %25 : vector<14x384xf32>
    %310 = arith.addf %308, %309 : vector<14x384xf32>
    %311 = arith.mulf %302, %30 : vector<14x384xf32>
    %312 = arith.addf %310, %311 : vector<14x384xf32>
    %313 = arith.addf %281, %312 : vector<14x384xf32>
    %314 = arith.mulf %300, %35 : vector<14x384xf32>
    %315 = arith.mulf %298, %40 : vector<14x384xf32>
    %316 = arith.addf %314, %315 : vector<14x384xf32>
    %317 = arith.mulf %302, %45 : vector<14x384xf32>
    %318 = arith.addf %316, %317 : vector<14x384xf32>
    %319 = arith.addf %287, %318 : vector<14x384xf32>
    %c0_71 = arith.constant 0 : index
    %c9_72 = arith.constant 9 : index
    %c0_73 = arith.constant 0 : index
    %c0_74 = arith.constant 0 : index
    %320 = vector.load %arg4[%c0_71, %c9_72, %c0_73, %c0_74] : memref<1x14x14x384xf32, #tpu.memory_space<vmem>>, vector<1x1x14x384xf32>
    %321 = vector.shape_cast %320 : vector<1x1x14x384xf32> to vector<14x384xf32>
    %322 = vector.shape_cast %319 : vector<14x384xf32> to vector<1x1x14x384xf32>
    tpu.vector_store %arg4[%c0_71, %c9_72, %c0_73, %c0_74], %322 {strides = array<i32>} : memref<1x14x14x384xf32, #tpu.memory_space<vmem>>, vector<1x1x14x384xf32>,
    %c0_75 = arith.constant 0 : index
    %c11 = arith.constant 11 : index
    %c0_76 = arith.constant 0 : index
    %c0_77 = arith.constant 0 : index
    %323 = vector.load %arg2[%c0_75, %c11, %c0_76, %c0_77] : memref<1x14x14x384xf32, #tpu.memory_space<vmem>>, vector<1x1x14x384xf32>
    %324 = vector.shape_cast %323 : vector<1x1x14x384xf32> to vector<14x384xf32>
    %325 = vector.extract_strided_slice %324 {offsets = [0, 0], sizes = [13, 384], strides = [1, 1]} : vector<14x384xf32> to vector<13x384xf32>
    %326 = tpu.concatenate %46, %325 in 0 : vector<1x384xf32>, vector<13x384xf32> -> vector<14x384xf32>
    %327 = vector.extract_strided_slice %324 {offsets = [1, 0], sizes = [13, 384], strides = [1, 1]} : vector<14x384xf32> to vector<13x384xf32>
    %328 = tpu.concatenate %327, %46 in 0 : vector<13x384xf32>, vector<1x384xf32> -> vector<14x384xf32>
    %329 = arith.mulf %326, %5 : vector<14x384xf32>
    %330 = arith.mulf %324, %10 : vector<14x384xf32>
    %331 = arith.addf %329, %330 : vector<14x384xf32>
    %332 = arith.mulf %328, %15 : vector<14x384xf32>
    %333 = arith.addf %331, %332 : vector<14x384xf32>
    %334 = arith.mulf %326, %20 : vector<14x384xf32>
    %335 = arith.mulf %324, %25 : vector<14x384xf32>
    %336 = arith.addf %334, %335 : vector<14x384xf32>
    %337 = arith.mulf %328, %30 : vector<14x384xf32>
    %338 = arith.addf %336, %337 : vector<14x384xf32>
    %339 = arith.addf %307, %338 : vector<14x384xf32>
    %340 = arith.mulf %326, %35 : vector<14x384xf32>
    %341 = arith.mulf %324, %40 : vector<14x384xf32>
    %342 = arith.addf %340, %341 : vector<14x384xf32>
    %343 = arith.mulf %328, %45 : vector<14x384xf32>
    %344 = arith.addf %342, %343 : vector<14x384xf32>
    %345 = arith.addf %313, %344 : vector<14x384xf32>
    %c0_78 = arith.constant 0 : index
    %c10_79 = arith.constant 10 : index
    %c0_80 = arith.constant 0 : index
    %c0_81 = arith.constant 0 : index
    %346 = vector.load %arg4[%c0_78, %c10_79, %c0_80, %c0_81] : memref<1x14x14x384xf32, #tpu.memory_space<vmem>>, vector<1x1x14x384xf32>
    %347 = vector.shape_cast %346 : vector<1x1x14x384xf32> to vector<14x384xf32>
    %348 = vector.shape_cast %345 : vector<14x384xf32> to vector<1x1x14x384xf32>
    tpu.vector_store %arg4[%c0_78, %c10_79, %c0_80, %c0_81], %348 {strides = array<i32>} : memref<1x14x14x384xf32, #tpu.memory_space<vmem>>, vector<1x1x14x384xf32>,
    %c0_82 = arith.constant 0 : index
    %c12 = arith.constant 12 : index
    %c0_83 = arith.constant 0 : index
    %c0_84 = arith.constant 0 : index
    %349 = vector.load %arg2[%c0_82, %c12, %c0_83, %c0_84] : memref<1x14x14x384xf32, #tpu.memory_space<vmem>>, vector<1x1x14x384xf32>
    %350 = vector.shape_cast %349 : vector<1x1x14x384xf32> to vector<14x384xf32>
    %351 = vector.extract_strided_slice %350 {offsets = [0, 0], sizes = [13, 384], strides = [1, 1]} : vector<14x384xf32> to vector<13x384xf32>
    %352 = tpu.concatenate %46, %351 in 0 : vector<1x384xf32>, vector<13x384xf32> -> vector<14x384xf32>
    %353 = vector.extract_strided_slice %350 {offsets = [1, 0], sizes = [13, 384], strides = [1, 1]} : vector<14x384xf32> to vector<13x384xf32>
    %354 = tpu.concatenate %353, %46 in 0 : vector<13x384xf32>, vector<1x384xf32> -> vector<14x384xf32>
    %355 = arith.mulf %352, %5 : vector<14x384xf32>
    %356 = arith.mulf %350, %10 : vector<14x384xf32>
    %357 = arith.addf %355, %356 : vector<14x384xf32>
    %358 = arith.mulf %354, %15 : vector<14x384xf32>
    %359 = arith.addf %357, %358 : vector<14x384xf32>
    %360 = arith.mulf %352, %20 : vector<14x384xf32>
    %361 = arith.mulf %350, %25 : vector<14x384xf32>
    %362 = arith.addf %360, %361 : vector<14x384xf32>
    %363 = arith.mulf %354, %30 : vector<14x384xf32>
    %364 = arith.addf %362, %363 : vector<14x384xf32>
    %365 = arith.addf %333, %364 : vector<14x384xf32>
    %366 = arith.mulf %352, %35 : vector<14x384xf32>
    %367 = arith.mulf %350, %40 : vector<14x384xf32>
    %368 = arith.addf %366, %367 : vector<14x384xf32>
    %369 = arith.mulf %354, %45 : vector<14x384xf32>
    %370 = arith.addf %368, %369 : vector<14x384xf32>
    %371 = arith.addf %339, %370 : vector<14x384xf32>
    %c0_85 = arith.constant 0 : index
    %c11_86 = arith.constant 11 : index
    %c0_87 = arith.constant 0 : index
    %c0_88 = arith.constant 0 : index
    %372 = vector.load %arg4[%c0_85, %c11_86, %c0_87, %c0_88] : memref<1x14x14x384xf32, #tpu.memory_space<vmem>>, vector<1x1x14x384xf32>
    %373 = vector.shape_cast %372 : vector<1x1x14x384xf32> to vector<14x384xf32>
    %374 = vector.shape_cast %371 : vector<14x384xf32> to vector<1x1x14x384xf32>
    tpu.vector_store %arg4[%c0_85, %c11_86, %c0_87, %c0_88], %374 {strides = array<i32>} : memref<1x14x14x384xf32, #tpu.memory_space<vmem>>, vector<1x1x14x384xf32>,
    %c0_89 = arith.constant 0 : index
    %c13 = arith.constant 13 : index
    %c0_90 = arith.constant 0 : index
    %c0_91 = arith.constant 0 : index
    %375 = vector.load %arg2[%c0_89, %c13, %c0_90, %c0_91] : memref<1x14x14x384xf32, #tpu.memory_space<vmem>>, vector<1x1x14x384xf32>
    %376 = vector.shape_cast %375 : vector<1x1x14x384xf32> to vector<14x384xf32>
    %377 = vector.extract_strided_slice %376 {offsets = [0, 0], sizes = [13, 384], strides = [1, 1]} : vector<14x384xf32> to vector<13x384xf32>
    %378 = tpu.concatenate %46, %377 in 0 : vector<1x384xf32>, vector<13x384xf32> -> vector<14x384xf32>
    %379 = vector.extract_strided_slice %376 {offsets = [1, 0], sizes = [13, 384], strides = [1, 1]} : vector<14x384xf32> to vector<13x384xf32>
    %380 = tpu.concatenate %379, %46 in 0 : vector<13x384xf32>, vector<1x384xf32> -> vector<14x384xf32>
    %381 = arith.mulf %378, %20 : vector<14x384xf32>
    %382 = arith.mulf %376, %25 : vector<14x384xf32>
    %383 = arith.addf %381, %382 : vector<14x384xf32>
    %384 = arith.mulf %380, %30 : vector<14x384xf32>
    %385 = arith.addf %383, %384 : vector<14x384xf32>
    %386 = arith.addf %359, %385 : vector<14x384xf32>
    %387 = arith.mulf %378, %35 : vector<14x384xf32>
    %388 = arith.mulf %376, %40 : vector<14x384xf32>
    %389 = arith.addf %387, %388 : vector<14x384xf32>
    %390 = arith.mulf %380, %45 : vector<14x384xf32>
    %391 = arith.addf %389, %390 : vector<14x384xf32>
    %392 = arith.addf %365, %391 : vector<14x384xf32>
    %c0_92 = arith.constant 0 : index
    %c12_93 = arith.constant 12 : index
    %c0_94 = arith.constant 0 : index
    %c0_95 = arith.constant 0 : index
    %393 = vector.load %arg4[%c0_92, %c12_93, %c0_94, %c0_95] : memref<1x14x14x384xf32, #tpu.memory_space<vmem>>, vector<1x1x14x384xf32>
    %394 = vector.shape_cast %393 : vector<1x1x14x384xf32> to vector<14x384xf32>
    %395 = vector.shape_cast %392 : vector<14x384xf32> to vector<1x1x14x384xf32>
    tpu.vector_store %arg4[%c0_92, %c12_93, %c0_94, %c0_95], %395 {strides = array<i32>} : memref<1x14x14x384xf32, #tpu.memory_space<vmem>>, vector<1x1x14x384xf32>,
    %c0_96 = arith.constant 0 : index
    %c13_97 = arith.constant 13 : index
    %c0_98 = arith.constant 0 : index
    %c0_99 = arith.constant 0 : index
    %396 = vector.load %arg4[%c0_96, %c13_97, %c0_98, %c0_99] : memref<1x14x14x384xf32, #tpu.memory_space<vmem>>, vector<1x1x14x384xf32>
    %397 = vector.shape_cast %396 : vector<1x1x14x384xf32> to vector<14x384xf32>
    %398 = vector.shape_cast %386 : vector<14x384xf32> to vector<1x1x14x384xf32>
    tpu.vector_store %arg4[%c0_96, %c13_97, %c0_98, %c0_99], %398 {strides = array<i32>} : memref<1x14x14x384xf32, #tpu.memory_space<vmem>>, vector<1x1x14x384xf32>,
    return
  }
  func.func @transform_0(%arg0: i32, %arg1: i32) -> (i32, i32, i32, i32) {
    %c0_i32 = arith.constant 0 : i32
    %c0_i32_0 = arith.constant 0 : i32
    %c0_i32_1 = arith.constant 0 : i32
    return %arg1, %c0_i32, %c0_i32_0, %arg0 : i32, i32, i32, i32
  }
  func.func @transform_1(%arg0: i32, %arg1: i32) -> (i32, i32) {
    %c0_i32 = arith.constant 0 : i32
    %c0_i32_0 = arith.constant 0 : i32
    return %c0_i32, %arg0 : i32, i32
  }
  func.func @transform_2(%arg0: i32, %arg1: i32) -> (i32, i32, i32, i32) {
    %c0_i32 = arith.constant 0 : i32
    %c0_i32_0 = arith.constant 0 : i32
    %c0_i32_1 = arith.constant 0 : i32
    return %arg1, %c0_i32, %c0_i32_0, %arg0 : i32, i32, i32, i32
  }
}

</mosaic_0001>

<llo_original>
// kernel: tpu_custom_call.1
$region0: #{tpu_custom_call.1}
  #allocation0 [shape = 'u32[]', space=smem, size = 0x4, offset = 0x4, fixed_abs, tag = 'smem constant byte address 0x4 - core index']
  #allocation1 [shape = 'u32[144,128]{1,0:T(1,128)}', space=vmem, size = 0x12000, scoped, tag = 'internal scratch']
  %s0 = inlined_call_operand.vmem [shape: f32[1,14,14,768], index: 0, kind: input, shape index: {}]
  %s1 = inlined_call_operand.vmem [shape: f32[9,768], index: 1, kind: input, shape index: {}]
  %s2 = inlined_call_operand.vmem [shape: f32[1,14,14,768], index: 2, kind: output, shape index: {}]
  %s3 = sld [smem:[#allocation0]]
  $region106: #{tpu_custom_call.1} parent=0
    _
  %s5 = ssub.s32 1, %s3
  %s6 = scalar_select 0, %s5, %s3
  $region1: #{tpu_custom_call.1} parent=0
    #allocation2 [shape = 'u8[688128]{0}', space=vmem, size = 0xa8000, scoped, tag = 'input window, operand 0']
    #allocation3 [shape = 'u8[49152]{0}', space=vmem, size = 0xc000, scoped, tag = 'input window, operand 1']
    #allocation4 [shape = 'u8[688128]{0}', space=vmem, size = 0xa8000, scoped, tag = 'output window, operand 0']
    loop: start=0, step=1, limit=4
    $region2: #{tpu_custom_call.1} parent=1 // loop_pre_header
      _
    $region3: #{tpu_custom_call.1} parent=1 // loop_header
      %s8 = sphi 0, %s12
      %p9 = scmp.ge.s32.totalorder %s8, 4
      %s15 = sphi 0, %s27
      %s16 = sphi 0, %s23
      %s17 = sphi 0, %s15
      %s18 = sphi 0, %s16
      %s19 = sphi 0, %s17
      %s20 = sphi 0, %s18
      %s32 = sphi 0, %s34
      %s35 = sphi 0, %s32
      %s36 = sphi 0, %s35
      %s52 = sphi 0, %s36
      %s58 = sphi 0, %s60
      %s61 = sphi 0, %s58
      %s62 = sphi 0, %s61
      %s78 = sphi 0, %s62
      %s86 = sphi 0, %s88
      %s89 = sphi 0, %s86
      %s90 = sphi 0, %s89
      %s106 = sphi 0, %s90
    $region4: #{tpu_custom_call.1} parent=1 // loop_header_branch
      %11 = sbr.rel (%p9) target = $region8
    $region5: #{tpu_custom_call.1} parent=1 // loop_body
      %s13 = ssub.s32 %s8, 1
      %s14 = ssub.s32 %s8, 2
      %s21 = sadd.s32 1, %s16
      %p22 = scmp.ge.s32.totalorder %s21, 1
      %s23 = scalar_select %p22, 0, %s21
      %s24 = sadd.s32 1, %s15
      %s25 = scalar_select %p22, %s24, %s15
      %p26 = scmp.ge.s32.totalorder %s25, 2
      %s27 = scalar_select %p26, 0, %s25
      %s28 = ssub.s32 %s16, %s23
      %s29 = ssub.s32 %s15, %s27
      %s30 = sor.u32 %s28, %s29
      %p31 = scmp.eq.s32.totalorder %s30, 0
      %s33 = sadd.s32 %s32, 1
      %s34 = scalar_select %p31, %s32, %s33
      %p37 = pneg %p31
      %p38 = scmp.eq.s32.totalorder %s8, 1
      %p39 = por %p37, %p38
      %p40 = scmp.ne.s32.totalorder %s32, %s35
      %p41 = scmp.eq.s32.totalorder %s8, 0
      %p42 = por %p40, %p41
      %p43 = scmp.ne.s32.totalorder %s32, %s35
      %p44 = scmp.eq.s32.totalorder %s13, 1
      %p45 = por %p43, %p44
      %p46 = scmp.ne.s32.totalorder %s35, %s36
      %p47 = scmp.eq.s32.totalorder %s13, 0
      %p48 = por %p46, %p47
      %p49 = scmp.ne.s32.totalorder %s35, %s36
      %p50 = scmp.eq.s32.totalorder %s14, 1
      %p51 = por %p49, %p50
      %p53 = scmp.ne.s32.totalorder %s36, %s52
      %p54 = scmp.eq.s32.totalorder %s14, 0
      %p55 = por %p53, %p54
      %s56 = ssub.s32 %s15, %s27
      %p57 = scmp.eq.s32.totalorder %s56, 0
      %s59 = sadd.s32 %s58, 1
      %s60 = scalar_select %p57, %s58, %s59
      %p63 = pneg %p57
      %p64 = scmp.eq.s32.totalorder %s8, 1
      %p65 = por %p63, %p64
      %p66 = scmp.ne.s32.totalorder %s58, %s61
      %p67 = scmp.eq.s32.totalorder %s8, 0
      %p68 = por %p66, %p67
      %p69 = scmp.ne.s32.totalorder %s58, %s61
      %p70 = scmp.eq.s32.totalorder %s13, 1
      %p71 = por %p69, %p70
      %p72 = scmp.ne.s32.totalorder %s61, %s62
      %p73 = scmp.eq.s32.totalorder %s13, 0
      %p74 = por %p72, %p73
      %p75 = scmp.ne.s32.totalorder %s61, %s62
      %p76 = scmp.eq.s32.totalorder %s14, 1
      %p77 = por %p75, %p76
      %p79 = scmp.ne.s32.totalorder %s62, %s78
      %p80 = scmp.eq.s32.totalorder %s14, 0
      %p81 = por %p79, %p80
      %s82 = ssub.s32 %s16, %s23
      %s83 = ssub.s32 %s15, %s27
      %s84 = sor.u32 %s82, %s83
      %p85 = scmp.eq.s32.totalorder %s84, 0
      %s87 = sadd.s32 %s86, 1
      %s88 = scalar_select %p85, %s86, %s87
      %p91 = pneg %p85
      %p92 = scmp.eq.s32.totalorder %s8, 1
      %p93 = por %p91, %p92
      %p94 = scmp.ne.s32.totalorder %s86, %s89
      %p95 = scmp.eq.s32.totalorder %s8, 0
      %p96 = por %p94, %p95
      %p97 = scmp.ne.s32.totalorder %s86, %s89
      %p98 = scmp.eq.s32.totalorder %s13, 1
      %p99 = por %p97, %p98
      %p100 = scmp.ne.s32.totalorder %s89, %s90
      %p101 = scmp.eq.s32.totalorder %s13, 0
      %p102 = por %p100, %p101
      %p103 = scmp.ne.s32.totalorder %s89, %s90
      %p104 = scmp.eq.s32.totalorder %s14, 1
      %p105 = por %p103, %p104
      %p107 = scmp.ne.s32.totalorder %s90, %s106
      %p108 = scmp.eq.s32.totalorder %s14, 0
      %p109 = por %p107, %p108
      %p110 = scmp.le.s32.totalorder 1, %s8
      %p111 = scmp.lt.s32.totalorder %s8, 3
      %p112 = pnand %p110, %p111
      %p113 = pneg %p112
      // Predicated region
      $region9: #{tpu_custom_call.1} parent=5 // pred_check
        _
      $region10: #{tpu_custom_call.1} parent=5 // pred_check_branch
        %115 = sbr.rel (%p112) target = $region12
      $region11: #{tpu_custom_call.1} parent=5 // pred_region
        %s116 = ssub.s32 %s8, 1
      $region12: #{tpu_custom_call.1} parent=5 // pred_fallthru
        _
      %p117 = scmp.lt.s32.totalorder %s8, 2
      // Predicated region
      $region13: #{tpu_custom_call.1} parent=5 // pred_check
        %p118 = pneg %p117
      $region14: #{tpu_custom_call.1} parent=5 // pred_check_branch
        %120 = sbr.rel (%p118) target = $region16
      $region15: #{tpu_custom_call.1} parent=5 // pred_region
        // Predicated region
        $region17: #{tpu_custom_call.1} parent=15 // pred_check
          %p121 = pneg %p42
        $region18: #{tpu_custom_call.1} parent=15 // pred_check_branch
          %123 = sbr.rel (%p121) target = $region20
        $region19: #{tpu_custom_call.1} parent=15 // pred_region
          %s124 = sand.u32 %s32, 1
          %s125 = sand.u32 %s32, 1
          %s126 = smul.addr %s125, 672
          %s127 = scalar_lea.vmem [#allocation2], %s126
          %s128 = smul.u32 3, %s15
          %s129 = smul.addr %s16, 168
          %s130 = sadd.s32 %s128, %s129
          %s131 = smul.addr %s130, 8
          %s132 = scalar_lea.vmem %s0, %s131
          // Predicated region
          $region21: #{tpu_custom_call.1} parent=19 // pred_check
            _
          $region22: #{tpu_custom_call.1} parent=19 // pred_check_branch
            %134 = sbr.rel (0) target = $region24
          $region23: #{tpu_custom_call.1} parent=19 // pred_region
            // Predicated region
            $region25: #{tpu_custom_call.1} parent=23 // pred_check
              _
            $region26: #{tpu_custom_call.1} parent=23 // pred_check_branch
              %136 = sbr.rel (0) target = $region28
            $region27: #{tpu_custom_call.1} parent=23 // pred_region
              loop: start=0, step=1, limit=1
              $region29: #{tpu_custom_call.1} parent=27 // loop_pre_header
                _
              $region30: #{tpu_custom_call.1} parent=27 // loop_header
                %s138 = sphi 0, %s142
                %p139 = scmp.ge.s32.totalorder %s138, 1
                %s143 = sphi %s132, %s132
                %s144 = sphi %s127, %s127
              $region31: #{tpu_custom_call.1} parent=27 // loop_header_branch
                %141 = sbr.rel (%p139) target = $region35
              $region32: #{tpu_custom_call.1} parent=27 // loop_body
                %v145 = vld [vmem:[%s143] sm:$0xff]
                %146 = vst [vmem:[%s144] sm:$0xff] %v145
                %v147 = vld [vmem:[%s143 + $0x8] sm:$0xff]
                %148 = vst [vmem:[%s144 + $0x8] sm:$0xff] %v147
                %v149 = vld [vmem:[%s143 + $0x10] sm:$0xff]
                %150 = vst [vmem:[%s144 + $0x10] sm:$0xff] %v149
                %v151 = vld [vmem:[%s143 + $0x30] sm:$0xff]
                %152 = vst [vmem:[%s144 + $0x18] sm:$0xff] %v151
                %v153 = vld [vmem:[%s143 + $0x38] sm:$0xff]
                %154 = vst [vmem:[%s144 + $0x20] sm:$0xff] %v153
                %v155 = vld [vmem:[%s143 + $0x40] sm:$0xff]
                %156 = vst [vmem:[%s144 + $0x28] sm:$0xff] %v155
                %v157 = vld [vmem:[%s143 + $0x60] sm:$0xff]
                %158 = vst [vmem:[%s144 + $0x30] sm:$0xff] %v157
                %v159 = vld [vmem:[%s143 + $0x68] sm:$0xff]
                %160 = vst [vmem:[%s144 + $0x38] sm:$0xff] %v159
                %v161 = vld [vmem:[%s143 + $0x70] sm:$0xff]
                %162 = vst [vmem:[%s144 + $0x40] sm:$0xff] %v161
                %v163 = vld [vmem:[%s143 + $0x90] sm:$0xff]
                %164 = vst [vmem:[%s144 + $0x48] sm:$0xff] %v163
                %v165 = vld [vmem:[%s143 + $0x98] sm:$0xff]
                %166 = vst [vmem:[%s144 + $0x50] sm:$0xff] %v165
                %v167 = vld [vmem:[%s143 + $0xa0] sm:$0xff]
                %168 = vst [vmem:[%s144 + $0x58] sm:$0xff] %v167
                %v169 = vld [vmem:[%s143 + $0xc0] sm:$0xff]
                %170 = vst [vmem:[%s144 + $0x60] sm:$0xff] %v169
                %v171 = vld [vmem:[%s143 + $0xc8] sm:$0xff]
                %172 = vst [vmem:[%s144 + $0x68] sm:$0xff] %v171
                %v173 = vld [vmem:[%s143 + $0xd0] sm:$0xff]
                %174 = vst [vmem:[%s144 + $0x70] sm:$0xff] %v173
                %v175 = vld [vmem:[%s143 + $0xf0] sm:$0xff]
                %176 = vst [vmem:[%s144 + $0x78] sm:$0xff] %v175
                %v177 = vld [vmem:[%s143 + $0xf8] sm:$0xff]
                %178 = vst [vmem:[%s144 + $0x80] sm:$0xff] %v177
                %v179 = vld [vmem:[%s143 + $0x100] sm:$0xff]
                %180 = vst [vmem:[%s144 + $0x88] sm:$0xff] %v179
                %v181 = vld [vmem:[%s143 + $0x120] sm:$0xff]
                %182 = vst [vmem:[%s144 + $0x90] sm:$0xff] %v181
                %v183 = vld [vmem:[%s143 + $0x128] sm:$0xff]
                %184 = vst [vmem:[%s144 + $0x98] sm:$0xff] %v183
                %v185 = vld [vmem:[%s143 + $0x130] sm:$0xff]
                %186 = vst [vmem:[%s144 + $0xa0] sm:$0xff] %v185
                %v187 = vld [vmem:[%s143 + $0x150] sm:$0xff]
                %188 = vst [vmem:[%s144 + $0xa8] sm:$0xff] %v187
                %v189 = vld [vmem:[%s143 + $0x158] sm:$0xff]
                %190 = vst [vmem:[%s144 + $0xb0] sm:$0xff] %v189
                %v191 = vld [vmem:[%s143 + $0x160] sm:$0xff]
                %192 = vst [vmem:[%s144 + $0xb8] sm:$0xff] %v191
                %v193 = vld [vmem:[%s143 + $0x180] sm:$0xff]
                %194 = vst [vmem:[%s144 + $0xc0] sm:$0xff] %v193
                %v195 = vld [vmem:[%s143 + $0x188] sm:$0xff]
                %196 = vst [vmem:[%s144 + $0xc8] sm:$0xff] %v195
                %v197 = vld [vmem:[%s143 + $0x190] sm:$0xff]
                %198 = vst [vmem:[%s144 + $0xd0] sm:$0xff] %v197
                %v199 = vld [vmem:[%s143 + $0x1b0] sm:$0xff]
                %200 = vst [vmem:[%s144 + $0xd8] sm:$0xff] %v199
                %v201 = vld [vmem:[%s143 + $0x1b8] sm:$0xff]
                %202 = vst [vmem:[%s144 + $0xe0] sm:$0xff] %v201
                %v203 = vld [vmem:[%s143 + $0x1c0] sm:$0xff]
                %204 = vst [vmem:[%s144 + $0xe8] sm:$0xff] %v203
                %v205 = vld [vmem:[%s143 + $0x1e0] sm:$0xff]
                %206 = vst [vmem:[%s144 + $0xf0] sm:$0xff] %v205
                %v207 = vld [vmem:[%s143 + $0x1e8] sm:$0xff]
                %208 = vst [vmem:[%s144 + $0xf8] sm:$0xff] %v207
                %v209 = vld [vmem:[%s143 + $0x1f0] sm:$0xff]
                %210 = vst [vmem:[%s144 + $0x100] sm:$0xff] %v209
                %v211 = vld [vmem:[%s143 + $0x210] sm:$0xff]
                %212 = vst [vmem:[%s144 + $0x108] sm:$0xff] %v211
                %v213 = vld [vmem:[%s143 + $0x218] sm:$0xff]
                %214 = vst [vmem:[%s144 + $0x110] sm:$0xff] %v213
                %v215 = vld [vmem:[%s143 + $0x220] sm:$0xff]
                %216 = vst [vmem:[%s144 + $0x118] sm:$0xff] %v215
                %v217 = vld [vmem:[%s143 + $0x240] sm:$0xff]
                %218 = vst [vmem:[%s144 + $0x120] sm:$0xff] %v217
                %v219 = vld [vmem:[%s143 + $0x248] sm:$0xff]
                %220 = vst [vmem:[%s144 + $0x128] sm:$0xff] %v219
                %v221 = vld [vmem:[%s143 + $0x250] sm:$0xff]
                %222 = vst [vmem:[%s144 + $0x130] sm:$0xff] %v221
                %v223 = vld [vmem:[%s143 + $0x270] sm:$0xff]
                %224 = vst [vmem:[%s144 + $0x138] sm:$0xff] %v223
                %v225 = vld [vmem:[%s143 + $0x278] sm:$0xff]
                %226 = vst [vmem:[%s144 + $0x140] sm:$0xff] %v225
                %v227 = vld [vmem:[%s143 + $0x280] sm:$0xff]
                %228 = vst [vmem:[%s144 + $0x148] sm:$0xff] %v227
                %v229 = vld [vmem:[%s143 + $0x2a0] sm:$0xff]
                %230 = vst [vmem:[%s144 + $0x150] sm:$0xff] %v229
                %v231 = vld [vmem:[%s143 + $0x2a8] sm:$0xff]
                %232 = vst [vmem:[%s144 + $0x158] sm:$0xff] %v231
                %v233 = vld [vmem:[%s143 + $0x2b0] sm:$0xff]
                %234 = vst [vmem:[%s144 + $0x160] sm:$0xff] %v233
                %v235 = vld [vmem:[%s143 + $0x2d0] sm:$0xff]
                %236 = vst [vmem:[%s144 + $0x168] sm:$0xff] %v235
                %v237 = vld [vmem:[%s143 + $0x2d8] sm:$0xff]
                %238 = vst [vmem:[%s144 + $0x170] sm:$0xff] %v237
                %v239 = vld [vmem:[%s143 + $0x2e0] sm:$0xff]
                %240 = vst [vmem:[%s144 + $0x178] sm:$0xff] %v239
                %v241 = vld [vmem:[%s143 + $0x300] sm:$0xff]
                %242 = vst [vmem:[%s144 + $0x180] sm:$0xff] %v241
                %v243 = vld [vmem:[%s143 + $0x308] sm:$0xff]
                %244 = vst [vmem:[%s144 + $0x188] sm:$0xff] %v243
                %v245 = vld [vmem:[%s143 + $0x310] sm:$0xff]
                %246 = vst [vmem:[%s144 + $0x190] sm:$0xff] %v245
                %v247 = vld [vmem:[%s143 + $0x330] sm:$0xff]
                %248 = vst [vmem:[%s144 + $0x198] sm:$0xff] %v247
                %v249 = vld [vmem:[%s143 + $0x338] sm:$0xff]
                %250 = vst [vmem:[%s144 + $0x1a0] sm:$0xff] %v249
                %v251 = vld [vmem:[%s143 + $0x340] sm:$0xff]
                %252 = vst [vmem:[%s144 + $0x1a8] sm:$0xff] %v251
                %v253 = vld [vmem:[%s143 + $0x360] sm:$0xff]
                %254 = vst [vmem:[%s144 + $0x1b0] sm:$0xff] %v253
                %v255 = vld [vmem:[%s143 + $0x368] sm:$0xff]
                %256 = vst [vmem:[%s144 + $0x1b8] sm:$0xff] %v255
                %v257 = vld [vmem:[%s143 + $0x370] sm:$0xff]
                %258 = vst [vmem:[%s144 + $0x1c0] sm:$0xff] %v257
                %v259 = vld [vmem:[%s143 + $0x390] sm:$0xff]
                %260 = vst [vmem:[%s144 + $0x1c8] sm:$0xff] %v259
                %v261 = vld [vmem:[%s143 + $0x398] sm:$0xff]
                %262 = vst [vmem:[%s144 + $0x1d0] sm:$0xff] %v261
                %v263 = vld [vmem:[%s143 + $0x3a0] sm:$0xff]
                %264 = vst [vmem:[%s144 + $0x1d8] sm:$0xff] %v263
                %v265 = vld [vmem:[%s143 + $0x3c0] sm:$0xff]
                %266 = vst [vmem:[%s144 + $0x1e0] sm:$0xff] %v265
                %v267 = vld [vmem:[%s143 + $0x3c8] sm:$0xff]
                %268 = vst [vmem:[%s144 + $0x1e8] sm:$0xff] %v267
                %v269 = vld [vmem:[%s143 + $0x3d0] sm:$0xff]
                %270 = vst [vmem:[%s144 + $0x1f0] sm:$0xff] %v269
                %v271 = vld [vmem:[%s143 + $0x3f0] sm:$0xff]
                %272 = vst [vmem:[%s144 + $0x1f8] sm:$0xff] %v271
                %v273 = vld [vmem:[%s143 + $0x3f8] sm:$0xff]
                %274 = vst [vmem:[%s144 + $0x200] sm:$0xff] %v273
                %v275 = vld [vmem:[%s143 + $0x400] sm:$0xff]
                %276 = vst [vmem:[%s144 + $0x208] sm:$0xff] %v275
                %v277 = vld [vmem:[%s143 + $0x420] sm:$0xff]
                %278 = vst [vmem:[%s144 + $0x210] sm:$0xff] %v277
                %v279 = vld [vmem:[%s143 + $0x428] sm:$0xff]
                %280 = vst [vmem:[%s144 + $0x218] sm:$0xff] %v279
                %v281 = vld [vmem:[%s143 + $0x430] sm:$0xff]
                %282 = vst [vmem:[%s144 + $0x220] sm:$0xff] %v281
                %v283 = vld [vmem:[%s143 + $0x450] sm:$0xff]
                %284 = vst [vmem:[%s144 + $0x228] sm:$0xff] %v283
                %v285 = vld [vmem:[%s143 + $0x458] sm:$0xff]
                %286 = vst [vmem:[%s144 + $0x230] sm:$0xff] %v285
                %v287 = vld [vmem:[%s143 + $0x460] sm:$0xff]
                %288 = vst [vmem:[%s144 + $0x238] sm:$0xff] %v287
                %v289 = vld [vmem:[%s143 + $0x480] sm:$0xff]
                %290 = vst [vmem:[%s144 + $0x240] sm:$0xff] %v289
                %v291 = vld [vmem:[%s143 + $0x488] sm:$0xff]
                %292 = vst [vmem:[%s144 + $0x248] sm:$0xff] %v291
                %v293 = vld [vmem:[%s143 + $0x490] sm:$0xff]
                %294 = vst [vmem:[%s144 + $0x250] sm:$0xff] %v293
                %v295 = vld [vmem:[%s143 + $0x4b0] sm:$0xff]
                %296 = vst [vmem:[%s144 + $0x258] sm:$0xff] %v295
                %v297 = vld [vmem:[%s143 + $0x4b8] sm:$0xff]
                %298 = vst [vmem:[%s144 + $0x260] sm:$0xff] %v297
                %v299 = vld [vmem:[%s143 + $0x4c0] sm:$0xff]
                %300 = vst [vmem:[%s144 + $0x268] sm:$0xff] %v299
                %v301 = vld [vmem:[%s143 + $0x4e0] sm:$0xff]
                %302 = vst [vmem:[%s144 + $0x270] sm:$0xff] %v301
                %v303 = vld [vmem:[%s143 + $0x4e8] sm:$0xff]
                %304 = vst [vmem:[%s144 + $0x278] sm:$0xff] %v303
                %v305 = vld [vmem:[%s143 + $0x4f0] sm:$0xff]
                %306 = vst [vmem:[%s144 + $0x280] sm:$0xff] %v305
                %v307 = vld [vmem:[%s143 + $0x510] sm:$0xff]
                %308 = vst [vmem:[%s144 + $0x288] sm:$0xff] %v307
                %v309 = vld [vmem:[%s143 + $0x518] sm:$0xff]
                %310 = vst [vmem:[%s144 + $0x290] sm:$0xff] %v309
                %v311 = vld [vmem:[%s143 + $0x520] sm:$0xff]
                %312 = vst [vmem:[%s144 + $0x298] sm:$0xff] %v311
              $region33: #{tpu_custom_call.1} parent=27 // loop_footer
                %s142 = sadd.s32 1, %s138
              $region34: #{tpu_custom_call.1} parent=27 // loop_footer_branch
                %137 = sbr.rel target = $region30
              $region35: #{tpu_custom_call.1} parent=27 // loop_exit
                _
            $region28: #{tpu_custom_call.1} parent=23 // pred_fallthru
              _
            // Predicated region
            $region36: #{tpu_custom_call.1} parent=23 // pred_check
              _
            $region37: #{tpu_custom_call.1} parent=23 // pred_check_branch
              %314 = sbr.rel target = $region39
            $region38: #{tpu_custom_call.1} parent=23 // pred_region
              _
            $region39: #{tpu_custom_call.1} parent=23 // pred_fallthru
              _
          $region24: #{tpu_custom_call.1} parent=19 // pred_fallthru
            _
          %315 = vnop
        $region20: #{tpu_custom_call.1} parent=15 // pred_fallthru
          _
        // Predicated region
        $region40: #{tpu_custom_call.1} parent=15 // pred_check
          %p316 = pneg %p68
        $region41: #{tpu_custom_call.1} parent=15 // pred_check_branch
          %318 = sbr.rel (%p316) target = $region43
        $region42: #{tpu_custom_call.1} parent=15 // pred_region
          %s319 = sand.u32 %s58, 1
          %s320 = sand.u32 %s58, 1
          %s321 = smul.addr %s320, 48
          %s322 = scalar_lea.vmem [#allocation3], %s321
          %s323 = smul.u32 3, %s15
          %s324 = smul.addr %s323, 8
          %s325 = scalar_lea.vmem %s1, %s324
          // Predicated region
          $region44: #{tpu_custom_call.1} parent=42 // pred_check
            _
          $region45: #{tpu_custom_call.1} parent=42 // pred_check_branch
            %327 = sbr.rel (0) target = $region47
          $region46: #{tpu_custom_call.1} parent=42 // pred_region
            // Predicated region
            $region48: #{tpu_custom_call.1} parent=46 // pred_check
              _
            $region49: #{tpu_custom_call.1} parent=46 // pred_check_branch
              %329 = sbr.rel (0) target = $region51
            $region50: #{tpu_custom_call.1} parent=46 // pred_region
              loop: start=0, step=1, limit=1
              $region52: #{tpu_custom_call.1} parent=50 // loop_pre_header
                _
              $region53: #{tpu_custom_call.1} parent=50 // loop_header
                %s331 = sphi 0, %s335
                %p332 = scmp.ge.s32.totalorder %s331, 1
                %s336 = sphi %s325, %s325
                %s337 = sphi %s322, %s322
              $region54: #{tpu_custom_call.1} parent=50 // loop_header_branch
                %334 = sbr.rel (%p332) target = $region58
              $region55: #{tpu_custom_call.1} parent=50 // loop_body
                %v338 = vld [vmem:[%s336] sm:$0xff]
                %339 = vst [vmem:[%s337] sm:$0xff] %v338
                %v340 = vld [vmem:[%s336 + $0x8] sm:$0xff]
                %341 = vst [vmem:[%s337 + $0x8] sm:$0xff] %v340
                %v342 = vld [vmem:[%s336 + $0x10] sm:$0xff]
                %343 = vst [vmem:[%s337 + $0x10] sm:$0xff] %v342
                %v344 = vld [vmem:[%s336 + $0x30] sm:$0xff]
                %345 = vst [vmem:[%s337 + $0x18] sm:$0xff] %v344
                %v346 = vld [vmem:[%s336 + $0x38] sm:$0xff]
                %347 = vst [vmem:[%s337 + $0x20] sm:$0xff] %v346
                %v348 = vld [vmem:[%s336 + $0x40] sm:$0xff]
                %349 = vst [vmem:[%s337 + $0x28] sm:$0xff] %v348
              $region56: #{tpu_custom_call.1} parent=50 // loop_footer
                %s335 = sadd.s32 1, %s331
              $region57: #{tpu_custom_call.1} parent=50 // loop_footer_branch
                %330 = sbr.rel target = $region53
              $region58: #{tpu_custom_call.1} parent=50 // loop_exit
                _
            $region51: #{tpu_custom_call.1} parent=46 // pred_fallthru
              _
            // Predicated region
            $region59: #{tpu_custom_call.1} parent=46 // pred_check
              _
            $region60: #{tpu_custom_call.1} parent=46 // pred_check_branch
              %351 = sbr.rel target = $region62
            $region61: #{tpu_custom_call.1} parent=46 // pred_region
              _
            $region62: #{tpu_custom_call.1} parent=46 // pred_fallthru
              _
          $region47: #{tpu_custom_call.1} parent=42 // pred_fallthru
            _
          %352 = vnop
        $region43: #{tpu_custom_call.1} parent=15 // pred_fallthru
          _
      $region16: #{tpu_custom_call.1} parent=5 // pred_fallthru
        _
      %p353 = scmp.le.s32.totalorder 1, %s8
      %p354 = scmp.lt.s32.totalorder %s8, 3
      %p355 = pnand %p353, %p354
      %p356 = pneg %p355
      // Predicated region
      $region63: #{tpu_custom_call.1} parent=5 // pred_check
        _
      $region64: #{tpu_custom_call.1} parent=5 // pred_check_branch
        %358 = sbr.rel (%p355) target = $region66
      $region65: #{tpu_custom_call.1} parent=5 // pred_region
        %s359 = ssub.s32 %s8, 1
        %s360 = sand.u32 %s35, 1
        %s361 = sand.u32 %s35, 1
        %s362 = smul.addr %s361, 672
        %s363 = scalar_lea.vmem [#allocation2], %s362
        // Predicated region
        $region67: #{tpu_custom_call.1} parent=65 // pred_check
          %p364 = pneg %p48
        $region68: #{tpu_custom_call.1} parent=65 // pred_check_branch
          %366 = sbr.rel (%p364) target = $region70
        $region69: #{tpu_custom_call.1} parent=65 // pred_region
          _
        $region70: #{tpu_custom_call.1} parent=65 // pred_fallthru
          _
        %s367 = sand.u32 %s61, 1
        %s368 = sand.u32 %s61, 1
        %s369 = smul.addr %s368, 48
        %s370 = scalar_lea.vmem [#allocation3], %s369
        // Predicated region
        $region71: #{tpu_custom_call.1} parent=65 // pred_check
          %p371 = pneg %p74
        $region72: #{tpu_custom_call.1} parent=65 // pred_check_branch
          %373 = sbr.rel (%p371) target = $region74
        $region73: #{tpu_custom_call.1} parent=65 // pred_region
          _
        $region74: #{tpu_custom_call.1} parent=65 // pred_fallthru
          _
        %s374 = sand.u32 %s35, 1
        %s375 = sand.u32 %s35, 1
        %s376 = smul.addr %s375, 672
        %s377 = scalar_lea.vmem [#allocation2], %s376
        %p378 = pneg %p48
        %p379 = pneg %p45
        %s380 = sand.u32 %s61, 1
        %s381 = sand.u32 %s61, 1
        %s382 = smul.addr %s381, 48
        %s383 = scalar_lea.vmem [#allocation3], %s382
        %p384 = pneg %p74
        %p385 = pneg %p71
        %p386 = pneg %p102
        %p387 = pneg %p99
        %s388 = sand.u32 %s89, 1
        %s389 = sand.u32 %s89, 1
        %s390 = smul.addr %s389, 672
        %s391 = scalar_lea.vmem [#allocation4], %s390
        %s392 = smul.u32 3, %s17
        %s393 = smul.u32 3, %s17
        %s394 = smul.u32 3, %s17
        %v395 = vld [vmem:[%s370] sm:$0xff]
        %v396 = vld [vmem:[%s370 + $0x8] sm:$0xff]
        %v397 = vld [vmem:[%s370 + $0x10] sm:$0xff]
        %v398 = vld [vmem:[%s370 + $0x18] sm:$0x1]
        %v399 = vld [vmem:[%s370 + $0x20] sm:$0x1]
        %v400 = vld [vmem:[%s370 + $0x28] sm:$0x1]
        %v401 = vlaneseq
        %v402 = vshrl.u32 %v401, 7
        %v403 = vsub.s32 0, %v402
        %v404 = vrot.slane %v395, %v403
        %v405 = vlaneseq
        %v406 = vshrl.u32 %v405, 7
        %v407 = vsub.s32 0, %v406
        %v408 = vrot.slane %v396, %v407
        %v409 = vlaneseq
        %v410 = vshrl.u32 %v409, 7
        %v411 = vsub.s32 0, %v410
        %v412 = vrot.slane %v397, %v411
        %v413 = vlaneseq
        %v414 = vshrl.u32 %v413, 7
        %v415 = vsub.s32 1, %v414
        %v416 = vrot.slane %v395, %v415
        %v417 = vlaneseq
        %v418 = vshrl.u32 %v417, 7
        %v419 = vsub.s32 1, %v418
        %v420 = vrot.slane %v396, %v419
        %v421 = vlaneseq
        %v422 = vshrl.u32 %v421, 7
        %v423 = vsub.s32 1, %v422
        %v424 = vrot.slane %v397, %v423
        %v425 = vlaneseq
        %v426 = vshrl.u32 %v425, 7
        %v427 = vsub.s32 2, %v426
        %v428 = vrot.slane %v395, %v427
        %v429 = vlaneseq
        %v430 = vshrl.u32 %v429, 7
        %v431 = vsub.s32 2, %v430
        %v432 = vrot.slane %v396, %v431
        %v433 = vlaneseq
        %v434 = vshrl.u32 %v433, 7
        %v435 = vsub.s32 2, %v434
        %v436 = vrot.slane %v397, %v435
        %v437 = vlaneseq
        %v438 = vshrl.u32 %v437, 7
        %v439 = vsub.s32 3, %v438
        %v440 = vrot.slane %v395, %v439
        %v441 = vlaneseq
        %v442 = vshrl.u32 %v441, 7
        %v443 = vsub.s32 3, %v442
        %v444 = vrot.slane %v396, %v443
        %v445 = vlaneseq
        %v446 = vshrl.u32 %v445, 7
        %v447 = vsub.s32 3, %v446
        %v448 = vrot.slane %v397, %v447
        %v449 = vlaneseq
        %v450 = vshrl.u32 %v449, 7
        %v451 = vsub.s32 4, %v450
        %v452 = vrot.slane %v395, %v451
        %v453 = vlaneseq
        %v454 = vshrl.u32 %v453, 7
        %v455 = vsub.s32 4, %v454
        %v456 = vrot.slane %v396, %v455
        %v457 = vlaneseq
        %v458 = vshrl.u32 %v457, 7
        %v459 = vsub.s32 4, %v458
        %v460 = vrot.slane %v397, %v459
        %v461 = vlaneseq
        %v462 = vshrl.u32 %v461, 7
        %v463 = vsub.s32 5, %v462
        %v464 = vrot.slane %v395, %v463
        %v465 = vlaneseq
        %v466 = vshrl.u32 %v465, 7
        %v467 = vsub.s32 5, %v466
        %v468 = vrot.slane %v396, %v467
        %v469 = vlaneseq
        %v470 = vshrl.u32 %v469, 7
        %v471 = vsub.s32 5, %v470
        %v472 = vrot.slane %v397, %v471
        %v473 = vlaneseq
        %v474 = vshrl.u32 %v473, 7
        %v475 = vsub.s32 6, %v474
        %v476 = vrot.slane %v395, %v475
        %v477 = vlaneseq
        %v478 = vshrl.u32 %v477, 7
        %v479 = vsub.s32 6, %v478
        %v480 = vrot.slane %v396, %v479
        %v481 = vlaneseq
        %v482 = vshrl.u32 %v481, 7
        %v483 = vsub.s32 6, %v482
        %v484 = vrot.slane %v397, %v483
        %v485 = vlaneseq
        %v486 = vshrl.u32 %v485, 7
        %v487 = vsub.s32 7, %v486
        %v488 = vrot.slane %v395, %v487
        %v489 = vlaneseq
        %v490 = vshrl.u32 %v489, 7
        %v491 = vsub.s32 7, %v490
        %v492 = vrot.slane %v396, %v491
        %v493 = vlaneseq
        %v494 = vshrl.u32 %v493, 7
        %v495 = vsub.s32 7, %v494
        %v496 = vrot.slane %v397, %v495
        %v497 = vlaneseq
        %v498 = vshrl.u32 %v497, 7
        %v499 = vsub.s32 0, %v498
        %v500 = vrot.slane %v398, %v499
        %v501 = vlaneseq
        %v502 = vshrl.u32 %v501, 7
        %v503 = vsub.s32 0, %v502
        %v504 = vrot.slane %v399, %v503
        %v505 = vlaneseq
        %v506 = vshrl.u32 %v505, 7
        %v507 = vsub.s32 0, %v506
        %v508 = vrot.slane %v400, %v507
        %v509 = vld [vmem:[%s363] sm:$0xff]
        %v510 = vld [vmem:[%s363 + $0x8] sm:$0xff]
        %v511 = vld [vmem:[%s363 + $0x10] sm:$0xff]
        %v512 = vld [vmem:[%s363 + $0x18] sm:$0x3f]
        %v513 = vld [vmem:[%s363 + $0x20] sm:$0x3f]
        %v514 = vld [vmem:[%s363 + $0x28] sm:$0x3f]
        %vm521 = vcmask 1040384
        %v522 = vrot.slane %v509, 7
        %v523 = vrot.slane %v510, 7
        %v524 = vrot.slane %v511, 7
        %v525 = vrot.slane %v512, 7
        %v526 = vsel %vm521, %v522, %v525
        %v527 = vrot.slane %v513, 7
        %v528 = vsel %vm521, %v523, %v527
        %v529 = vrot.slane %v514, 7
        %v530 = vsel %vm521, %v524, %v529
        %v537 = vsel %vm521, 0.0, %v522
        %v538 = vsel %vm521, 0.0, %v523
        %v539 = vsel %vm521, 0.0, %v524
        %vm540 = vcmask 1046528
        %v541 = vrot.slane %v509, 1
        %v542 = vrot.slane %v512, 1
        %v543 = vsel %vm540, %v541, %v542
        %v544 = vrot.slane %v510, 1
        %v545 = vrot.slane %v513, 1
        %v546 = vsel %vm540, %v544, %v545
        %v547 = vrot.slane %v511, 1
        %v548 = vrot.slane %v514, 1
        %v549 = vsel %vm540, %v547, %v548
        %vm556 = vcmask 1044480
        %v557 = vsel %vm556, %v542, 0.0
        %v558 = vsel %vm556, %v545, 0.0
        %v559 = vsel %vm556, %v548, 0.0
        %v560 = vmul.f32 %v537, %v404
        %v561 = vmul.f32 %v538, %v408
        %v562 = vmul.f32 %v539, %v412
        %v563 = vmul.f32 %v526, %v404
        %v564 = vmul.f32 %v528, %v408
        %v565 = vmul.f32 %v530, %v412
        %v566 = vmul.f32 %v509, %v416
        %v567 = vmul.f32 %v510, %v420
        %v568 = vmul.f32 %v511, %v424
        %v569 = vmul.f32 %v512, %v416
        %v570 = vmul.f32 %v513, %v420
        %v571 = vmul.f32 %v514, %v424
        %v572 = vadd.f32 %v560, %v566
        %v573 = vadd.f32 %v561, %v567
        %v574 = vadd.f32 %v562, %v568
        %v575 = vadd.f32 %v563, %v569
        %v576 = vadd.f32 %v564, %v570
        %v577 = vadd.f32 %v565, %v571
        %v578 = vmul.f32 %v543, %v428
        %v579 = vmul.f32 %v546, %v432
        %v580 = vmul.f32 %v549, %v436
        %v581 = vmul.f32 %v557, %v428
        %v582 = vmul.f32 %v558, %v432
        %v583 = vmul.f32 %v559, %v436
        %v584 = vadd.f32 %v572, %v578
        %v585 = vadd.f32 %v573, %v579
        %v586 = vadd.f32 %v574, %v580
        %v587 = vadd.f32 %v575, %v581
        %v588 = vadd.f32 %v576, %v582
        %v589 = vadd.f32 %v577, %v583
        %v590 = vmul.f32 %v537, %v440
        %v591 = vmul.f32 %v538, %v444
        %v592 = vmul.f32 %v539, %v448
        %v593 = vmul.f32 %v526, %v440
        %v594 = vmul.f32 %v528, %v444
        %v595 = vmul.f32 %v530, %v448
        %v596 = vmul.f32 %v509, %v452
        %v597 = vmul.f32 %v510, %v456
        %v598 = vmul.f32 %v511, %v460
        %v599 = vmul.f32 %v512, %v452
        %v600 = vmul.f32 %v513, %v456
        %v601 = vmul.f32 %v514, %v460
        %v602 = vadd.f32 %v590, %v596
        %v603 = vadd.f32 %v591, %v597
        %v604 = vadd.f32 %v592, %v598
        %v605 = vadd.f32 %v593, %v599
        %v606 = vadd.f32 %v594, %v600
        %v607 = vadd.f32 %v595, %v601
        %v608 = vmul.f32 %v543, %v464
        %v609 = vmul.f32 %v546, %v468
        %v610 = vmul.f32 %v549, %v472
        %v611 = vmul.f32 %v557, %v464
        %v612 = vmul.f32 %v558, %v468
        %v613 = vmul.f32 %v559, %v472
        %v614 = vadd.f32 %v602, %v608
        %v615 = vadd.f32 %v603, %v609
        %v616 = vadd.f32 %v604, %v610
        %v617 = vadd.f32 %v605, %v611
        %v618 = vadd.f32 %v606, %v612
        %v619 = vadd.f32 %v607, %v613
        %s620 = scalar_lea.vmem %s363, 48 [#allocation2]
        %v621 = vld [vmem:[%s620] sm:$0xff]
        %v622 = vld [vmem:[%s620 + $0x8] sm:$0xff]
        %v623 = vld [vmem:[%s620 + $0x10] sm:$0xff]
        %v624 = vld [vmem:[%s620 + $0x18] sm:$0x3f]
        %v625 = vld [vmem:[%s620 + $0x20] sm:$0x3f]
        %v626 = vld [vmem:[%s620 + $0x28] sm:$0x3f]
        %v633 = vrot.slane %v621, 7
        %v634 = vrot.slane %v622, 7
        %v635 = vrot.slane %v623, 7
        %v636 = vrot.slane %v624, 7
        %v637 = vsel %vm521, %v633, %v636
        %v638 = vrot.slane %v625, 7
        %v639 = vsel %vm521, %v634, %v638
        %v640 = vrot.slane %v626, 7
        %v641 = vsel %vm521, %v635, %v640
        %v648 = vsel %vm521, 0.0, %v633
        %v649 = vsel %vm521, 0.0, %v634
        %v650 = vsel %vm521, 0.0, %v635
        %v651 = vrot.slane %v621, 1
        %v652 = vrot.slane %v624, 1
        %v653 = vsel %vm540, %v651, %v652
        %v654 = vrot.slane %v622, 1
        %v655 = vrot.slane %v625, 1
        %v656 = vsel %vm540, %v654, %v655
        %v657 = vrot.slane %v623, 1
        %v658 = vrot.slane %v626, 1
        %v659 = vsel %vm540, %v657, %v658
        %v666 = vsel %vm556, %v652, 0.0
        %v667 = vsel %vm556, %v655, 0.0
        %v668 = vsel %vm556, %v658, 0.0
        %v669 = vmul.f32 %v648, %v404
        %v670 = vmul.f32 %v649, %v408
        %v671 = vmul.f32 %v650, %v412
        %v672 = vmul.f32 %v637, %v404
        %v673 = vmul.f32 %v639, %v408
        %v674 = vmul.f32 %v641, %v412
        %v675 = vmul.f32 %v621, %v416
        %v676 = vmul.f32 %v622, %v420
        %v677 = vmul.f32 %v623, %v424
        %v678 = vmul.f32 %v624, %v416
        %v679 = vmul.f32 %v625, %v420
        %v680 = vmul.f32 %v626, %v424
        %v681 = vadd.f32 %v669, %v675
        %v682 = vadd.f32 %v670, %v676
        %v683 = vadd.f32 %v671, %v677
        %v684 = vadd.f32 %v672, %v678
        %v685 = vadd.f32 %v673, %v679
        %v686 = vadd.f32 %v674, %v680
        %v687 = vmul.f32 %v653, %v428
        %v688 = vmul.f32 %v656, %v432
        %v689 = vmul.f32 %v659, %v436
        %v690 = vmul.f32 %v666, %v428
        %v691 = vmul.f32 %v667, %v432
        %v692 = vmul.f32 %v668, %v436
        %v693 = vadd.f32 %v681, %v687
        %v694 = vadd.f32 %v682, %v688
        %v695 = vadd.f32 %v683, %v689
        %v696 = vadd.f32 %v684, %v690
        %v697 = vadd.f32 %v685, %v691
        %v698 = vadd.f32 %v686, %v692
        %v699 = vmul.f32 %v648, %v440
        %v700 = vmul.f32 %v649, %v444
        %v701 = vmul.f32 %v650, %v448
        %v702 = vmul.f32 %v637, %v440
        %v703 = vmul.f32 %v639, %v444
        %v704 = vmul.f32 %v641, %v448
        %v705 = vmul.f32 %v621, %v452
        %v706 = vmul.f32 %v622, %v456
        %v707 = vmul.f32 %v623, %v460
        %v708 = vmul.f32 %v624, %v452
        %v709 = vmul.f32 %v625, %v456
        %v710 = vmul.f32 %v626, %v460
        %v711 = vadd.f32 %v699, %v705
        %v712 = vadd.f32 %v700, %v706
        %v713 = vadd.f32 %v701, %v707
        %v714 = vadd.f32 %v702, %v708
        %v715 = vadd.f32 %v703, %v709
        %v716 = vadd.f32 %v704, %v710
        %v717 = vmul.f32 %v653, %v464
        %v718 = vmul.f32 %v656, %v468
        %v719 = vmul.f32 %v659, %v472
        %v720 = vmul.f32 %v666, %v464
        %v721 = vmul.f32 %v667, %v468
        %v722 = vmul.f32 %v668, %v472
        %v723 = vadd.f32 %v711, %v717
        %v724 = vadd.f32 %v712, %v718
        %v725 = vadd.f32 %v713, %v719
        %v726 = vadd.f32 %v714, %v720
        %v727 = vadd.f32 %v715, %v721
        %v728 = vadd.f32 %v716, %v722
        %v729 = vadd.f32 %v584, %v723
        %v730 = vadd.f32 %v585, %v724
        %v731 = vadd.f32 %v586, %v725
        %v732 = vadd.f32 %v587, %v726
        %v733 = vadd.f32 %v588, %v727
        %v734 = vadd.f32 %v589, %v728
        %v735 = vmul.f32 %v648, %v476
        %v736 = vmul.f32 %v649, %v480
        %v737 = vmul.f32 %v650, %v484
        %v738 = vmul.f32 %v637, %v476
        %v739 = vmul.f32 %v639, %v480
        %v740 = vmul.f32 %v641, %v484
        %v741 = vmul.f32 %v621, %v488
        %v742 = vmul.f32 %v622, %v492
        %v743 = vmul.f32 %v623, %v496
        %v744 = vmul.f32 %v624, %v488
        %v745 = vmul.f32 %v625, %v492
        %v746 = vmul.f32 %v626, %v496
        %v747 = vadd.f32 %v735, %v741
        %v748 = vadd.f32 %v736, %v742
        %v749 = vadd.f32 %v737, %v743
        %v750 = vadd.f32 %v738, %v744
        %v751 = vadd.f32 %v739, %v745
        %v752 = vadd.f32 %v740, %v746
        %v753 = vmul.f32 %v653, %v500
        %v754 = vmul.f32 %v656, %v504
        %v755 = vmul.f32 %v659, %v508
        %v756 = vmul.f32 %v666, %v500
        %v757 = vmul.f32 %v667, %v504
        %v758 = vmul.f32 %v668, %v508
        %v759 = vadd.f32 %v747, %v753
        %v760 = vadd.f32 %v748, %v754
        %v761 = vadd.f32 %v749, %v755
        %v762 = vadd.f32 %v750, %v756
        %v763 = vadd.f32 %v751, %v757
        %v764 = vadd.f32 %v752, %v758
        %v765 = vadd.f32 %v614, %v759
        %v766 = vadd.f32 %v615, %v760
        %v767 = vadd.f32 %v616, %v761
        %v768 = vadd.f32 %v617, %v762
        %v769 = vadd.f32 %v618, %v763
        %v770 = vadd.f32 %v619, %v764
        %771 = vst [vmem:[%s391] sm:$0xff] %v765
        %772 = vst [vmem:[%s391 + $0x8] sm:$0xff] %v766
        %773 = vst [vmem:[%s391 + $0x10] sm:$0xff] %v767
        %774 = vst [vmem:[%s391 + $0x18] sm:$0x3f] %v768
        %775 = vst [vmem:[%s391 + $0x20] sm:$0x3f] %v769
        %776 = vst [vmem:[%s391 + $0x28] sm:$0x3f] %v770
        %s777 = scalar_lea.vmem %s363, 96 [#allocation2]
        %v778 = vld [vmem:[%s777] sm:$0xff]
        %v779 = vld [vmem:[%s777 + $0x8] sm:$0xff]
        %v780 = vld [vmem:[%s777 + $0x10] sm:$0xff]
        %v781 = vld [vmem:[%s777 + $0x18] sm:$0x3f]
        %v782 = vld [vmem:[%s777 + $0x20] sm:$0x3f]
        %v783 = vld [vmem:[%s777 + $0x28] sm:$0x3f]
        %v790 = vrot.slane %v778, 7
        %v791 = vrot.slane %v779, 7
        %v792 = vrot.slane %v780, 7
        %v793 = vrot.slane %v781, 7
        %v794 = vsel %vm521, %v790, %v793
        %v795 = vrot.slane %v782, 7
        %v796 = vsel %vm521, %v791, %v795
        %v797 = vrot.slane %v783, 7
        %v798 = vsel %vm521, %v792, %v797
        %v805 = vsel %vm521, 0.0, %v790
        %v806 = vsel %vm521, 0.0, %v791
        %v807 = vsel %vm521, 0.0, %v792
        %v808 = vrot.slane %v778, 1
        %v809 = vrot.slane %v781, 1
        %v810 = vsel %vm540, %v808, %v809
        %v811 = vrot.slane %v779, 1
        %v812 = vrot.slane %v782, 1
        %v813 = vsel %vm540, %v811, %v812
        %v814 = vrot.slane %v780, 1
        %v815 = vrot.slane %v783, 1
        %v816 = vsel %vm540, %v814, %v815
        %v823 = vsel %vm556, %v809, 0.0
        %v824 = vsel %vm556, %v812, 0.0
        %v825 = vsel %vm556, %v815, 0.0
        %v826 = vmul.f32 %v805, %v404
        %v827 = vmul.f32 %v806, %v408
        %v828 = vmul.f32 %v807, %v412
        %v829 = vmul.f32 %v794, %v404
        %v830 = vmul.f32 %v796, %v408
        %v831 = vmul.f32 %v798, %v412
        %v832 = vmul.f32 %v778, %v416
        %v833 = vmul.f32 %v779, %v420
        %v834 = vmul.f32 %v780, %v424
        %v835 = vmul.f32 %v781, %v416
        %v836 = vmul.f32 %v782, %v420
        %v837 = vmul.f32 %v783, %v424
        %v838 = vadd.f32 %v826, %v832
        %v839 = vadd.f32 %v827, %v833
        %v840 = vadd.f32 %v828, %v834
        %v841 = vadd.f32 %v829, %v835
        %v842 = vadd.f32 %v830, %v836
        %v843 = vadd.f32 %v831, %v837
        %v844 = vmul.f32 %v810, %v428
        %v845 = vmul.f32 %v813, %v432
        %v846 = vmul.f32 %v816, %v436
        %v847 = vmul.f32 %v823, %v428
        %v848 = vmul.f32 %v824, %v432
        %v849 = vmul.f32 %v825, %v436
        %v850 = vadd.f32 %v838, %v844
        %v851 = vadd.f32 %v839, %v845
        %v852 = vadd.f32 %v840, %v846
        %v853 = vadd.f32 %v841, %v847
        %v854 = vadd.f32 %v842, %v848
        %v855 = vadd.f32 %v843, %v849
        %v856 = vmul.f32 %v805, %v440
        %v857 = vmul.f32 %v806, %v444
        %v858 = vmul.f32 %v807, %v448
        %v859 = vmul.f32 %v794, %v440
        %v860 = vmul.f32 %v796, %v444
        %v861 = vmul.f32 %v798, %v448
        %v862 = vmul.f32 %v778, %v452
        %v863 = vmul.f32 %v779, %v456
        %v864 = vmul.f32 %v780, %v460
        %v865 = vmul.f32 %v781, %v452
        %v866 = vmul.f32 %v782, %v456
        %v867 = vmul.f32 %v783, %v460
        %v868 = vadd.f32 %v856, %v862
        %v869 = vadd.f32 %v857, %v863
        %v870 = vadd.f32 %v858, %v864
        %v871 = vadd.f32 %v859, %v865
        %v872 = vadd.f32 %v860, %v866
        %v873 = vadd.f32 %v861, %v867
        %v874 = vmul.f32 %v810, %v464
        %v875 = vmul.f32 %v813, %v468
        %v876 = vmul.f32 %v816, %v472
        %v877 = vmul.f32 %v823, %v464
        %v878 = vmul.f32 %v824, %v468
        %v879 = vmul.f32 %v825, %v472
        %v880 = vadd.f32 %v868, %v874
        %v881 = vadd.f32 %v869, %v875
        %v882 = vadd.f32 %v870, %v876
        %v883 = vadd.f32 %v871, %v877
        %v884 = vadd.f32 %v872, %v878
        %v885 = vadd.f32 %v873, %v879
        %v886 = vadd.f32 %v693, %v880
        %v887 = vadd.f32 %v694, %v881
        %v888 = vadd.f32 %v695, %v882
        %v889 = vadd.f32 %v696, %v883
        %v890 = vadd.f32 %v697, %v884
        %v891 = vadd.f32 %v698, %v885
        %v892 = vmul.f32 %v805, %v476
        %v893 = vmul.f32 %v806, %v480
        %v894 = vmul.f32 %v807, %v484
        %v895 = vmul.f32 %v794, %v476
        %v896 = vmul.f32 %v796, %v480
        %v897 = vmul.f32 %v798, %v484
        %v898 = vmul.f32 %v778, %v488
        %v899 = vmul.f32 %v779, %v492
        %v900 = vmul.f32 %v780, %v496
        %v901 = vmul.f32 %v781, %v488
        %v902 = vmul.f32 %v782, %v492
        %v903 = vmul.f32 %v783, %v496
        %v904 = vadd.f32 %v892, %v898
        %v905 = vadd.f32 %v893, %v899
        %v906 = vadd.f32 %v894, %v900
        %v907 = vadd.f32 %v895, %v901
        %v908 = vadd.f32 %v896, %v902
        %v909 = vadd.f32 %v897, %v903
        %v910 = vmul.f32 %v810, %v500
        %v911 = vmul.f32 %v813, %v504
        %v912 = vmul.f32 %v816, %v508
        %v913 = vmul.f32 %v823, %v500
        %v914 = vmul.f32 %v824, %v504
        %v915 = vmul.f32 %v825, %v508
        %v916 = vadd.f32 %v904, %v910
        %v917 = vadd.f32 %v905, %v911
        %v918 = vadd.f32 %v906, %v912
        %v919 = vadd.f32 %v907, %v913
        %v920 = vadd.f32 %v908, %v914
        %v921 = vadd.f32 %v909, %v915
        %v922 = vadd.f32 %v729, %v916
        %v923 = vadd.f32 %v730, %v917
        %v924 = vadd.f32 %v731, %v918
        %v925 = vadd.f32 %v732, %v919
        %v926 = vadd.f32 %v733, %v920
        %v927 = vadd.f32 %v734, %v921
        %s928 = scalar_lea.vmem %s391, 48 [#allocation4]
        %929 = vst [vmem:[%s928] sm:$0xff] %v922
        %930 = vst [vmem:[%s928 + $0x8] sm:$0xff] %v923
        %931 = vst [vmem:[%s928 + $0x10] sm:$0xff] %v924
        %932 = vst [vmem:[%s928 + $0x18] sm:$0x3f] %v925
        %933 = vst [vmem:[%s928 + $0x20] sm:$0x3f] %v926
        %934 = vst [vmem:[%s928 + $0x28] sm:$0x3f] %v927
        %s935 = scalar_lea.vmem %s363, 144 [#allocation2]
        %v936 = vld [vmem:[%s935] sm:$0xff]
        %v937 = vld [vmem:[%s935 + $0x8] sm:$0xff]
        %v938 = vld [vmem:[%s935 + $0x10] sm:$0xff]
        %v939 = vld [vmem:[%s935 + $0x18] sm:$0x3f]
        %v940 = vld [vmem:[%s935 + $0x20] sm:$0x3f]
        %v941 = vld [vmem:[%s935 + $0x28] sm:$0x3f]
        %v948 = vrot.slane %v936, 7
        %v949 = vrot.slane %v937, 7
        %v950 = vrot.slane %v938, 7
        %v951 = vrot.slane %v939, 7
        %v952 = vsel %vm521, %v948, %v951
        %v953 = vrot.slane %v940, 7
        %v954 = vsel %vm521, %v949, %v953
        %v955 = vrot.slane %v941, 7
        %v956 = vsel %vm521, %v950, %v955
        %v963 = vsel %vm521, 0.0, %v948
        %v964 = vsel %vm521, 0.0, %v949
        %v965 = vsel %vm521, 0.0, %v950
        %v966 = vrot.slane %v936, 1
        %v967 = vrot.slane %v939, 1
        %v968 = vsel %vm540, %v966, %v967
        %v969 = vrot.slane %v937, 1
        %v970 = vrot.slane %v940, 1
        %v971 = vsel %vm540, %v969, %v970
        %v972 = vrot.slane %v938, 1
        %v973 = vrot.slane %v941, 1
        %v974 = vsel %vm540, %v972, %v973
        %v981 = vsel %vm556, %v967, 0.0
        %v982 = vsel %vm556, %v970, 0.0
        %v983 = vsel %vm556, %v973, 0.0
        %v984 = vmul.f32 %v963, %v404
        %v985 = vmul.f32 %v964, %v408
        %v986 = vmul.f32 %v965, %v412
        %v987 = vmul.f32 %v952, %v404
        %v988 = vmul.f32 %v954, %v408
        %v989 = vmul.f32 %v956, %v412
        %v990 = vmul.f32 %v936, %v416
        %v991 = vmul.f32 %v937, %v420
        %v992 = vmul.f32 %v938, %v424
        %v993 = vmul.f32 %v939, %v416
        %v994 = vmul.f32 %v940, %v420
        %v995 = vmul.f32 %v941, %v424
        %v996 = vadd.f32 %v984, %v990
        %v997 = vadd.f32 %v985, %v991
        %v998 = vadd.f32 %v986, %v992
        %v999 = vadd.f32 %v987, %v993
        %v1000 = vadd.f32 %v988, %v994
        %v1001 = vadd.f32 %v989, %v995
        %v1002 = vmul.f32 %v968, %v428
        %v1003 = vmul.f32 %v971, %v432
        %v1004 = vmul.f32 %v974, %v436
        %v1005 = vmul.f32 %v981, %v428
        %v1006 = vmul.f32 %v982, %v432
        %v1007 = vmul.f32 %v983, %v436
        %v1008 = vadd.f32 %v996, %v1002
        %v1009 = vadd.f32 %v997, %v1003
        %v1010 = vadd.f32 %v998, %v1004
        %v1011 = vadd.f32 %v999, %v1005
        %v1012 = vadd.f32 %v1000, %v1006
        %v1013 = vadd.f32 %v1001, %v1007
        %v1014 = vmul.f32 %v963, %v440
        %v1015 = vmul.f32 %v964, %v444
        %v1016 = vmul.f32 %v965, %v448
        %v1017 = vmul.f32 %v952, %v440
        %v1018 = vmul.f32 %v954, %v444
        %v1019 = vmul.f32 %v956, %v448
        %v1020 = vmul.f32 %v936, %v452
        %v1021 = vmul.f32 %v937, %v456
        %v1022 = vmul.f32 %v938, %v460
        %v1023 = vmul.f32 %v939, %v452
        %v1024 = vmul.f32 %v940, %v456
        %v1025 = vmul.f32 %v941, %v460
        %v1026 = vadd.f32 %v1014, %v1020
        %v1027 = vadd.f32 %v1015, %v1021
        %v1028 = vadd.f32 %v1016, %v1022
        %v1029 = vadd.f32 %v1017, %v1023
        %v1030 = vadd.f32 %v1018, %v1024
        %v1031 = vadd.f32 %v1019, %v1025
        %v1032 = vmul.f32 %v968, %v464
        %v1033 = vmul.f32 %v971, %v468
        %v1034 = vmul.f32 %v974, %v472
        %v1035 = vmul.f32 %v981, %v464
        %v1036 = vmul.f32 %v982, %v468
        %v1037 = vmul.f32 %v983, %v472
        %v1038 = vadd.f32 %v1026, %v1032
        %v1039 = vadd.f32 %v1027, %v1033
        %v1040 = vadd.f32 %v1028, %v1034
        %v1041 = vadd.f32 %v1029, %v1035
        %v1042 = vadd.f32 %v1030, %v1036
        %v1043 = vadd.f32 %v1031, %v1037
        %v1044 = vadd.f32 %v850, %v1038
        %v1045 = vadd.f32 %v851, %v1039
        %v1046 = vadd.f32 %v852, %v1040
        %v1047 = vadd.f32 %v853, %v1041
        %v1048 = vadd.f32 %v854, %v1042
        %v1049 = vadd.f32 %v855, %v1043
        %v1050 = vmul.f32 %v963, %v476
        %v1051 = vmul.f32 %v964, %v480
        %v1052 = vmul.f32 %v965, %v484
        %v1053 = vmul.f32 %v952, %v476
        %v1054 = vmul.f32 %v954, %v480
        %v1055 = vmul.f32 %v956, %v484
        %v1056 = vmul.f32 %v936, %v488
        %v1057 = vmul.f32 %v937, %v492
        %v1058 = vmul.f32 %v938, %v496
        %v1059 = vmul.f32 %v939, %v488
        %v1060 = vmul.f32 %v940, %v492
        %v1061 = vmul.f32 %v941, %v496
        %v1062 = vadd.f32 %v1050, %v1056
        %v1063 = vadd.f32 %v1051, %v1057
        %v1064 = vadd.f32 %v1052, %v1058
        %v1065 = vadd.f32 %v1053, %v1059
        %v1066 = vadd.f32 %v1054, %v1060
        %v1067 = vadd.f32 %v1055, %v1061
        %v1068 = vmul.f32 %v968, %v500
        %v1069 = vmul.f32 %v971, %v504
        %v1070 = vmul.f32 %v974, %v508
        %v1071 = vmul.f32 %v981, %v500
        %v1072 = vmul.f32 %v982, %v504
        %v1073 = vmul.f32 %v983, %v508
        %v1074 = vadd.f32 %v1062, %v1068
        %v1075 = vadd.f32 %v1063, %v1069
        %v1076 = vadd.f32 %v1064, %v1070
        %v1077 = vadd.f32 %v1065, %v1071
        %v1078 = vadd.f32 %v1066, %v1072
        %v1079 = vadd.f32 %v1067, %v1073
        %v1080 = vadd.f32 %v886, %v1074
        %v1081 = vadd.f32 %v887, %v1075
        %v1082 = vadd.f32 %v888, %v1076
        %v1083 = vadd.f32 %v889, %v1077
        %v1084 = vadd.f32 %v890, %v1078
        %v1085 = vadd.f32 %v891, %v1079
        %s1086 = scalar_lea.vmem %s391, 96 [#allocation4]
        %1087 = vst [vmem:[%s1086] sm:$0xff] %v1080
        %1088 = vst [vmem:[%s1086 + $0x8] sm:$0xff] %v1081
        %1089 = vst [vmem:[%s1086 + $0x10] sm:$0xff] %v1082
        %1090 = vst [vmem:[%s1086 + $0x18] sm:$0x3f] %v1083
        %1091 = vst [vmem:[%s1086 + $0x20] sm:$0x3f] %v1084
        %1092 = vst [vmem:[%s1086 + $0x28] sm:$0x3f] %v1085
        %s1093 = scalar_lea.vmem %s363, 192 [#allocation2]
        %v1094 = vld [vmem:[%s1093] sm:$0xff]
        %v1095 = vld [vmem:[%s1093 + $0x8] sm:$0xff]
        %v1096 = vld [vmem:[%s1093 + $0x10] sm:$0xff]
        %v1097 = vld [vmem:[%s1093 + $0x18] sm:$0x3f]
        %v1098 = vld [vmem:[%s1093 + $0x20] sm:$0x3f]
        %v1099 = vld [vmem:[%s1093 + $0x28] sm:$0x3f]
        %v1106 = vrot.slane %v1094, 7
        %v1107 = vrot.slane %v1095, 7
        %v1108 = vrot.slane %v1096, 7
        %v1109 = vrot.slane %v1097, 7
        %v1110 = vsel %vm521, %v1106, %v1109
        %v1111 = vrot.slane %v1098, 7
        %v1112 = vsel %vm521, %v1107, %v1111
        %v1113 = vrot.slane %v1099, 7
        %v1114 = vsel %vm521, %v1108, %v1113
        %v1121 = vsel %vm521, 0.0, %v1106
        %v1122 = vsel %vm521, 0.0, %v1107
        %v1123 = vsel %vm521, 0.0, %v1108
        %v1124 = vrot.slane %v1094, 1
        %v1125 = vrot.slane %v1097, 1
        %v1126 = vsel %vm540, %v1124, %v1125
        %v1127 = vrot.slane %v1095, 1
        %v1128 = vrot.slane %v1098, 1
        %v1129 = vsel %vm540, %v1127, %v1128
        %v1130 = vrot.slane %v1096, 1
        %v1131 = vrot.slane %v1099, 1
        %v1132 = vsel %vm540, %v1130, %v1131
        %v1139 = vsel %vm556, %v1125, 0.0
        %v1140 = vsel %vm556, %v1128, 0.0
        %v1141 = vsel %vm556, %v1131, 0.0
        %v1142 = vmul.f32 %v1121, %v404
        %v1143 = vmul.f32 %v1122, %v408
        %v1144 = vmul.f32 %v1123, %v412
        %v1145 = vmul.f32 %v1110, %v404
        %v1146 = vmul.f32 %v1112, %v408
        %v1147 = vmul.f32 %v1114, %v412
        %v1148 = vmul.f32 %v1094, %v416
        %v1149 = vmul.f32 %v1095, %v420
        %v1150 = vmul.f32 %v1096, %v424
        %v1151 = vmul.f32 %v1097, %v416
        %v1152 = vmul.f32 %v1098, %v420
        %v1153 = vmul.f32 %v1099, %v424
        %v1154 = vadd.f32 %v1142, %v1148
        %v1155 = vadd.f32 %v1143, %v1149
        %v1156 = vadd.f32 %v1144, %v1150
        %v1157 = vadd.f32 %v1145, %v1151
        %v1158 = vadd.f32 %v1146, %v1152
        %v1159 = vadd.f32 %v1147, %v1153
        %v1160 = vmul.f32 %v1126, %v428
        %v1161 = vmul.f32 %v1129, %v432
        %v1162 = vmul.f32 %v1132, %v436
        %v1163 = vmul.f32 %v1139, %v428
        %v1164 = vmul.f32 %v1140, %v432
        %v1165 = vmul.f32 %v1141, %v436
        %v1166 = vadd.f32 %v1154, %v1160
        %v1167 = vadd.f32 %v1155, %v1161
        %v1168 = vadd.f32 %v1156, %v1162
        %v1169 = vadd.f32 %v1157, %v1163
        %v1170 = vadd.f32 %v1158, %v1164
        %v1171 = vadd.f32 %v1159, %v1165
        %v1172 = vmul.f32 %v1121, %v440
        %v1173 = vmul.f32 %v1122, %v444
        %v1174 = vmul.f32 %v1123, %v448
        %v1175 = vmul.f32 %v1110, %v440
        %v1176 = vmul.f32 %v1112, %v444
        %v1177 = vmul.f32 %v1114, %v448
        %v1178 = vmul.f32 %v1094, %v452
        %v1179 = vmul.f32 %v1095, %v456
        %v1180 = vmul.f32 %v1096, %v460
        %v1181 = vmul.f32 %v1097, %v452
        %v1182 = vmul.f32 %v1098, %v456
        %v1183 = vmul.f32 %v1099, %v460
        %v1184 = vadd.f32 %v1172, %v1178
        %v1185 = vadd.f32 %v1173, %v1179
        %v1186 = vadd.f32 %v1174, %v1180
        %v1187 = vadd.f32 %v1175, %v1181
        %v1188 = vadd.f32 %v1176, %v1182
        %v1189 = vadd.f32 %v1177, %v1183
        %v1190 = vmul.f32 %v1126, %v464
        %v1191 = vmul.f32 %v1129, %v468
        %v1192 = vmul.f32 %v1132, %v472
        %v1193 = vmul.f32 %v1139, %v464
        %v1194 = vmul.f32 %v1140, %v468
        %v1195 = vmul.f32 %v1141, %v472
        %v1196 = vadd.f32 %v1184, %v1190
        %v1197 = vadd.f32 %v1185, %v1191
        %v1198 = vadd.f32 %v1186, %v1192
        %v1199 = vadd.f32 %v1187, %v1193
        %v1200 = vadd.f32 %v1188, %v1194
        %v1201 = vadd.f32 %v1189, %v1195
        %v1202 = vadd.f32 %v1008, %v1196
        %v1203 = vadd.f32 %v1009, %v1197
        %v1204 = vadd.f32 %v1010, %v1198
        %v1205 = vadd.f32 %v1011, %v1199
        %v1206 = vadd.f32 %v1012, %v1200
        %v1207 = vadd.f32 %v1013, %v1201
        %v1208 = vmul.f32 %v1121, %v476
        %v1209 = vmul.f32 %v1122, %v480
        %v1210 = vmul.f32 %v1123, %v484
        %v1211 = vmul.f32 %v1110, %v476
        %v1212 = vmul.f32 %v1112, %v480
        %v1213 = vmul.f32 %v1114, %v484
        %v1214 = vmul.f32 %v1094, %v488
        %v1215 = vmul.f32 %v1095, %v492
        %v1216 = vmul.f32 %v1096, %v496
        %v1217 = vmul.f32 %v1097, %v488
        %v1218 = vmul.f32 %v1098, %v492
        %v1219 = vmul.f32 %v1099, %v496
        %v1220 = vadd.f32 %v1208, %v1214
        %v1221 = vadd.f32 %v1209, %v1215
        %v1222 = vadd.f32 %v1210, %v1216
        %v1223 = vadd.f32 %v1211, %v1217
        %v1224 = vadd.f32 %v1212, %v1218
        %v1225 = vadd.f32 %v1213, %v1219
        %v1226 = vmul.f32 %v1126, %v500
        %v1227 = vmul.f32 %v1129, %v504
        %v1228 = vmul.f32 %v1132, %v508
        %v1229 = vmul.f32 %v1139, %v500
        %v1230 = vmul.f32 %v1140, %v504
        %v1231 = vmul.f32 %v1141, %v508
        %v1232 = vadd.f32 %v1220, %v1226
        %v1233 = vadd.f32 %v1221, %v1227
        %v1234 = vadd.f32 %v1222, %v1228
        %v1235 = vadd.f32 %v1223, %v1229
        %v1236 = vadd.f32 %v1224, %v1230
        %v1237 = vadd.f32 %v1225, %v1231
        %v1238 = vadd.f32 %v1044, %v1232
        %v1239 = vadd.f32 %v1045, %v1233
        %v1240 = vadd.f32 %v1046, %v1234
        %v1241 = vadd.f32 %v1047, %v1235
        %v1242 = vadd.f32 %v1048, %v1236
        %v1243 = vadd.f32 %v1049, %v1237
        %s1244 = scalar_lea.vmem %s391, 144 [#allocation4]
        %1245 = vst [vmem:[%s1244] sm:$0xff] %v1238
        %1246 = vst [vmem:[%s1244 + $0x8] sm:$0xff] %v1239
        %1247 = vst [vmem:[%s1244 + $0x10] sm:$0xff] %v1240
        %1248 = vst [vmem:[%s1244 + $0x18] sm:$0x3f] %v1241
        %1249 = vst [vmem:[%s1244 + $0x20] sm:$0x3f] %v1242
        %1250 = vst [vmem:[%s1244 + $0x28] sm:$0x3f] %v1243
        %s1251 = scalar_lea.vmem %s363, 240 [#allocation2]
        %v1252 = vld [vmem:[%s1251] sm:$0xff]
        %v1253 = vld [vmem:[%s1251 + $0x8] sm:$0xff]
        %v1254 = vld [vmem:[%s1251 + $0x10] sm:$0xff]
        %v1255 = vld [vmem:[%s1251 + $0x18] sm:$0x3f]
        %v1256 = vld [vmem:[%s1251 + $0x20] sm:$0x3f]
        %v1257 = vld [vmem:[%s1251 + $0x28] sm:$0x3f]
        %v1264 = vrot.slane %v1252, 7
        %v1265 = vrot.slane %v1253, 7
        %v1266 = vrot.slane %v1254, 7
        %v1267 = vrot.slane %v1255, 7
        %v1268 = vsel %vm521, %v1264, %v1267
        %v1269 = vrot.slane %v1256, 7
        %v1270 = vsel %vm521, %v1265, %v1269
        %v1271 = vrot.slane %v1257, 7
        %v1272 = vsel %vm521, %v1266, %v1271
        %v1279 = vsel %vm521, 0.0, %v1264
        %v1280 = vsel %vm521, 0.0, %v1265
        %v1281 = vsel %vm521, 0.0, %v1266
        %v1282 = vrot.slane %v1252, 1
        %v1283 = vrot.slane %v1255, 1
        %v1284 = vsel %vm540, %v1282, %v1283
        %v1285 = vrot.slane %v1253, 1
        %v1286 = vrot.slane %v1256, 1
        %v1287 = vsel %vm540, %v1285, %v1286
        %v1288 = vrot.slane %v1254, 1
        %v1289 = vrot.slane %v1257, 1
        %v1290 = vsel %vm540, %v1288, %v1289
        %v1297 = vsel %vm556, %v1283, 0.0
        %v1298 = vsel %vm556, %v1286, 0.0
        %v1299 = vsel %vm556, %v1289, 0.0
        %v1300 = vmul.f32 %v1279, %v404
        %v1301 = vmul.f32 %v1280, %v408
        %v1302 = vmul.f32 %v1281, %v412
        %v1303 = vmul.f32 %v1268, %v404
        %v1304 = vmul.f32 %v1270, %v408
        %v1305 = vmul.f32 %v1272, %v412
        %v1306 = vmul.f32 %v1252, %v416
        %v1307 = vmul.f32 %v1253, %v420
        %v1308 = vmul.f32 %v1254, %v424
        %v1309 = vmul.f32 %v1255, %v416
        %v1310 = vmul.f32 %v1256, %v420
        %v1311 = vmul.f32 %v1257, %v424
        %v1312 = vadd.f32 %v1300, %v1306
        %v1313 = vadd.f32 %v1301, %v1307
        %v1314 = vadd.f32 %v1302, %v1308
        %v1315 = vadd.f32 %v1303, %v1309
        %v1316 = vadd.f32 %v1304, %v1310
        %v1317 = vadd.f32 %v1305, %v1311
        %v1318 = vmul.f32 %v1284, %v428
        %v1319 = vmul.f32 %v1287, %v432
        %v1320 = vmul.f32 %v1290, %v436
        %v1321 = vmul.f32 %v1297, %v428
        %v1322 = vmul.f32 %v1298, %v432
        %v1323 = vmul.f32 %v1299, %v436
        %v1324 = vadd.f32 %v1312, %v1318
        %v1325 = vadd.f32 %v1313, %v1319
        %v1326 = vadd.f32 %v1314, %v1320
        %v1327 = vadd.f32 %v1315, %v1321
        %v1328 = vadd.f32 %v1316, %v1322
        %v1329 = vadd.f32 %v1317, %v1323
        %v1330 = vmul.f32 %v1279, %v440
        %v1331 = vmul.f32 %v1280, %v444
        %v1332 = vmul.f32 %v1281, %v448
        %v1333 = vmul.f32 %v1268, %v440
        %v1334 = vmul.f32 %v1270, %v444
        %v1335 = vmul.f32 %v1272, %v448
        %v1336 = vmul.f32 %v1252, %v452
        %v1337 = vmul.f32 %v1253, %v456
        %v1338 = vmul.f32 %v1254, %v460
        %v1339 = vmul.f32 %v1255, %v452
        %v1340 = vmul.f32 %v1256, %v456
        %v1341 = vmul.f32 %v1257, %v460
        %v1342 = vadd.f32 %v1330, %v1336
        %v1343 = vadd.f32 %v1331, %v1337
        %v1344 = vadd.f32 %v1332, %v1338
        %v1345 = vadd.f32 %v1333, %v1339
        %v1346 = vadd.f32 %v1334, %v1340
        %v1347 = vadd.f32 %v1335, %v1341
        %v1348 = vmul.f32 %v1284, %v464
        %v1349 = vmul.f32 %v1287, %v468
        %v1350 = vmul.f32 %v1290, %v472
        %v1351 = vmul.f32 %v1297, %v464
        %v1352 = vmul.f32 %v1298, %v468
        %v1353 = vmul.f32 %v1299, %v472
        %v1354 = vadd.f32 %v1342, %v1348
        %v1355 = vadd.f32 %v1343, %v1349
        %v1356 = vadd.f32 %v1344, %v1350
        %v1357 = vadd.f32 %v1345, %v1351
        %v1358 = vadd.f32 %v1346, %v1352
        %v1359 = vadd.f32 %v1347, %v1353
        %v1360 = vadd.f32 %v1166, %v1354
        %v1361 = vadd.f32 %v1167, %v1355
        %v1362 = vadd.f32 %v1168, %v1356
        %v1363 = vadd.f32 %v1169, %v1357
        %v1364 = vadd.f32 %v1170, %v1358
        %v1365 = vadd.f32 %v1171, %v1359
        %v1366 = vmul.f32 %v1279, %v476
        %v1367 = vmul.f32 %v1280, %v480
        %v1368 = vmul.f32 %v1281, %v484
        %v1369 = vmul.f32 %v1268, %v476
        %v1370 = vmul.f32 %v1270, %v480
        %v1371 = vmul.f32 %v1272, %v484
        %v1372 = vmul.f32 %v1252, %v488
        %v1373 = vmul.f32 %v1253, %v492
        %v1374 = vmul.f32 %v1254, %v496
        %v1375 = vmul.f32 %v1255, %v488
        %v1376 = vmul.f32 %v1256, %v492
        %v1377 = vmul.f32 %v1257, %v496
        %v1378 = vadd.f32 %v1366, %v1372
        %v1379 = vadd.f32 %v1367, %v1373
        %v1380 = vadd.f32 %v1368, %v1374
        %v1381 = vadd.f32 %v1369, %v1375
        %v1382 = vadd.f32 %v1370, %v1376
        %v1383 = vadd.f32 %v1371, %v1377
        %v1384 = vmul.f32 %v1284, %v500
        %v1385 = vmul.f32 %v1287, %v504
        %v1386 = vmul.f32 %v1290, %v508
        %v1387 = vmul.f32 %v1297, %v500
        %v1388 = vmul.f32 %v1298, %v504
        %v1389 = vmul.f32 %v1299, %v508
        %v1390 = vadd.f32 %v1378, %v1384
        %v1391 = vadd.f32 %v1379, %v1385
        %v1392 = vadd.f32 %v1380, %v1386
        %v1393 = vadd.f32 %v1381, %v1387
        %v1394 = vadd.f32 %v1382, %v1388
        %v1395 = vadd.f32 %v1383, %v1389
        %v1396 = vadd.f32 %v1202, %v1390
        %v1397 = vadd.f32 %v1203, %v1391
        %v1398 = vadd.f32 %v1204, %v1392
        %v1399 = vadd.f32 %v1205, %v1393
        %v1400 = vadd.f32 %v1206, %v1394
        %v1401 = vadd.f32 %v1207, %v1395
        %s1402 = scalar_lea.vmem %s391, 192 [#allocation4]
        %1403 = vst [vmem:[%s1402] sm:$0xff] %v1396
        %1404 = vst [vmem:[%s1402 + $0x8] sm:$0xff] %v1397
        %1405 = vst [vmem:[%s1402 + $0x10] sm:$0xff] %v1398
        %1406 = vst [vmem:[%s1402 + $0x18] sm:$0x3f] %v1399
        %1407 = vst [vmem:[%s1402 + $0x20] sm:$0x3f] %v1400
        %1408 = vst [vmem:[%s1402 + $0x28] sm:$0x3f] %v1401
        %s1409 = scalar_lea.vmem %s363, 288 [#allocation2]
        %v1410 = vld [vmem:[%s1409] sm:$0xff]
        %v1411 = vld [vmem:[%s1409 + $0x8] sm:$0xff]
        %v1412 = vld [vmem:[%s1409 + $0x10] sm:$0xff]
        %v1413 = vld [vmem:[%s1409 + $0x18] sm:$0x3f]
        %v1414 = vld [vmem:[%s1409 + $0x20] sm:$0x3f]
        %v1415 = vld [vmem:[%s1409 + $0x28] sm:$0x3f]
        %v1422 = vrot.slane %v1410, 7
        %v1423 = vrot.slane %v1411, 7
        %v1424 = vrot.slane %v1412, 7
        %v1425 = vrot.slane %v1413, 7
        %v1426 = vsel %vm521, %v1422, %v1425
        %v1427 = vrot.slane %v1414, 7
        %v1428 = vsel %vm521, %v1423, %v1427
        %v1429 = vrot.slane %v1415, 7
        %v1430 = vsel %vm521, %v1424, %v1429
        %v1437 = vsel %vm521, 0.0, %v1422
        %v1438 = vsel %vm521, 0.0, %v1423
        %v1439 = vsel %vm521, 0.0, %v1424
        %v1440 = vrot.slane %v1410, 1
        %v1441 = vrot.slane %v1413, 1
        %v1442 = vsel %vm540, %v1440, %v1441
        %v1443 = vrot.slane %v1411, 1
        %v1444 = vrot.slane %v1414, 1
        %v1445 = vsel %vm540, %v1443, %v1444
        %v1446 = vrot.slane %v1412, 1
        %v1447 = vrot.slane %v1415, 1
        %v1448 = vsel %vm540, %v1446, %v1447
        %v1455 = vsel %vm556, %v1441, 0.0
        %v1456 = vsel %vm556, %v1444, 0.0
        %v1457 = vsel %vm556, %v1447, 0.0
        %v1458 = vmul.f32 %v1437, %v404
        %v1459 = vmul.f32 %v1438, %v408
        %v1460 = vmul.f32 %v1439, %v412
        %v1461 = vmul.f32 %v1426, %v404
        %v1462 = vmul.f32 %v1428, %v408
        %v1463 = vmul.f32 %v1430, %v412
        %v1464 = vmul.f32 %v1410, %v416
        %v1465 = vmul.f32 %v1411, %v420
        %v1466 = vmul.f32 %v1412, %v424
        %v1467 = vmul.f32 %v1413, %v416
        %v1468 = vmul.f32 %v1414, %v420
        %v1469 = vmul.f32 %v1415, %v424
        %v1470 = vadd.f32 %v1458, %v1464
        %v1471 = vadd.f32 %v1459, %v1465
        %v1472 = vadd.f32 %v1460, %v1466
        %v1473 = vadd.f32 %v1461, %v1467
        %v1474 = vadd.f32 %v1462, %v1468
        %v1475 = vadd.f32 %v1463, %v1469
        %v1476 = vmul.f32 %v1442, %v428
        %v1477 = vmul.f32 %v1445, %v432
        %v1478 = vmul.f32 %v1448, %v436
        %v1479 = vmul.f32 %v1455, %v428
        %v1480 = vmul.f32 %v1456, %v432
        %v1481 = vmul.f32 %v1457, %v436
        %v1482 = vadd.f32 %v1470, %v1476
        %v1483 = vadd.f32 %v1471, %v1477
        %v1484 = vadd.f32 %v1472, %v1478
        %v1485 = vadd.f32 %v1473, %v1479
        %v1486 = vadd.f32 %v1474, %v1480
        %v1487 = vadd.f32 %v1475, %v1481
        %v1488 = vmul.f32 %v1437, %v440
        %v1489 = vmul.f32 %v1438, %v444
        %v1490 = vmul.f32 %v1439, %v448
        %v1491 = vmul.f32 %v1426, %v440
        %v1492 = vmul.f32 %v1428, %v444
        %v1493 = vmul.f32 %v1430, %v448
        %v1494 = vmul.f32 %v1410, %v452
        %v1495 = vmul.f32 %v1411, %v456
        %v1496 = vmul.f32 %v1412, %v460
        %v1497 = vmul.f32 %v1413, %v452
        %v1498 = vmul.f32 %v1414, %v456
        %v1499 = vmul.f32 %v1415, %v460
        %v1500 = vadd.f32 %v1488, %v1494
        %v1501 = vadd.f32 %v1489, %v1495
        %v1502 = vadd.f32 %v1490, %v1496
        %v1503 = vadd.f32 %v1491, %v1497
        %v1504 = vadd.f32 %v1492, %v1498
        %v1505 = vadd.f32 %v1493, %v1499
        %v1506 = vmul.f32 %v1442, %v464
        %v1507 = vmul.f32 %v1445, %v468
        %v1508 = vmul.f32 %v1448, %v472
        %v1509 = vmul.f32 %v1455, %v464
        %v1510 = vmul.f32 %v1456, %v468
        %v1511 = vmul.f32 %v1457, %v472
        %v1512 = vadd.f32 %v1500, %v1506
        %v1513 = vadd.f32 %v1501, %v1507
        %v1514 = vadd.f32 %v1502, %v1508
        %v1515 = vadd.f32 %v1503, %v1509
        %v1516 = vadd.f32 %v1504, %v1510
        %v1517 = vadd.f32 %v1505, %v1511
        %v1518 = vadd.f32 %v1324, %v1512
        %v1519 = vadd.f32 %v1325, %v1513
        %v1520 = vadd.f32 %v1326, %v1514
        %v1521 = vadd.f32 %v1327, %v1515
        %v1522 = vadd.f32 %v1328, %v1516
        %v1523 = vadd.f32 %v1329, %v1517
        %v1524 = vmul.f32 %v1437, %v476
        %v1525 = vmul.f32 %v1438, %v480
        %v1526 = vmul.f32 %v1439, %v484
        %v1527 = vmul.f32 %v1426, %v476
        %v1528 = vmul.f32 %v1428, %v480
        %v1529 = vmul.f32 %v1430, %v484
        %v1530 = vmul.f32 %v1410, %v488
        %v1531 = vmul.f32 %v1411, %v492
        %v1532 = vmul.f32 %v1412, %v496
        %v1533 = vmul.f32 %v1413, %v488
        %v1534 = vmul.f32 %v1414, %v492
        %v1535 = vmul.f32 %v1415, %v496
        %v1536 = vadd.f32 %v1524, %v1530
        %v1537 = vadd.f32 %v1525, %v1531
        %v1538 = vadd.f32 %v1526, %v1532
        %v1539 = vadd.f32 %v1527, %v1533
        %v1540 = vadd.f32 %v1528, %v1534
        %v1541 = vadd.f32 %v1529, %v1535
        %v1542 = vmul.f32 %v1442, %v500
        %v1543 = vmul.f32 %v1445, %v504
        %v1544 = vmul.f32 %v1448, %v508
        %v1545 = vmul.f32 %v1455, %v500
        %v1546 = vmul.f32 %v1456, %v504
        %v1547 = vmul.f32 %v1457, %v508
        %v1548 = vadd.f32 %v1536, %v1542
        %v1549 = vadd.f32 %v1537, %v1543
        %v1550 = vadd.f32 %v1538, %v1544
        %v1551 = vadd.f32 %v1539, %v1545
        %v1552 = vadd.f32 %v1540, %v1546
        %v1553 = vadd.f32 %v1541, %v1547
        %v1554 = vadd.f32 %v1360, %v1548
        %v1555 = vadd.f32 %v1361, %v1549
        %v1556 = vadd.f32 %v1362, %v1550
        %v1557 = vadd.f32 %v1363, %v1551
        %v1558 = vadd.f32 %v1364, %v1552
        %v1559 = vadd.f32 %v1365, %v1553
        %s1560 = scalar_lea.vmem %s391, 240 [#allocation4]
        %1561 = vst [vmem:[%s1560] sm:$0xff] %v1554
        %1562 = vst [vmem:[%s1560 + $0x8] sm:$0xff] %v1555
        %1563 = vst [vmem:[%s1560 + $0x10] sm:$0xff] %v1556
        %1564 = vst [vmem:[%s1560 + $0x18] sm:$0x3f] %v1557
        %1565 = vst [vmem:[%s1560 + $0x20] sm:$0x3f] %v1558
        %1566 = vst [vmem:[%s1560 + $0x28] sm:$0x3f] %v1559
        %s1567 = scalar_lea.vmem %s363, 336 [#allocation2]
        %v1568 = vld [vmem:[%s1567] sm:$0xff]
        %v1569 = vld [vmem:[%s1567 + $0x8] sm:$0xff]
        %v1570 = vld [vmem:[%s1567 + $0x10] sm:$0xff]
        %v1571 = vld [vmem:[%s1567 + $0x18] sm:$0x3f]
        %v1572 = vld [vmem:[%s1567 + $0x20] sm:$0x3f]
        %v1573 = vld [vmem:[%s1567 + $0x28] sm:$0x3f]
        %v1580 = vrot.slane %v1568, 7
        %v1581 = vrot.slane %v1569, 7
        %v1582 = vrot.slane %v1570, 7
        %v1583 = vrot.slane %v1571, 7
        %v1584 = vsel %vm521, %v1580, %v1583
        %v1585 = vrot.slane %v1572, 7
        %v1586 = vsel %vm521, %v1581, %v1585
        %v1587 = vrot.slane %v1573, 7
        %v1588 = vsel %vm521, %v1582, %v1587
        %v1595 = vsel %vm521, 0.0, %v1580
        %v1596 = vsel %vm521, 0.0, %v1581
        %v1597 = vsel %vm521, 0.0, %v1582
        %v1598 = vrot.slane %v1568, 1
        %v1599 = vrot.slane %v1571, 1
        %v1600 = vsel %vm540, %v1598, %v1599
        %v1601 = vrot.slane %v1569, 1
        %v1602 = vrot.slane %v1572, 1
        %v1603 = vsel %vm540, %v1601, %v1602
        %v1604 = vrot.slane %v1570, 1
        %v1605 = vrot.slane %v1573, 1
        %v1606 = vsel %vm540, %v1604, %v1605
        %v1613 = vsel %vm556, %v1599, 0.0
        %v1614 = vsel %vm556, %v1602, 0.0
        %v1615 = vsel %vm556, %v1605, 0.0
        %v1616 = vmul.f32 %v1595, %v404
        %v1617 = vmul.f32 %v1596, %v408
        %v1618 = vmul.f32 %v1597, %v412
        %v1619 = vmul.f32 %v1584, %v404
        %v1620 = vmul.f32 %v1586, %v408
        %v1621 = vmul.f32 %v1588, %v412
        %v1622 = vmul.f32 %v1568, %v416
        %v1623 = vmul.f32 %v1569, %v420
        %v1624 = vmul.f32 %v1570, %v424
        %v1625 = vmul.f32 %v1571, %v416
        %v1626 = vmul.f32 %v1572, %v420
        %v1627 = vmul.f32 %v1573, %v424
        %v1628 = vadd.f32 %v1616, %v1622
        %v1629 = vadd.f32 %v1617, %v1623
        %v1630 = vadd.f32 %v1618, %v1624
        %v1631 = vadd.f32 %v1619, %v1625
        %v1632 = vadd.f32 %v1620, %v1626
        %v1633 = vadd.f32 %v1621, %v1627
        %v1634 = vmul.f32 %v1600, %v428
        %v1635 = vmul.f32 %v1603, %v432
        %v1636 = vmul.f32 %v1606, %v436
        %v1637 = vmul.f32 %v1613, %v428
        %v1638 = vmul.f32 %v1614, %v432
        %v1639 = vmul.f32 %v1615, %v436
        %v1640 = vadd.f32 %v1628, %v1634
        %v1641 = vadd.f32 %v1629, %v1635
        %v1642 = vadd.f32 %v1630, %v1636
        %v1643 = vadd.f32 %v1631, %v1637
        %v1644 = vadd.f32 %v1632, %v1638
        %v1645 = vadd.f32 %v1633, %v1639
        %v1646 = vmul.f32 %v1595, %v440
        %v1647 = vmul.f32 %v1596, %v444
        %v1648 = vmul.f32 %v1597, %v448
        %v1649 = vmul.f32 %v1584, %v440
        %v1650 = vmul.f32 %v1586, %v444
        %v1651 = vmul.f32 %v1588, %v448
        %v1652 = vmul.f32 %v1568, %v452
        %v1653 = vmul.f32 %v1569, %v456
        %v1654 = vmul.f32 %v1570, %v460
        %v1655 = vmul.f32 %v1571, %v452
        %v1656 = vmul.f32 %v1572, %v456
        %v1657 = vmul.f32 %v1573, %v460
        %v1658 = vadd.f32 %v1646, %v1652
        %v1659 = vadd.f32 %v1647, %v1653
        %v1660 = vadd.f32 %v1648, %v1654
        %v1661 = vadd.f32 %v1649, %v1655
        %v1662 = vadd.f32 %v1650, %v1656
        %v1663 = vadd.f32 %v1651, %v1657
        %v1664 = vmul.f32 %v1600, %v464
        %v1665 = vmul.f32 %v1603, %v468
        %v1666 = vmul.f32 %v1606, %v472
        %v1667 = vmul.f32 %v1613, %v464
        %v1668 = vmul.f32 %v1614, %v468
        %v1669 = vmul.f32 %v1615, %v472
        %v1670 = vadd.f32 %v1658, %v1664
        %v1671 = vadd.f32 %v1659, %v1665
        %v1672 = vadd.f32 %v1660, %v1666
        %v1673 = vadd.f32 %v1661, %v1667
        %v1674 = vadd.f32 %v1662, %v1668
        %v1675 = vadd.f32 %v1663, %v1669
        %v1676 = vadd.f32 %v1482, %v1670
        %v1677 = vadd.f32 %v1483, %v1671
        %v1678 = vadd.f32 %v1484, %v1672
        %v1679 = vadd.f32 %v1485, %v1673
        %v1680 = vadd.f32 %v1486, %v1674
        %v1681 = vadd.f32 %v1487, %v1675
        %v1682 = vmul.f32 %v1595, %v476
        %v1683 = vmul.f32 %v1596, %v480
        %v1684 = vmul.f32 %v1597, %v484
        %v1685 = vmul.f32 %v1584, %v476
        %v1686 = vmul.f32 %v1586, %v480
        %v1687 = vmul.f32 %v1588, %v484
        %v1688 = vmul.f32 %v1568, %v488
        %v1689 = vmul.f32 %v1569, %v492
        %v1690 = vmul.f32 %v1570, %v496
        %v1691 = vmul.f32 %v1571, %v488
        %v1692 = vmul.f32 %v1572, %v492
        %v1693 = vmul.f32 %v1573, %v496
        %v1694 = vadd.f32 %v1682, %v1688
        %v1695 = vadd.f32 %v1683, %v1689
        %v1696 = vadd.f32 %v1684, %v1690
        %v1697 = vadd.f32 %v1685, %v1691
        %v1698 = vadd.f32 %v1686, %v1692
        %v1699 = vadd.f32 %v1687, %v1693
        %v1700 = vmul.f32 %v1600, %v500
        %v1701 = vmul.f32 %v1603, %v504
        %v1702 = vmul.f32 %v1606, %v508
        %v1703 = vmul.f32 %v1613, %v500
        %v1704 = vmul.f32 %v1614, %v504
        %v1705 = vmul.f32 %v1615, %v508
        %v1706 = vadd.f32 %v1694, %v1700
        %v1707 = vadd.f32 %v1695, %v1701
        %v1708 = vadd.f32 %v1696, %v1702
        %v1709 = vadd.f32 %v1697, %v1703
        %v1710 = vadd.f32 %v1698, %v1704
        %v1711 = vadd.f32 %v1699, %v1705
        %v1712 = vadd.f32 %v1518, %v1706
        %v1713 = vadd.f32 %v1519, %v1707
        %v1714 = vadd.f32 %v1520, %v1708
        %v1715 = vadd.f32 %v1521, %v1709
        %v1716 = vadd.f32 %v1522, %v1710
        %v1717 = vadd.f32 %v1523, %v1711
        %s1718 = scalar_lea.vmem %s391, 288 [#allocation4]
        %1719 = vst [vmem:[%s1718] sm:$0xff] %v1712
        %1720 = vst [vmem:[%s1718 + $0x8] sm:$0xff] %v1713
        %1721 = vst [vmem:[%s1718 + $0x10] sm:$0xff] %v1714
        %1722 = vst [vmem:[%s1718 + $0x18] sm:$0x3f] %v1715
        %1723 = vst [vmem:[%s1718 + $0x20] sm:$0x3f] %v1716
        %1724 = vst [vmem:[%s1718 + $0x28] sm:$0x3f] %v1717
        %s1725 = scalar_lea.vmem %s363, 384 [#allocation2]
        %v1726 = vld [vmem:[%s1725] sm:$0xff]
        %v1727 = vld [vmem:[%s1725 + $0x8] sm:$0xff]
        %v1728 = vld [vmem:[%s1725 + $0x10] sm:$0xff]
        %v1729 = vld [vmem:[%s1725 + $0x18] sm:$0x3f]
        %v1730 = vld [vmem:[%s1725 + $0x20] sm:$0x3f]
        %v1731 = vld [vmem:[%s1725 + $0x28] sm:$0x3f]
        %v1738 = vrot.slane %v1726, 7
        %v1739 = vrot.slane %v1727, 7
        %v1740 = vrot.slane %v1728, 7
        %v1741 = vrot.slane %v1729, 7
        %v1742 = vsel %vm521, %v1738, %v1741
        %v1743 = vrot.slane %v1730, 7
        %v1744 = vsel %vm521, %v1739, %v1743
        %v1745 = vrot.slane %v1731, 7
        %v1746 = vsel %vm521, %v1740, %v1745
        %v1753 = vsel %vm521, 0.0, %v1738
        %v1754 = vsel %vm521, 0.0, %v1739
        %v1755 = vsel %vm521, 0.0, %v1740
        %v1756 = vrot.slane %v1726, 1
        %v1757 = vrot.slane %v1729, 1
        %v1758 = vsel %vm540, %v1756, %v1757
        %v1759 = vrot.slane %v1727, 1
        %v1760 = vrot.slane %v1730, 1
        %v1761 = vsel %vm540, %v1759, %v1760
        %v1762 = vrot.slane %v1728, 1
        %v1763 = vrot.slane %v1731, 1
        %v1764 = vsel %vm540, %v1762, %v1763
        %v1771 = vsel %vm556, %v1757, 0.0
        %v1772 = vsel %vm556, %v1760, 0.0
        %v1773 = vsel %vm556, %v1763, 0.0
        %v1774 = vmul.f32 %v1753, %v404
        %v1775 = vmul.f32 %v1754, %v408
        %v1776 = vmul.f32 %v1755, %v412
        %v1777 = vmul.f32 %v1742, %v404
        %v1778 = vmul.f32 %v1744, %v408
        %v1779 = vmul.f32 %v1746, %v412
        %v1780 = vmul.f32 %v1726, %v416
        %v1781 = vmul.f32 %v1727, %v420
        %v1782 = vmul.f32 %v1728, %v424
        %v1783 = vmul.f32 %v1729, %v416
        %v1784 = vmul.f32 %v1730, %v420
        %v1785 = vmul.f32 %v1731, %v424
        %v1786 = vadd.f32 %v1774, %v1780
        %v1787 = vadd.f32 %v1775, %v1781
        %v1788 = vadd.f32 %v1776, %v1782
        %v1789 = vadd.f32 %v1777, %v1783
        %v1790 = vadd.f32 %v1778, %v1784
        %v1791 = vadd.f32 %v1779, %v1785
        %v1792 = vmul.f32 %v1758, %v428
        %v1793 = vmul.f32 %v1761, %v432
        %v1794 = vmul.f32 %v1764, %v436
        %v1795 = vmul.f32 %v1771, %v428
        %v1796 = vmul.f32 %v1772, %v432
        %v1797 = vmul.f32 %v1773, %v436
        %v1798 = vadd.f32 %v1786, %v1792
        %v1799 = vadd.f32 %v1787, %v1793
        %v1800 = vadd.f32 %v1788, %v1794
        %v1801 = vadd.f32 %v1789, %v1795
        %v1802 = vadd.f32 %v1790, %v1796
        %v1803 = vadd.f32 %v1791, %v1797
        %v1804 = vmul.f32 %v1753, %v440
        %v1805 = vmul.f32 %v1754, %v444
        %v1806 = vmul.f32 %v1755, %v448
        %v1807 = vmul.f32 %v1742, %v440
        %v1808 = vmul.f32 %v1744, %v444
        %v1809 = vmul.f32 %v1746, %v448
        %v1810 = vmul.f32 %v1726, %v452
        %v1811 = vmul.f32 %v1727, %v456
        %v1812 = vmul.f32 %v1728, %v460
        %v1813 = vmul.f32 %v1729, %v452
        %v1814 = vmul.f32 %v1730, %v456
        %v1815 = vmul.f32 %v1731, %v460
        %v1816 = vadd.f32 %v1804, %v1810
        %v1817 = vadd.f32 %v1805, %v1811
        %v1818 = vadd.f32 %v1806, %v1812
        %v1819 = vadd.f32 %v1807, %v1813
        %v1820 = vadd.f32 %v1808, %v1814
        %v1821 = vadd.f32 %v1809, %v1815
        %v1822 = vmul.f32 %v1758, %v464
        %v1823 = vmul.f32 %v1761, %v468
        %v1824 = vmul.f32 %v1764, %v472
        %v1825 = vmul.f32 %v1771, %v464
        %v1826 = vmul.f32 %v1772, %v468
        %v1827 = vmul.f32 %v1773, %v472
        %v1828 = vadd.f32 %v1816, %v1822
        %v1829 = vadd.f32 %v1817, %v1823
        %v1830 = vadd.f32 %v1818, %v1824
        %v1831 = vadd.f32 %v1819, %v1825
        %v1832 = vadd.f32 %v1820, %v1826
        %v1833 = vadd.f32 %v1821, %v1827
        %v1834 = vadd.f32 %v1640, %v1828
        %v1835 = vadd.f32 %v1641, %v1829
        %v1836 = vadd.f32 %v1642, %v1830
        %v1837 = vadd.f32 %v1643, %v1831
        %v1838 = vadd.f32 %v1644, %v1832
        %v1839 = vadd.f32 %v1645, %v1833
        %v1840 = vmul.f32 %v1753, %v476
        %v1841 = vmul.f32 %v1754, %v480
        %v1842 = vmul.f32 %v1755, %v484
        %v1843 = vmul.f32 %v1742, %v476
        %v1844 = vmul.f32 %v1744, %v480
        %v1845 = vmul.f32 %v1746, %v484
        %v1846 = vmul.f32 %v1726, %v488
        %v1847 = vmul.f32 %v1727, %v492
        %v1848 = vmul.f32 %v1728, %v496
        %v1849 = vmul.f32 %v1729, %v488
        %v1850 = vmul.f32 %v1730, %v492
        %v1851 = vmul.f32 %v1731, %v496
        %v1852 = vadd.f32 %v1840, %v1846
        %v1853 = vadd.f32 %v1841, %v1847
        %v1854 = vadd.f32 %v1842, %v1848
        %v1855 = vadd.f32 %v1843, %v1849
        %v1856 = vadd.f32 %v1844, %v1850
        %v1857 = vadd.f32 %v1845, %v1851
        %v1858 = vmul.f32 %v1758, %v500
        %v1859 = vmul.f32 %v1761, %v504
        %v1860 = vmul.f32 %v1764, %v508
        %v1861 = vmul.f32 %v1771, %v500
        %v1862 = vmul.f32 %v1772, %v504
        %v1863 = vmul.f32 %v1773, %v508
        %v1864 = vadd.f32 %v1852, %v1858
        %v1865 = vadd.f32 %v1853, %v1859
        %v1866 = vadd.f32 %v1854, %v1860
        %v1867 = vadd.f32 %v1855, %v1861
        %v1868 = vadd.f32 %v1856, %v1862
        %v1869 = vadd.f32 %v1857, %v1863
        %v1870 = vadd.f32 %v1676, %v1864
        %v1871 = vadd.f32 %v1677, %v1865
        %v1872 = vadd.f32 %v1678, %v1866
        %v1873 = vadd.f32 %v1679, %v1867
        %v1874 = vadd.f32 %v1680, %v1868
        %v1875 = vadd.f32 %v1681, %v1869
        %s1876 = scalar_lea.vmem %s391, 336 [#allocation4]
        %1877 = vst [vmem:[%s1876] sm:$0xff] %v1870
        %1878 = vst [vmem:[%s1876 + $0x8] sm:$0xff] %v1871
        %1879 = vst [vmem:[%s1876 + $0x10] sm:$0xff] %v1872
        %1880 = vst [vmem:[%s1876 + $0x18] sm:$0x3f] %v1873
        %1881 = vst [vmem:[%s1876 + $0x20] sm:$0x3f] %v1874
        %1882 = vst [vmem:[%s1876 + $0x28] sm:$0x3f] %v1875
        %s1883 = scalar_lea.vmem %s363, 432 [#allocation2]
        %v1884 = vld [vmem:[%s1883] sm:$0xff]
        %v1885 = vld [vmem:[%s1883 + $0x8] sm:$0xff]
        %v1886 = vld [vmem:[%s1883 + $0x10] sm:$0xff]
        %v1887 = vld [vmem:[%s1883 + $0x18] sm:$0x3f]
        %v1888 = vld [vmem:[%s1883 + $0x20] sm:$0x3f]
        %v1889 = vld [vmem:[%s1883 + $0x28] sm:$0x3f]
        %v1896 = vrot.slane %v1884, 7
        %v1897 = vrot.slane %v1885, 7
        %v1898 = vrot.slane %v1886, 7
        %v1899 = vrot.slane %v1887, 7
        %v1900 = vsel %vm521, %v1896, %v1899
        %v1901 = vrot.slane %v1888, 7
        %v1902 = vsel %vm521, %v1897, %v1901
        %v1903 = vrot.slane %v1889, 7
        %v1904 = vsel %vm521, %v1898, %v1903
        %v1911 = vsel %vm521, 0.0, %v1896
        %v1912 = vsel %vm521, 0.0, %v1897
        %v1913 = vsel %vm521, 0.0, %v1898
        %v1914 = vrot.slane %v1884, 1
        %v1915 = vrot.slane %v1887, 1
        %v1916 = vsel %vm540, %v1914, %v1915
        %v1917 = vrot.slane %v1885, 1
        %v1918 = vrot.slane %v1888, 1
        %v1919 = vsel %vm540, %v1917, %v1918
        %v1920 = vrot.slane %v1886, 1
        %v1921 = vrot.slane %v1889, 1
        %v1922 = vsel %vm540, %v1920, %v1921
        %v1929 = vsel %vm556, %v1915, 0.0
        %v1930 = vsel %vm556, %v1918, 0.0
        %v1931 = vsel %vm556, %v1921, 0.0
        %v1932 = vmul.f32 %v1911, %v404
        %v1933 = vmul.f32 %v1912, %v408
        %v1934 = vmul.f32 %v1913, %v412
        %v1935 = vmul.f32 %v1900, %v404
        %v1936 = vmul.f32 %v1902, %v408
        %v1937 = vmul.f32 %v1904, %v412
        %v1938 = vmul.f32 %v1884, %v416
        %v1939 = vmul.f32 %v1885, %v420
        %v1940 = vmul.f32 %v1886, %v424
        %v1941 = vmul.f32 %v1887, %v416
        %v1942 = vmul.f32 %v1888, %v420
        %v1943 = vmul.f32 %v1889, %v424
        %v1944 = vadd.f32 %v1932, %v1938
        %v1945 = vadd.f32 %v1933, %v1939
        %v1946 = vadd.f32 %v1934, %v1940
        %v1947 = vadd.f32 %v1935, %v1941
        %v1948 = vadd.f32 %v1936, %v1942
        %v1949 = vadd.f32 %v1937, %v1943
        %v1950 = vmul.f32 %v1916, %v428
        %v1951 = vmul.f32 %v1919, %v432
        %v1952 = vmul.f32 %v1922, %v436
        %v1953 = vmul.f32 %v1929, %v428
        %v1954 = vmul.f32 %v1930, %v432
        %v1955 = vmul.f32 %v1931, %v436
        %v1956 = vadd.f32 %v1944, %v1950
        %v1957 = vadd.f32 %v1945, %v1951
        %v1958 = vadd.f32 %v1946, %v1952
        %v1959 = vadd.f32 %v1947, %v1953
        %v1960 = vadd.f32 %v1948, %v1954
        %v1961 = vadd.f32 %v1949, %v1955
        %v1962 = vmul.f32 %v1911, %v440
        %v1963 = vmul.f32 %v1912, %v444
        %v1964 = vmul.f32 %v1913, %v448
        %v1965 = vmul.f32 %v1900, %v440
        %v1966 = vmul.f32 %v1902, %v444
        %v1967 = vmul.f32 %v1904, %v448
        %v1968 = vmul.f32 %v1884, %v452
        %v1969 = vmul.f32 %v1885, %v456
        %v1970 = vmul.f32 %v1886, %v460
        %v1971 = vmul.f32 %v1887, %v452
        %v1972 = vmul.f32 %v1888, %v456
        %v1973 = vmul.f32 %v1889, %v460
        %v1974 = vadd.f32 %v1962, %v1968
        %v1975 = vadd.f32 %v1963, %v1969
        %v1976 = vadd.f32 %v1964, %v1970
        %v1977 = vadd.f32 %v1965, %v1971
        %v1978 = vadd.f32 %v1966, %v1972
        %v1979 = vadd.f32 %v1967, %v1973
        %v1980 = vmul.f32 %v1916, %v464
        %v1981 = vmul.f32 %v1919, %v468
        %v1982 = vmul.f32 %v1922, %v472
        %v1983 = vmul.f32 %v1929, %v464
        %v1984 = vmul.f32 %v1930, %v468
        %v1985 = vmul.f32 %v1931, %v472
        %v1986 = vadd.f32 %v1974, %v1980
        %v1987 = vadd.f32 %v1975, %v1981
        %v1988 = vadd.f32 %v1976, %v1982
        %v1989 = vadd.f32 %v1977, %v1983
        %v1990 = vadd.f32 %v1978, %v1984
        %v1991 = vadd.f32 %v1979, %v1985
        %v1992 = vadd.f32 %v1798, %v1986
        %v1993 = vadd.f32 %v1799, %v1987
        %v1994 = vadd.f32 %v1800, %v1988
        %v1995 = vadd.f32 %v1801, %v1989
        %v1996 = vadd.f32 %v1802, %v1990
        %v1997 = vadd.f32 %v1803, %v1991
        %v1998 = vmul.f32 %v1911, %v476
        %v1999 = vmul.f32 %v1912, %v480
        %v2000 = vmul.f32 %v1913, %v484
        %v2001 = vmul.f32 %v1900, %v476
        %v2002 = vmul.f32 %v1902, %v480
        %v2003 = vmul.f32 %v1904, %v484
        %v2004 = vmul.f32 %v1884, %v488
        %v2005 = vmul.f32 %v1885, %v492
        %v2006 = vmul.f32 %v1886, %v496
        %v2007 = vmul.f32 %v1887, %v488
        %v2008 = vmul.f32 %v1888, %v492
        %v2009 = vmul.f32 %v1889, %v496
        %v2010 = vadd.f32 %v1998, %v2004
        %v2011 = vadd.f32 %v1999, %v2005
        %v2012 = vadd.f32 %v2000, %v2006
        %v2013 = vadd.f32 %v2001, %v2007
        %v2014 = vadd.f32 %v2002, %v2008
        %v2015 = vadd.f32 %v2003, %v2009
        %v2016 = vmul.f32 %v1916, %v500
        %v2017 = vmul.f32 %v1919, %v504
        %v2018 = vmul.f32 %v1922, %v508
        %v2019 = vmul.f32 %v1929, %v500
        %v2020 = vmul.f32 %v1930, %v504
        %v2021 = vmul.f32 %v1931, %v508
        %v2022 = vadd.f32 %v2010, %v2016
        %v2023 = vadd.f32 %v2011, %v2017
        %v2024 = vadd.f32 %v2012, %v2018
        %v2025 = vadd.f32 %v2013, %v2019
        %v2026 = vadd.f32 %v2014, %v2020
        %v2027 = vadd.f32 %v2015, %v2021
        %v2028 = vadd.f32 %v1834, %v2022
        %v2029 = vadd.f32 %v1835, %v2023
        %v2030 = vadd.f32 %v1836, %v2024
        %v2031 = vadd.f32 %v1837, %v2025
        %v2032 = vadd.f32 %v1838, %v2026
        %v2033 = vadd.f32 %v1839, %v2027
        %s2034 = scalar_lea.vmem %s391, 384 [#allocation4]
        %2035 = vst [vmem:[%s2034] sm:$0xff] %v2028
        %2036 = vst [vmem:[%s2034 + $0x8] sm:$0xff] %v2029
        %2037 = vst [vmem:[%s2034 + $0x10] sm:$0xff] %v2030
        %2038 = vst [vmem:[%s2034 + $0x18] sm:$0x3f] %v2031
        %2039 = vst [vmem:[%s2034 + $0x20] sm:$0x3f] %v2032
        %2040 = vst [vmem:[%s2034 + $0x28] sm:$0x3f] %v2033
        %s2041 = scalar_lea.vmem %s363, 480 [#allocation2]
        %v2042 = vld [vmem:[%s2041] sm:$0xff]
        %v2043 = vld [vmem:[%s2041 + $0x8] sm:$0xff]
        %v2044 = vld [vmem:[%s2041 + $0x10] sm:$0xff]
        %v2045 = vld [vmem:[%s2041 + $0x18] sm:$0x3f]
        %v2046 = vld [vmem:[%s2041 + $0x20] sm:$0x3f]
        %v2047 = vld [vmem:[%s2041 + $0x28] sm:$0x3f]
        %v2054 = vrot.slane %v2042, 7
        %v2055 = vrot.slane %v2043, 7
        %v2056 = vrot.slane %v2044, 7
        %v2057 = vrot.slane %v2045, 7
        %v2058 = vsel %vm521, %v2054, %v2057
        %v2059 = vrot.slane %v2046, 7
        %v2060 = vsel %vm521, %v2055, %v2059
        %v2061 = vrot.slane %v2047, 7
        %v2062 = vsel %vm521, %v2056, %v2061
        %v2069 = vsel %vm521, 0.0, %v2054
        %v2070 = vsel %vm521, 0.0, %v2055
        %v2071 = vsel %vm521, 0.0, %v2056
        %v2072 = vrot.slane %v2042, 1
        %v2073 = vrot.slane %v2045, 1
        %v2074 = vsel %vm540, %v2072, %v2073
        %v2075 = vrot.slane %v2043, 1
        %v2076 = vrot.slane %v2046, 1
        %v2077 = vsel %vm540, %v2075, %v2076
        %v2078 = vrot.slane %v2044, 1
        %v2079 = vrot.slane %v2047, 1
        %v2080 = vsel %vm540, %v2078, %v2079
        %v2087 = vsel %vm556, %v2073, 0.0
        %v2088 = vsel %vm556, %v2076, 0.0
        %v2089 = vsel %vm556, %v2079, 0.0
        %v2090 = vmul.f32 %v2069, %v404
        %v2091 = vmul.f32 %v2070, %v408
        %v2092 = vmul.f32 %v2071, %v412
        %v2093 = vmul.f32 %v2058, %v404
        %v2094 = vmul.f32 %v2060, %v408
        %v2095 = vmul.f32 %v2062, %v412
        %v2096 = vmul.f32 %v2042, %v416
        %v2097 = vmul.f32 %v2043, %v420
        %v2098 = vmul.f32 %v2044, %v424
        %v2099 = vmul.f32 %v2045, %v416
        %v2100 = vmul.f32 %v2046, %v420
        %v2101 = vmul.f32 %v2047, %v424
        %v2102 = vadd.f32 %v2090, %v2096
        %v2103 = vadd.f32 %v2091, %v2097
        %v2104 = vadd.f32 %v2092, %v2098
        %v2105 = vadd.f32 %v2093, %v2099
        %v2106 = vadd.f32 %v2094, %v2100
        %v2107 = vadd.f32 %v2095, %v2101
        %v2108 = vmul.f32 %v2074, %v428
        %v2109 = vmul.f32 %v2077, %v432
        %v2110 = vmul.f32 %v2080, %v436
        %v2111 = vmul.f32 %v2087, %v428
        %v2112 = vmul.f32 %v2088, %v432
        %v2113 = vmul.f32 %v2089, %v436
        %v2114 = vadd.f32 %v2102, %v2108
        %v2115 = vadd.f32 %v2103, %v2109
        %v2116 = vadd.f32 %v2104, %v2110
        %v2117 = vadd.f32 %v2105, %v2111
        %v2118 = vadd.f32 %v2106, %v2112
        %v2119 = vadd.f32 %v2107, %v2113
        %v2120 = vmul.f32 %v2069, %v440
        %v2121 = vmul.f32 %v2070, %v444
        %v2122 = vmul.f32 %v2071, %v448
        %v2123 = vmul.f32 %v2058, %v440
        %v2124 = vmul.f32 %v2060, %v444
        %v2125 = vmul.f32 %v2062, %v448
        %v2126 = vmul.f32 %v2042, %v452
        %v2127 = vmul.f32 %v2043, %v456
        %v2128 = vmul.f32 %v2044, %v460
        %v2129 = vmul.f32 %v2045, %v452
        %v2130 = vmul.f32 %v2046, %v456
        %v2131 = vmul.f32 %v2047, %v460
        %v2132 = vadd.f32 %v2120, %v2126
        %v2133 = vadd.f32 %v2121, %v2127
        %v2134 = vadd.f32 %v2122, %v2128
        %v2135 = vadd.f32 %v2123, %v2129
        %v2136 = vadd.f32 %v2124, %v2130
        %v2137 = vadd.f32 %v2125, %v2131
        %v2138 = vmul.f32 %v2074, %v464
        %v2139 = vmul.f32 %v2077, %v468
        %v2140 = vmul.f32 %v2080, %v472
        %v2141 = vmul.f32 %v2087, %v464
        %v2142 = vmul.f32 %v2088, %v468
        %v2143 = vmul.f32 %v2089, %v472
        %v2144 = vadd.f32 %v2132, %v2138
        %v2145 = vadd.f32 %v2133, %v2139
        %v2146 = vadd.f32 %v2134, %v2140
        %v2147 = vadd.f32 %v2135, %v2141
        %v2148 = vadd.f32 %v2136, %v2142
        %v2149 = vadd.f32 %v2137, %v2143
        %v2150 = vadd.f32 %v1956, %v2144
        %v2151 = vadd.f32 %v1957, %v2145
        %v2152 = vadd.f32 %v1958, %v2146
        %v2153 = vadd.f32 %v1959, %v2147
        %v2154 = vadd.f32 %v1960, %v2148
        %v2155 = vadd.f32 %v1961, %v2149
        %v2156 = vmul.f32 %v2069, %v476
        %v2157 = vmul.f32 %v2070, %v480
        %v2158 = vmul.f32 %v2071, %v484
        %v2159 = vmul.f32 %v2058, %v476
        %v2160 = vmul.f32 %v2060, %v480
        %v2161 = vmul.f32 %v2062, %v484
        %v2162 = vmul.f32 %v2042, %v488
        %v2163 = vmul.f32 %v2043, %v492
        %v2164 = vmul.f32 %v2044, %v496
        %v2165 = vmul.f32 %v2045, %v488
        %v2166 = vmul.f32 %v2046, %v492
        %v2167 = vmul.f32 %v2047, %v496
        %v2168 = vadd.f32 %v2156, %v2162
        %v2169 = vadd.f32 %v2157, %v2163
        %v2170 = vadd.f32 %v2158, %v2164
        %v2171 = vadd.f32 %v2159, %v2165
        %v2172 = vadd.f32 %v2160, %v2166
        %v2173 = vadd.f32 %v2161, %v2167
        %v2174 = vmul.f32 %v2074, %v500
        %v2175 = vmul.f32 %v2077, %v504
        %v2176 = vmul.f32 %v2080, %v508
        %v2177 = vmul.f32 %v2087, %v500
        %v2178 = vmul.f32 %v2088, %v504
        %v2179 = vmul.f32 %v2089, %v508
        %v2180 = vadd.f32 %v2168, %v2174
        %v2181 = vadd.f32 %v2169, %v2175
        %v2182 = vadd.f32 %v2170, %v2176
        %v2183 = vadd.f32 %v2171, %v2177
        %v2184 = vadd.f32 %v2172, %v2178
        %v2185 = vadd.f32 %v2173, %v2179
        %v2186 = vadd.f32 %v1992, %v2180
        %v2187 = vadd.f32 %v1993, %v2181
        %v2188 = vadd.f32 %v1994, %v2182
        %v2189 = vadd.f32 %v1995, %v2183
        %v2190 = vadd.f32 %v1996, %v2184
        %v2191 = vadd.f32 %v1997, %v2185
        %s2192 = scalar_lea.vmem %s391, 432 [#allocation4]
        %2193 = vst [vmem:[%s2192] sm:$0xff] %v2186
        %2194 = vst [vmem:[%s2192 + $0x8] sm:$0xff] %v2187
        %2195 = vst [vmem:[%s2192 + $0x10] sm:$0xff] %v2188
        %2196 = vst [vmem:[%s2192 + $0x18] sm:$0x3f] %v2189
        %2197 = vst [vmem:[%s2192 + $0x20] sm:$0x3f] %v2190
        %2198 = vst [vmem:[%s2192 + $0x28] sm:$0x3f] %v2191
        %s2199 = scalar_lea.vmem %s363, 528 [#allocation2]
        %v2200 = vld [vmem:[%s2199] sm:$0xff]
        %v2201 = vld [vmem:[%s2199 + $0x8] sm:$0xff]
        %v2202 = vld [vmem:[%s2199 + $0x10] sm:$0xff]
        %v2203 = vld [vmem:[%s2199 + $0x18] sm:$0x3f]
        %v2204 = vld [vmem:[%s2199 + $0x20] sm:$0x3f]
        %v2205 = vld [vmem:[%s2199 + $0x28] sm:$0x3f]
        %v2212 = vrot.slane %v2200, 7
        %v2213 = vrot.slane %v2201, 7
        %v2214 = vrot.slane %v2202, 7
        %v2215 = vrot.slane %v2203, 7
        %v2216 = vsel %vm521, %v2212, %v2215
        %v2217 = vrot.slane %v2204, 7
        %v2218 = vsel %vm521, %v2213, %v2217
        %v2219 = vrot.slane %v2205, 7
        %v2220 = vsel %vm521, %v2214, %v2219
        %v2227 = vsel %vm521, 0.0, %v2212
        %v2228 = vsel %vm521, 0.0, %v2213
        %v2229 = vsel %vm521, 0.0, %v2214
        %v2230 = vrot.slane %v2200, 1
        %v2231 = vrot.slane %v2203, 1
        %v2232 = vsel %vm540, %v2230, %v2231
        %v2233 = vrot.slane %v2201, 1
        %v2234 = vrot.slane %v2204, 1
        %v2235 = vsel %vm540, %v2233, %v2234
        %v2236 = vrot.slane %v2202, 1
        %v2237 = vrot.slane %v2205, 1
        %v2238 = vsel %vm540, %v2236, %v2237
        %v2245 = vsel %vm556, %v2231, 0.0
        %v2246 = vsel %vm556, %v2234, 0.0
        %v2247 = vsel %vm556, %v2237, 0.0
        %v2248 = vmul.f32 %v2227, %v404
        %v2249 = vmul.f32 %v2228, %v408
        %v2250 = vmul.f32 %v2229, %v412
        %v2251 = vmul.f32 %v2216, %v404
        %v2252 = vmul.f32 %v2218, %v408
        %v2253 = vmul.f32 %v2220, %v412
        %v2254 = vmul.f32 %v2200, %v416
        %v2255 = vmul.f32 %v2201, %v420
        %v2256 = vmul.f32 %v2202, %v424
        %v2257 = vmul.f32 %v2203, %v416
        %v2258 = vmul.f32 %v2204, %v420
        %v2259 = vmul.f32 %v2205, %v424
        %v2260 = vadd.f32 %v2248, %v2254
        %v2261 = vadd.f32 %v2249, %v2255
        %v2262 = vadd.f32 %v2250, %v2256
        %v2263 = vadd.f32 %v2251, %v2257
        %v2264 = vadd.f32 %v2252, %v2258
        %v2265 = vadd.f32 %v2253, %v2259
        %v2266 = vmul.f32 %v2232, %v428
        %v2267 = vmul.f32 %v2235, %v432
        %v2268 = vmul.f32 %v2238, %v436
        %v2269 = vmul.f32 %v2245, %v428
        %v2270 = vmul.f32 %v2246, %v432
        %v2271 = vmul.f32 %v2247, %v436
        %v2272 = vadd.f32 %v2260, %v2266
        %v2273 = vadd.f32 %v2261, %v2267
        %v2274 = vadd.f32 %v2262, %v2268
        %v2275 = vadd.f32 %v2263, %v2269
        %v2276 = vadd.f32 %v2264, %v2270
        %v2277 = vadd.f32 %v2265, %v2271
        %v2278 = vmul.f32 %v2227, %v440
        %v2279 = vmul.f32 %v2228, %v444
        %v2280 = vmul.f32 %v2229, %v448
        %v2281 = vmul.f32 %v2216, %v440
        %v2282 = vmul.f32 %v2218, %v444
        %v2283 = vmul.f32 %v2220, %v448
        %v2284 = vmul.f32 %v2200, %v452
        %v2285 = vmul.f32 %v2201, %v456
        %v2286 = vmul.f32 %v2202, %v460
        %v2287 = vmul.f32 %v2203, %v452
        %v2288 = vmul.f32 %v2204, %v456
        %v2289 = vmul.f32 %v2205, %v460
        %v2290 = vadd.f32 %v2278, %v2284
        %v2291 = vadd.f32 %v2279, %v2285
        %v2292 = vadd.f32 %v2280, %v2286
        %v2293 = vadd.f32 %v2281, %v2287
        %v2294 = vadd.f32 %v2282, %v2288
        %v2295 = vadd.f32 %v2283, %v2289
        %v2296 = vmul.f32 %v2232, %v464
        %v2297 = vmul.f32 %v2235, %v468
        %v2298 = vmul.f32 %v2238, %v472
        %v2299 = vmul.f32 %v2245, %v464
        %v2300 = vmul.f32 %v2246, %v468
        %v2301 = vmul.f32 %v2247, %v472
        %v2302 = vadd.f32 %v2290, %v2296
        %v2303 = vadd.f32 %v2291, %v2297
        %v2304 = vadd.f32 %v2292, %v2298
        %v2305 = vadd.f32 %v2293, %v2299
        %v2306 = vadd.f32 %v2294, %v2300
        %v2307 = vadd.f32 %v2295, %v2301
        %v2308 = vadd.f32 %v2114, %v2302
        %v2309 = vadd.f32 %v2115, %v2303
        %v2310 = vadd.f32 %v2116, %v2304
        %v2311 = vadd.f32 %v2117, %v2305
        %v2312 = vadd.f32 %v2118, %v2306
        %v2313 = vadd.f32 %v2119, %v2307
        %v2314 = vmul.f32 %v2227, %v476
        %v2315 = vmul.f32 %v2228, %v480
        %v2316 = vmul.f32 %v2229, %v484
        %v2317 = vmul.f32 %v2216, %v476
        %v2318 = vmul.f32 %v2218, %v480
        %v2319 = vmul.f32 %v2220, %v484
        %v2320 = vmul.f32 %v2200, %v488
        %v2321 = vmul.f32 %v2201, %v492
        %v2322 = vmul.f32 %v2202, %v496
        %v2323 = vmul.f32 %v2203, %v488
        %v2324 = vmul.f32 %v2204, %v492
        %v2325 = vmul.f32 %v2205, %v496
        %v2326 = vadd.f32 %v2314, %v2320
        %v2327 = vadd.f32 %v2315, %v2321
        %v2328 = vadd.f32 %v2316, %v2322
        %v2329 = vadd.f32 %v2317, %v2323
        %v2330 = vadd.f32 %v2318, %v2324
        %v2331 = vadd.f32 %v2319, %v2325
        %v2332 = vmul.f32 %v2232, %v500
        %v2333 = vmul.f32 %v2235, %v504
        %v2334 = vmul.f32 %v2238, %v508
        %v2335 = vmul.f32 %v2245, %v500
        %v2336 = vmul.f32 %v2246, %v504
        %v2337 = vmul.f32 %v2247, %v508
        %v2338 = vadd.f32 %v2326, %v2332
        %v2339 = vadd.f32 %v2327, %v2333
        %v2340 = vadd.f32 %v2328, %v2334
        %v2341 = vadd.f32 %v2329, %v2335
        %v2342 = vadd.f32 %v2330, %v2336
        %v2343 = vadd.f32 %v2331, %v2337
        %v2344 = vadd.f32 %v2150, %v2338
        %v2345 = vadd.f32 %v2151, %v2339
        %v2346 = vadd.f32 %v2152, %v2340
        %v2347 = vadd.f32 %v2153, %v2341
        %v2348 = vadd.f32 %v2154, %v2342
        %v2349 = vadd.f32 %v2155, %v2343
        %s2350 = scalar_lea.vmem %s391, 480 [#allocation4]
        %2351 = vst [vmem:[%s2350] sm:$0xff] %v2344
        %2352 = vst [vmem:[%s2350 + $0x8] sm:$0xff] %v2345
        %2353 = vst [vmem:[%s2350 + $0x10] sm:$0xff] %v2346
        %2354 = vst [vmem:[%s2350 + $0x18] sm:$0x3f] %v2347
        %2355 = vst [vmem:[%s2350 + $0x20] sm:$0x3f] %v2348
        %2356 = vst [vmem:[%s2350 + $0x28] sm:$0x3f] %v2349
        %s2357 = scalar_lea.vmem %s363, 576 [#allocation2]
        %v2358 = vld [vmem:[%s2357] sm:$0xff]
        %v2359 = vld [vmem:[%s2357 + $0x8] sm:$0xff]
        %v2360 = vld [vmem:[%s2357 + $0x10] sm:$0xff]
        %v2361 = vld [vmem:[%s2357 + $0x18] sm:$0x3f]
        %v2362 = vld [vmem:[%s2357 + $0x20] sm:$0x3f]
        %v2363 = vld [vmem:[%s2357 + $0x28] sm:$0x3f]
        %v2370 = vrot.slane %v2358, 7
        %v2371 = vrot.slane %v2359, 7
        %v2372 = vrot.slane %v2360, 7
        %v2373 = vrot.slane %v2361, 7
        %v2374 = vsel %vm521, %v2370, %v2373
        %v2375 = vrot.slane %v2362, 7
        %v2376 = vsel %vm521, %v2371, %v2375
        %v2377 = vrot.slane %v2363, 7
        %v2378 = vsel %vm521, %v2372, %v2377
        %v2385 = vsel %vm521, 0.0, %v2370
        %v2386 = vsel %vm521, 0.0, %v2371
        %v2387 = vsel %vm521, 0.0, %v2372
        %v2388 = vrot.slane %v2358, 1
        %v2389 = vrot.slane %v2361, 1
        %v2390 = vsel %vm540, %v2388, %v2389
        %v2391 = vrot.slane %v2359, 1
        %v2392 = vrot.slane %v2362, 1
        %v2393 = vsel %vm540, %v2391, %v2392
        %v2394 = vrot.slane %v2360, 1
        %v2395 = vrot.slane %v2363, 1
        %v2396 = vsel %vm540, %v2394, %v2395
        %v2403 = vsel %vm556, %v2389, 0.0
        %v2404 = vsel %vm556, %v2392, 0.0
        %v2405 = vsel %vm556, %v2395, 0.0
        %v2406 = vmul.f32 %v2385, %v404
        %v2407 = vmul.f32 %v2386, %v408
        %v2408 = vmul.f32 %v2387, %v412
        %v2409 = vmul.f32 %v2374, %v404
        %v2410 = vmul.f32 %v2376, %v408
        %v2411 = vmul.f32 %v2378, %v412
        %v2412 = vmul.f32 %v2358, %v416
        %v2413 = vmul.f32 %v2359, %v420
        %v2414 = vmul.f32 %v2360, %v424
        %v2415 = vmul.f32 %v2361, %v416
        %v2416 = vmul.f32 %v2362, %v420
        %v2417 = vmul.f32 %v2363, %v424
        %v2418 = vadd.f32 %v2406, %v2412
        %v2419 = vadd.f32 %v2407, %v2413
        %v2420 = vadd.f32 %v2408, %v2414
        %v2421 = vadd.f32 %v2409, %v2415
        %v2422 = vadd.f32 %v2410, %v2416
        %v2423 = vadd.f32 %v2411, %v2417
        %v2424 = vmul.f32 %v2390, %v428
        %v2425 = vmul.f32 %v2393, %v432
        %v2426 = vmul.f32 %v2396, %v436
        %v2427 = vmul.f32 %v2403, %v428
        %v2428 = vmul.f32 %v2404, %v432
        %v2429 = vmul.f32 %v2405, %v436
        %v2430 = vadd.f32 %v2418, %v2424
        %v2431 = vadd.f32 %v2419, %v2425
        %v2432 = vadd.f32 %v2420, %v2426
        %v2433 = vadd.f32 %v2421, %v2427
        %v2434 = vadd.f32 %v2422, %v2428
        %v2435 = vadd.f32 %v2423, %v2429
        %v2436 = vmul.f32 %v2385, %v440
        %v2437 = vmul.f32 %v2386, %v444
        %v2438 = vmul.f32 %v2387, %v448
        %v2439 = vmul.f32 %v2374, %v440
        %v2440 = vmul.f32 %v2376, %v444
        %v2441 = vmul.f32 %v2378, %v448
        %v2442 = vmul.f32 %v2358, %v452
        %v2443 = vmul.f32 %v2359, %v456
        %v2444 = vmul.f32 %v2360, %v460
        %v2445 = vmul.f32 %v2361, %v452
        %v2446 = vmul.f32 %v2362, %v456
        %v2447 = vmul.f32 %v2363, %v460
        %v2448 = vadd.f32 %v2436, %v2442
        %v2449 = vadd.f32 %v2437, %v2443
        %v2450 = vadd.f32 %v2438, %v2444
        %v2451 = vadd.f32 %v2439, %v2445
        %v2452 = vadd.f32 %v2440, %v2446
        %v2453 = vadd.f32 %v2441, %v2447
        %v2454 = vmul.f32 %v2390, %v464
        %v2455 = vmul.f32 %v2393, %v468
        %v2456 = vmul.f32 %v2396, %v472
        %v2457 = vmul.f32 %v2403, %v464
        %v2458 = vmul.f32 %v2404, %v468
        %v2459 = vmul.f32 %v2405, %v472
        %v2460 = vadd.f32 %v2448, %v2454
        %v2461 = vadd.f32 %v2449, %v2455
        %v2462 = vadd.f32 %v2450, %v2456
        %v2463 = vadd.f32 %v2451, %v2457
        %v2464 = vadd.f32 %v2452, %v2458
        %v2465 = vadd.f32 %v2453, %v2459
        %v2466 = vadd.f32 %v2272, %v2460
        %v2467 = vadd.f32 %v2273, %v2461
        %v2468 = vadd.f32 %v2274, %v2462
        %v2469 = vadd.f32 %v2275, %v2463
        %v2470 = vadd.f32 %v2276, %v2464
        %v2471 = vadd.f32 %v2277, %v2465
        %v2472 = vmul.f32 %v2385, %v476
        %v2473 = vmul.f32 %v2386, %v480
        %v2474 = vmul.f32 %v2387, %v484
        %v2475 = vmul.f32 %v2374, %v476
        %v2476 = vmul.f32 %v2376, %v480
        %v2477 = vmul.f32 %v2378, %v484
        %v2478 = vmul.f32 %v2358, %v488
        %v2479 = vmul.f32 %v2359, %v492
        %v2480 = vmul.f32 %v2360, %v496
        %v2481 = vmul.f32 %v2361, %v488
        %v2482 = vmul.f32 %v2362, %v492
        %v2483 = vmul.f32 %v2363, %v496
        %v2484 = vadd.f32 %v2472, %v2478
        %v2485 = vadd.f32 %v2473, %v2479
        %v2486 = vadd.f32 %v2474, %v2480
        %v2487 = vadd.f32 %v2475, %v2481
        %v2488 = vadd.f32 %v2476, %v2482
        %v2489 = vadd.f32 %v2477, %v2483
        %v2490 = vmul.f32 %v2390, %v500
        %v2491 = vmul.f32 %v2393, %v504
        %v2492 = vmul.f32 %v2396, %v508
        %v2493 = vmul.f32 %v2403, %v500
        %v2494 = vmul.f32 %v2404, %v504
        %v2495 = vmul.f32 %v2405, %v508
        %v2496 = vadd.f32 %v2484, %v2490
        %v2497 = vadd.f32 %v2485, %v2491
        %v2498 = vadd.f32 %v2486, %v2492
        %v2499 = vadd.f32 %v2487, %v2493
        %v2500 = vadd.f32 %v2488, %v2494
        %v2501 = vadd.f32 %v2489, %v2495
        %v2502 = vadd.f32 %v2308, %v2496
        %v2503 = vadd.f32 %v2309, %v2497
        %v2504 = vadd.f32 %v2310, %v2498
        %v2505 = vadd.f32 %v2311, %v2499
        %v2506 = vadd.f32 %v2312, %v2500
        %v2507 = vadd.f32 %v2313, %v2501
        %s2508 = scalar_lea.vmem %s391, 528 [#allocation4]
        %2509 = vst [vmem:[%s2508] sm:$0xff] %v2502
        %2510 = vst [vmem:[%s2508 + $0x8] sm:$0xff] %v2503
        %2511 = vst [vmem:[%s2508 + $0x10] sm:$0xff] %v2504
        %2512 = vst [vmem:[%s2508 + $0x18] sm:$0x3f] %v2505
        %2513 = vst [vmem:[%s2508 + $0x20] sm:$0x3f] %v2506
        %2514 = vst [vmem:[%s2508 + $0x28] sm:$0x3f] %v2507
        %s2515 = scalar_lea.vmem %s363, 624 [#allocation2]
        %v2516 = vld [vmem:[%s2515] sm:$0xff]
        %v2517 = vld [vmem:[%s2515 + $0x8] sm:$0xff]
        %v2518 = vld [vmem:[%s2515 + $0x10] sm:$0xff]
        %v2519 = vld [vmem:[%s2515 + $0x18] sm:$0x3f]
        %v2520 = vld [vmem:[%s2515 + $0x20] sm:$0x3f]
        %v2521 = vld [vmem:[%s2515 + $0x28] sm:$0x3f]
        %v2528 = vrot.slane %v2516, 7
        %v2529 = vrot.slane %v2517, 7
        %v2530 = vrot.slane %v2518, 7
        %v2531 = vrot.slane %v2519, 7
        %v2532 = vsel %vm521, %v2528, %v2531
        %v2533 = vrot.slane %v2520, 7
        %v2534 = vsel %vm521, %v2529, %v2533
        %v2535 = vrot.slane %v2521, 7
        %v2536 = vsel %vm521, %v2530, %v2535
        %v2543 = vsel %vm521, 0.0, %v2528
        %v2544 = vsel %vm521, 0.0, %v2529
        %v2545 = vsel %vm521, 0.0, %v2530
        %v2546 = vrot.slane %v2516, 1
        %v2547 = vrot.slane %v2519, 1
        %v2548 = vsel %vm540, %v2546, %v2547
        %v2549 = vrot.slane %v2517, 1
        %v2550 = vrot.slane %v2520, 1
        %v2551 = vsel %vm540, %v2549, %v2550
        %v2552 = vrot.slane %v2518, 1
        %v2553 = vrot.slane %v2521, 1
        %v2554 = vsel %vm540, %v2552, %v2553
        %v2561 = vsel %vm556, %v2547, 0.0
        %v2562 = vsel %vm556, %v2550, 0.0
        %v2563 = vsel %vm556, %v2553, 0.0
        %v2564 = vmul.f32 %v2543, %v440
        %v2565 = vmul.f32 %v2544, %v444
        %v2566 = vmul.f32 %v2545, %v448
        %v2567 = vmul.f32 %v2532, %v440
        %v2568 = vmul.f32 %v2534, %v444
        %v2569 = vmul.f32 %v2536, %v448
        %v2570 = vmul.f32 %v2516, %v452
        %v2571 = vmul.f32 %v2517, %v456
        %v2572 = vmul.f32 %v2518, %v460
        %v2573 = vmul.f32 %v2519, %v452
        %v2574 = vmul.f32 %v2520, %v456
        %v2575 = vmul.f32 %v2521, %v460
        %v2576 = vadd.f32 %v2564, %v2570
        %v2577 = vadd.f32 %v2565, %v2571
        %v2578 = vadd.f32 %v2566, %v2572
        %v2579 = vadd.f32 %v2567, %v2573
        %v2580 = vadd.f32 %v2568, %v2574
        %v2581 = vadd.f32 %v2569, %v2575
        %v2582 = vmul.f32 %v2548, %v464
        %v2583 = vmul.f32 %v2551, %v468
        %v2584 = vmul.f32 %v2554, %v472
        %v2585 = vmul.f32 %v2561, %v464
        %v2586 = vmul.f32 %v2562, %v468
        %v2587 = vmul.f32 %v2563, %v472
        %v2588 = vadd.f32 %v2576, %v2582
        %v2589 = vadd.f32 %v2577, %v2583
        %v2590 = vadd.f32 %v2578, %v2584
        %v2591 = vadd.f32 %v2579, %v2585
        %v2592 = vadd.f32 %v2580, %v2586
        %v2593 = vadd.f32 %v2581, %v2587
        %v2594 = vadd.f32 %v2430, %v2588
        %v2595 = vadd.f32 %v2431, %v2589
        %v2596 = vadd.f32 %v2432, %v2590
        %v2597 = vadd.f32 %v2433, %v2591
        %v2598 = vadd.f32 %v2434, %v2592
        %v2599 = vadd.f32 %v2435, %v2593
        %v2600 = vmul.f32 %v2543, %v476
        %v2601 = vmul.f32 %v2544, %v480
        %v2602 = vmul.f32 %v2545, %v484
        %v2603 = vmul.f32 %v2532, %v476
        %v2604 = vmul.f32 %v2534, %v480
        %v2605 = vmul.f32 %v2536, %v484
        %v2606 = vmul.f32 %v2516, %v488
        %v2607 = vmul.f32 %v2517, %v492
        %v2608 = vmul.f32 %v2518, %v496
        %v2609 = vmul.f32 %v2519, %v488
        %v2610 = vmul.f32 %v2520, %v492
        %v2611 = vmul.f32 %v2521, %v496
        %v2612 = vadd.f32 %v2600, %v2606
        %v2613 = vadd.f32 %v2601, %v2607
        %v2614 = vadd.f32 %v2602, %v2608
        %v2615 = vadd.f32 %v2603, %v2609
        %v2616 = vadd.f32 %v2604, %v2610
        %v2617 = vadd.f32 %v2605, %v2611
        %v2618 = vmul.f32 %v2548, %v500
        %v2619 = vmul.f32 %v2551, %v504
        %v2620 = vmul.f32 %v2554, %v508
        %v2621 = vmul.f32 %v2561, %v500
        %v2622 = vmul.f32 %v2562, %v504
        %v2623 = vmul.f32 %v2563, %v508
        %v2624 = vadd.f32 %v2612, %v2618
        %v2625 = vadd.f32 %v2613, %v2619
        %v2626 = vadd.f32 %v2614, %v2620
        %v2627 = vadd.f32 %v2615, %v2621
        %v2628 = vadd.f32 %v2616, %v2622
        %v2629 = vadd.f32 %v2617, %v2623
        %v2630 = vadd.f32 %v2466, %v2624
        %v2631 = vadd.f32 %v2467, %v2625
        %v2632 = vadd.f32 %v2468, %v2626
        %v2633 = vadd.f32 %v2469, %v2627
        %v2634 = vadd.f32 %v2470, %v2628
        %v2635 = vadd.f32 %v2471, %v2629
        %s2636 = scalar_lea.vmem %s391, 576 [#allocation4]
        %2637 = vst [vmem:[%s2636] sm:$0xff] %v2630
        %2638 = vst [vmem:[%s2636 + $0x8] sm:$0xff] %v2631
        %2639 = vst [vmem:[%s2636 + $0x10] sm:$0xff] %v2632
        %2640 = vst [vmem:[%s2636 + $0x18] sm:$0x3f] %v2633
        %2641 = vst [vmem:[%s2636 + $0x20] sm:$0x3f] %v2634
        %2642 = vst [vmem:[%s2636 + $0x28] sm:$0x3f] %v2635
        %s2643 = scalar_lea.vmem %s391, 624 [#allocation4]
        %2644 = vst [vmem:[%s2643] sm:$0xff] %v2594
        %2645 = vst [vmem:[%s2643 + $0x8] sm:$0xff] %v2595
        %2646 = vst [vmem:[%s2643 + $0x10] sm:$0xff] %v2596
        %2647 = vst [vmem:[%s2643 + $0x18] sm:$0x3f] %v2597
        %2648 = vst [vmem:[%s2643 + $0x20] sm:$0x3f] %v2598
        %2649 = vst [vmem:[%s2643 + $0x28] sm:$0x3f] %v2599
        %s2650 = sand.u32 %s89, 1
        %s2651 = sand.u32 %s89, 1
        %s2652 = smul.addr %s2651, 672
        %s2653 = scalar_lea.vmem [#allocation4], %s2652
        // Predicated region
        $region75: #{tpu_custom_call.1} parent=65 // pred_check
          %p2654 = pneg %p99
        $region76: #{tpu_custom_call.1} parent=65 // pred_check_branch
          %2656 = sbr.rel (%p2654) target = $region78
        $region77: #{tpu_custom_call.1} parent=65 // pred_region
          %s2657 = smul.u32 3, %s17
          %s2658 = smul.addr %s18, 168
          %s2659 = sadd.s32 %s2657, %s2658
          %s2660 = smul.addr %s2659, 8
          %s2661 = scalar_lea.vmem %s2, %s2660
          // Predicated region
          $region79: #{tpu_custom_call.1} parent=77 // pred_check
            _
          $region80: #{tpu_custom_call.1} parent=77 // pred_check_branch
            %2663 = sbr.rel (0) target = $region82
          $region81: #{tpu_custom_call.1} parent=77 // pred_region
            // Predicated region
            $region83: #{tpu_custom_call.1} parent=81 // pred_check
              _
            $region84: #{tpu_custom_call.1} parent=81 // pred_check_branch
              %2665 = sbr.rel (0) target = $region86
            $region85: #{tpu_custom_call.1} parent=81 // pred_region
              loop: start=0, step=1, limit=1
              $region87: #{tpu_custom_call.1} parent=85 // loop_pre_header
                _
              $region88: #{tpu_custom_call.1} parent=85 // loop_header
                %s2667 = sphi 0, %s2671
                %p2668 = scmp.ge.s32.totalorder %s2667, 1
                %s2672 = sphi %s2653, %s2653
                %s2673 = sphi %s2661, %s2661
              $region89: #{tpu_custom_call.1} parent=85 // loop_header_branch
                %2670 = sbr.rel (%p2668) target = $region93
              $region90: #{tpu_custom_call.1} parent=85 // loop_body
                %v2674 = vld [vmem:[%s2672] sm:$0xff]
                %2675 = vst [vmem:[%s2673] sm:$0xff] %v2674
                %v2676 = vld [vmem:[%s2672 + $0x8] sm:$0xff]
                %2677 = vst [vmem:[%s2673 + $0x8] sm:$0xff] %v2676
                %v2678 = vld [vmem:[%s2672 + $0x10] sm:$0xff]
                %2679 = vst [vmem:[%s2673 + $0x10] sm:$0xff] %v2678
                %v2680 = vld [vmem:[%s2672 + $0x18] sm:$0xff]
                %2681 = vst [vmem:[%s2673 + $0x30] sm:$0xff] %v2680
                %v2682 = vld [vmem:[%s2672 + $0x20] sm:$0xff]
                %2683 = vst [vmem:[%s2673 + $0x38] sm:$0xff] %v2682
                %v2684 = vld [vmem:[%s2672 + $0x28] sm:$0xff]
                %2685 = vst [vmem:[%s2673 + $0x40] sm:$0xff] %v2684
                %v2686 = vld [vmem:[%s2672 + $0x30] sm:$0xff]
                %2687 = vst [vmem:[%s2673 + $0x60] sm:$0xff] %v2686
                %v2688 = vld [vmem:[%s2672 + $0x38] sm:$0xff]
                %2689 = vst [vmem:[%s2673 + $0x68] sm:$0xff] %v2688
                %v2690 = vld [vmem:[%s2672 + $0x40] sm:$0xff]
                %2691 = vst [vmem:[%s2673 + $0x70] sm:$0xff] %v2690
                %v2692 = vld [vmem:[%s2672 + $0x48] sm:$0xff]
                %2693 = vst [vmem:[%s2673 + $0x90] sm:$0xff] %v2692
                %v2694 = vld [vmem:[%s2672 + $0x50] sm:$0xff]
                %2695 = vst [vmem:[%s2673 + $0x98] sm:$0xff] %v2694
                %v2696 = vld [vmem:[%s2672 + $0x58] sm:$0xff]
                %2697 = vst [vmem:[%s2673 + $0xa0] sm:$0xff] %v2696
                %v2698 = vld [vmem:[%s2672 + $0x60] sm:$0xff]
                %2699 = vst [vmem:[%s2673 + $0xc0] sm:$0xff] %v2698
                %v2700 = vld [vmem:[%s2672 + $0x68] sm:$0xff]
                %2701 = vst [vmem:[%s2673 + $0xc8] sm:$0xff] %v2700
                %v2702 = vld [vmem:[%s2672 + $0x70] sm:$0xff]
                %2703 = vst [vmem:[%s2673 + $0xd0] sm:$0xff] %v2702
                %v2704 = vld [vmem:[%s2672 + $0x78] sm:$0xff]
                %2705 = vst [vmem:[%s2673 + $0xf0] sm:$0xff] %v2704
                %v2706 = vld [vmem:[%s2672 + $0x80] sm:$0xff]
                %2707 = vst [vmem:[%s2673 + $0xf8] sm:$0xff] %v2706
                %v2708 = vld [vmem:[%s2672 + $0x88] sm:$0xff]
                %2709 = vst [vmem:[%s2673 + $0x100] sm:$0xff] %v2708
                %v2710 = vld [vmem:[%s2672 + $0x90] sm:$0xff]
                %2711 = vst [vmem:[%s2673 + $0x120] sm:$0xff] %v2710
                %v2712 = vld [vmem:[%s2672 + $0x98] sm:$0xff]
                %2713 = vst [vmem:[%s2673 + $0x128] sm:$0xff] %v2712
                %v2714 = vld [vmem:[%s2672 + $0xa0] sm:$0xff]
                %2715 = vst [vmem:[%s2673 + $0x130] sm:$0xff] %v2714
                %v2716 = vld [vmem:[%s2672 + $0xa8] sm:$0xff]
                %2717 = vst [vmem:[%s2673 + $0x150] sm:$0xff] %v2716
                %v2718 = vld [vmem:[%s2672 + $0xb0] sm:$0xff]
                %2719 = vst [vmem:[%s2673 + $0x158] sm:$0xff] %v2718
                %v2720 = vld [vmem:[%s2672 + $0xb8] sm:$0xff]
                %2721 = vst [vmem:[%s2673 + $0x160] sm:$0xff] %v2720
                %v2722 = vld [vmem:[%s2672 + $0xc0] sm:$0xff]
                %2723 = vst [vmem:[%s2673 + $0x180] sm:$0xff] %v2722
                %v2724 = vld [vmem:[%s2672 + $0xc8] sm:$0xff]
                %2725 = vst [vmem:[%s2673 + $0x188] sm:$0xff] %v2724
                %v2726 = vld [vmem:[%s2672 + $0xd0] sm:$0xff]
                %2727 = vst [vmem:[%s2673 + $0x190] sm:$0xff] %v2726
                %v2728 = vld [vmem:[%s2672 + $0xd8] sm:$0xff]
                %2729 = vst [vmem:[%s2673 + $0x1b0] sm:$0xff] %v2728
                %v2730 = vld [vmem:[%s2672 + $0xe0] sm:$0xff]
                %2731 = vst [vmem:[%s2673 + $0x1b8] sm:$0xff] %v2730
                %v2732 = vld [vmem:[%s2672 + $0xe8] sm:$0xff]
                %2733 = vst [vmem:[%s2673 + $0x1c0] sm:$0xff] %v2732
                %v2734 = vld [vmem:[%s2672 + $0xf0] sm:$0xff]
                %2735 = vst [vmem:[%s2673 + $0x1e0] sm:$0xff] %v2734
                %v2736 = vld [vmem:[%s2672 + $0xf8] sm:$0xff]
                %2737 = vst [vmem:[%s2673 + $0x1e8] sm:$0xff] %v2736
                %v2738 = vld [vmem:[%s2672 + $0x100] sm:$0xff]
                %2739 = vst [vmem:[%s2673 + $0x1f0] sm:$0xff] %v2738
                %v2740 = vld [vmem:[%s2672 + $0x108] sm:$0xff]
                %2741 = vst [vmem:[%s2673 + $0x210] sm:$0xff] %v2740
                %v2742 = vld [vmem:[%s2672 + $0x110] sm:$0xff]
                %2743 = vst [vmem:[%s2673 + $0x218] sm:$0xff] %v2742
                %v2744 = vld [vmem:[%s2672 + $0x118] sm:$0xff]
                %2745 = vst [vmem:[%s2673 + $0x220] sm:$0xff] %v2744
                %v2746 = vld [vmem:[%s2672 + $0x120] sm:$0xff]
                %2747 = vst [vmem:[%s2673 + $0x240] sm:$0xff] %v2746
                %v2748 = vld [vmem:[%s2672 + $0x128] sm:$0xff]
                %2749 = vst [vmem:[%s2673 + $0x248] sm:$0xff] %v2748
                %v2750 = vld [vmem:[%s2672 + $0x130] sm:$0xff]
                %2751 = vst [vmem:[%s2673 + $0x250] sm:$0xff] %v2750
                %v2752 = vld [vmem:[%s2672 + $0x138] sm:$0xff]
                %2753 = vst [vmem:[%s2673 + $0x270] sm:$0xff] %v2752
                %v2754 = vld [vmem:[%s2672 + $0x140] sm:$0xff]
                %2755 = vst [vmem:[%s2673 + $0x278] sm:$0xff] %v2754
                %v2756 = vld [vmem:[%s2672 + $0x148] sm:$0xff]
                %2757 = vst [vmem:[%s2673 + $0x280] sm:$0xff] %v2756
                %v2758 = vld [vmem:[%s2672 + $0x150] sm:$0xff]
                %2759 = vst [vmem:[%s2673 + $0x2a0] sm:$0xff] %v2758
                %v2760 = vld [vmem:[%s2672 + $0x158] sm:$0xff]
                %2761 = vst [vmem:[%s2673 + $0x2a8] sm:$0xff] %v2760
                %v2762 = vld [vmem:[%s2672 + $0x160] sm:$0xff]
                %2763 = vst [vmem:[%s2673 + $0x2b0] sm:$0xff] %v2762
                %v2764 = vld [vmem:[%s2672 + $0x168] sm:$0xff]
                %2765 = vst [vmem:[%s2673 + $0x2d0] sm:$0xff] %v2764
                %v2766 = vld [vmem:[%s2672 + $0x170] sm:$0xff]
                %2767 = vst [vmem:[%s2673 + $0x2d8] sm:$0xff] %v2766
                %v2768 = vld [vmem:[%s2672 + $0x178] sm:$0xff]
                %2769 = vst [vmem:[%s2673 + $0x2e0] sm:$0xff] %v2768
                %v2770 = vld [vmem:[%s2672 + $0x180] sm:$0xff]
                %2771 = vst [vmem:[%s2673 + $0x300] sm:$0xff] %v2770
                %v2772 = vld [vmem:[%s2672 + $0x188] sm:$0xff]
                %2773 = vst [vmem:[%s2673 + $0x308] sm:$0xff] %v2772
                %v2774 = vld [vmem:[%s2672 + $0x190] sm:$0xff]
                %2775 = vst [vmem:[%s2673 + $0x310] sm:$0xff] %v2774
                %v2776 = vld [vmem:[%s2672 + $0x198] sm:$0xff]
                %2777 = vst [vmem:[%s2673 + $0x330] sm:$0xff] %v2776
                %v2778 = vld [vmem:[%s2672 + $0x1a0] sm:$0xff]
                %2779 = vst [vmem:[%s2673 + $0x338] sm:$0xff] %v2778
                %v2780 = vld [vmem:[%s2672 + $0x1a8] sm:$0xff]
                %2781 = vst [vmem:[%s2673 + $0x340] sm:$0xff] %v2780
                %v2782 = vld [vmem:[%s2672 + $0x1b0] sm:$0xff]
                %2783 = vst [vmem:[%s2673 + $0x360] sm:$0xff] %v2782
                %v2784 = vld [vmem:[%s2672 + $0x1b8] sm:$0xff]
                %2785 = vst [vmem:[%s2673 + $0x368] sm:$0xff] %v2784
                %v2786 = vld [vmem:[%s2672 + $0x1c0] sm:$0xff]
                %2787 = vst [vmem:[%s2673 + $0x370] sm:$0xff] %v2786
                %v2788 = vld [vmem:[%s2672 + $0x1c8] sm:$0xff]
                %2789 = vst [vmem:[%s2673 + $0x390] sm:$0xff] %v2788
                %v2790 = vld [vmem:[%s2672 + $0x1d0] sm:$0xff]
                %2791 = vst [vmem:[%s2673 + $0x398] sm:$0xff] %v2790
                %v2792 = vld [vmem:[%s2672 + $0x1d8] sm:$0xff]
                %2793 = vst [vmem:[%s2673 + $0x3a0] sm:$0xff] %v2792
                %v2794 = vld [vmem:[%s2672 + $0x1e0] sm:$0xff]
                %2795 = vst [vmem:[%s2673 + $0x3c0] sm:$0xff] %v2794
                %v2796 = vld [vmem:[%s2672 + $0x1e8] sm:$0xff]
                %2797 = vst [vmem:[%s2673 + $0x3c8] sm:$0xff] %v2796
                %v2798 = vld [vmem:[%s2672 + $0x1f0] sm:$0xff]
                %2799 = vst [vmem:[%s2673 + $0x3d0] sm:$0xff] %v2798
                %v2800 = vld [vmem:[%s2672 + $0x1f8] sm:$0xff]
                %2801 = vst [vmem:[%s2673 + $0x3f0] sm:$0xff] %v2800
                %v2802 = vld [vmem:[%s2672 + $0x200] sm:$0xff]
                %2803 = vst [vmem:[%s2673 + $0x3f8] sm:$0xff] %v2802
                %v2804 = vld [vmem:[%s2672 + $0x208] sm:$0xff]
                %2805 = vst [vmem:[%s2673 + $0x400] sm:$0xff] %v2804
                %v2806 = vld [vmem:[%s2672 + $0x210] sm:$0xff]
                %2807 = vst [vmem:[%s2673 + $0x420] sm:$0xff] %v2806
                %v2808 = vld [vmem:[%s2672 + $0x218] sm:$0xff]
                %2809 = vst [vmem:[%s2673 + $0x428] sm:$0xff] %v2808
                %v2810 = vld [vmem:[%s2672 + $0x220] sm:$0xff]
                %2811 = vst [vmem:[%s2673 + $0x430] sm:$0xff] %v2810
                %v2812 = vld [vmem:[%s2672 + $0x228] sm:$0xff]
                %2813 = vst [vmem:[%s2673 + $0x450] sm:$0xff] %v2812
                %v2814 = vld [vmem:[%s2672 + $0x230] sm:$0xff]
                %2815 = vst [vmem:[%s2673 + $0x458] sm:$0xff] %v2814
                %v2816 = vld [vmem:[%s2672 + $0x238] sm:$0xff]
                %2817 = vst [vmem:[%s2673 + $0x460] sm:$0xff] %v2816
                %v2818 = vld [vmem:[%s2672 + $0x240] sm:$0xff]
                %2819 = vst [vmem:[%s2673 + $0x480] sm:$0xff] %v2818
                %v2820 = vld [vmem:[%s2672 + $0x248] sm:$0xff]
                %2821 = vst [vmem:[%s2673 + $0x488] sm:$0xff] %v2820
                %v2822 = vld [vmem:[%s2672 + $0x250] sm:$0xff]
                %2823 = vst [vmem:[%s2673 + $0x490] sm:$0xff] %v2822
                %v2824 = vld [vmem:[%s2672 + $0x258] sm:$0xff]
                %2825 = vst [vmem:[%s2673 + $0x4b0] sm:$0xff] %v2824
                %v2826 = vld [vmem:[%s2672 + $0x260] sm:$0xff]
                %2827 = vst [vmem:[%s2673 + $0x4b8] sm:$0xff] %v2826
                %v2828 = vld [vmem:[%s2672 + $0x268] sm:$0xff]
                %2829 = vst [vmem:[%s2673 + $0x4c0] sm:$0xff] %v2828
                %v2830 = vld [vmem:[%s2672 + $0x270] sm:$0xff]
                %2831 = vst [vmem:[%s2673 + $0x4e0] sm:$0xff] %v2830
                %v2832 = vld [vmem:[%s2672 + $0x278] sm:$0xff]
                %2833 = vst [vmem:[%s2673 + $0x4e8] sm:$0xff] %v2832
                %v2834 = vld [vmem:[%s2672 + $0x280] sm:$0xff]
                %2835 = vst [vmem:[%s2673 + $0x4f0] sm:$0xff] %v2834
                %v2836 = vld [vmem:[%s2672 + $0x288] sm:$0xff]
                %2837 = vst [vmem:[%s2673 + $0x510] sm:$0xff] %v2836
                %v2838 = vld [vmem:[%s2672 + $0x290] sm:$0xff]
                %2839 = vst [vmem:[%s2673 + $0x518] sm:$0xff] %v2838
                %v2840 = vld [vmem:[%s2672 + $0x298] sm:$0xff]
                %2841 = vst [vmem:[%s2673 + $0x520] sm:$0xff] %v2840
              $region91: #{tpu_custom_call.1} parent=85 // loop_footer
                %s2671 = sadd.s32 1, %s2667
              $region92: #{tpu_custom_call.1} parent=85 // loop_footer_branch
                %2666 = sbr.rel target = $region88
              $region93: #{tpu_custom_call.1} parent=85 // loop_exit
                _
            $region86: #{tpu_custom_call.1} parent=81 // pred_fallthru
              _
            // Predicated region
            $region94: #{tpu_custom_call.1} parent=81 // pred_check
              _
            $region95: #{tpu_custom_call.1} parent=81 // pred_check_branch
              %2843 = sbr.rel target = $region97
            $region96: #{tpu_custom_call.1} parent=81 // pred_region
              _
            $region97: #{tpu_custom_call.1} parent=81 // pred_fallthru
              _
          $region82: #{tpu_custom_call.1} parent=77 // pred_fallthru
            _
          %2844 = vnop
        $region78: #{tpu_custom_call.1} parent=65 // pred_fallthru
          _
      $region66: #{tpu_custom_call.1} parent=5 // pred_fallthru
        _
      %p2845 = scmp.le.s32.totalorder 2, %s8
      // Predicated region
      $region98: #{tpu_custom_call.1} parent=5 // pred_check
        %p2846 = pneg %p2845
      $region99: #{tpu_custom_call.1} parent=5 // pred_check_branch
        %2848 = sbr.rel (%p2846) target = $region101
      $region100: #{tpu_custom_call.1} parent=5 // pred_region
        %s2849 = ssub.s32 %s8, 2
        // Predicated region
        $region102: #{tpu_custom_call.1} parent=100 // pred_check
          %p2850 = pneg %p105
        $region103: #{tpu_custom_call.1} parent=100 // pred_check_branch
          %2852 = sbr.rel (%p2850) target = $region105
        $region104: #{tpu_custom_call.1} parent=100 // pred_region
          %s2853 = sand.u32 %s90, 1
          %s2854 = sand.u32 %s90, 1
          %s2855 = smul.addr %s2854, 672
          %s2856 = scalar_lea.vmem [#allocation4], %s2855
        $region105: #{tpu_custom_call.1} parent=100 // pred_fallthru
          _
      $region101: #{tpu_custom_call.1} parent=5 // pred_fallthru
        _
    $region6: #{tpu_custom_call.1} parent=1 // loop_footer
      %s12 = sadd.s32 1, %s8
    $region7: #{tpu_custom_call.1} parent=1 // loop_footer_branch
      %7 = sbr.rel target = $region3
    $region8: #{tpu_custom_call.1} parent=1 // loop_exit
      _

</llo_original>
